<compile_context>
chip_gen: v7x
topology: tpu7x:2x2x1
jax: 0.10.0
libtpu: 0.0.40
codegen_flags: <defaults>
</compile_context>

<pallas_src>
import jax
import jax.numpy as jnp
from jax.experimental import pallas as pl
from jax.experimental.pallas import tpu as pltpu

CODE_SIZE = 32
BN_EPS = 1e-5

_LAYER_DIMS = [
    (2048, 512),        # encoder linear_block 1
    (512, 128),         # encoder linear_block 2
    (128, CODE_SIZE),   # encoder code layer (no BN / act)
    (CODE_SIZE, 128),   # decoder linear_block 1
    (128, 512),         # decoder linear_block 2
    (512, 2048),        # decoder output layer (+ Tanh)
]
_LAYER_MODES = ["bn_relu", "bn_relu", "none", "bn_relu", "bn_relu", "tanh"]

_N_SLABS = 4     # W1 K-slabs / W6 N-slabs
_SLAB = 512      # slab width (multiple of 128 -> lane-dense)

# ---------------------------------------------------------------------------
# Packed small-vector layout (biases, BN affine, quant scales).
# Every segment is padded so its offset is a multiple of 128 lanes.
# ---------------------------------------------------------------------------
_VEC_SEGS = [
    ("b1", 512), ("g1", 512), ("be1", 512),
    ("b2", 128), ("g2", 128), ("be2", 128),
    ("b3", CODE_SIZE),
    ("b4", 128), ("g4", 128), ("be4", 128),
    ("b5", 512), ("g5", 512), ("be5", 512),
    ("b6", 2048),
    ("s1", 512), ("s6", 2048),
]


def _build_vec_offsets():
    off, table = 0, {}
    for name, n in _VEC_SEGS:
        table[name] = off
        off += ((n + 127) // 128) * 128
    return table, off


_VEC_OFF, _VEC_LEN = _build_vec_offsets()   # _VEC_LEN == 8576 (67 * 128)


# ---------------------------------------------------------------------------
# Fused Pallas kernel: full encoder + decoder forward in one invocation
# ---------------------------------------------------------------------------
def _fused_ae_kernel(
    x_ref,                                            # (B, 2048) bf16, VMEM
    vec_ref,                                          # (1, _VEC_LEN) f32, VMEM
    w1_hbm, w2_hbm, w3_hbm, w4_hbm, w5_hbm, w6_hbm,   # weights in HBM (ANY)
    o_ref,                                            # (B, 2048) f32, VMEM
    w1_v, w2_v, w3_v, w4_v, w5_v, w6_v,               # VMEM weight scratch
    sem_w1, sem_mid, sem_w6,                          # DMA semaphores
):
    B = x_ref.shape[0]

    # ---- issue every weight DMA immediately (per-slab semaphores) ----------
    w1_cp = [pltpu.make_async_copy(w1_hbm.at[c], w1_v.at[c], sem_w1.at[c])
             for c in range(_N_SLABS)]
    for cp in w1_cp:
        cp.start()

    mid_hbm = (w2_hbm, w3_hbm, w4_hbm, w5_hbm)
    mid_v = (w2_v, w3_v, w4_v, w5_v)
    mid_cp = [pltpu.make_async_copy(mid_hbm[i], mid_v[i], sem_mid.at[i])
              for i in range(4)]
    for cp in mid_cp:
        cp.start()

    w6_cp = [pltpu.make_async_copy(w6_hbm.at[c], w6_v.at[c], sem_w6.at[c])
             for c in range(_N_SLABS)]
    for cp in w6_cp:
        cp.start()

    # ---- helpers ------------------------------------------------------------
    def vec(name, n, extra=0):
        return vec_ref[:, pl.ds(_VEC_OFF[name] + extra, n)]

    def bn_relu(h, g, be):
        # BatchNorm1d, training-mode forward (batch stats, biased variance).
        mean = jnp.mean(h, axis=0, keepdims=True)
        cen = h - mean
        var = jnp.mean(cen * cen, axis=0, keepdims=True)
        h = cen * jax.lax.rsqrt(var + BN_EPS)
        return jnp.maximum(h * g + be, 0.0)            # ReLU(inplace=True)

    def linear(h, cp, w_ref, b):
        cp.wait()
        return jnp.dot(h.astype(jnp.bfloat16), w_ref[...],
                       preferred_element_type=jnp.float32) + b

    # ---- layer 0: 2048 -> 512, int8 weight, K-chunked over 4 slabs ----------
    acc = jnp.zeros((B, 512), jnp.float32)
    for c in range(_N_SLABS):
        w1_cp[c].wait()
        xs = x_ref[:, pl.ds(c * _SLAB, _SLAB)]                   # (B, 512) bf16
        ws = w1_v[c].astype(jnp.bfloat16)                        # int8 -> bf16
        acc = acc + jnp.dot(xs, ws, preferred_element_type=jnp.float32)
    h = acc * vec("s1", 512) + vec("b1", 512)                    # dequant + bias
    h = bn_relu(h, vec("g1", 512), vec("be1", 512))

    # ---- layers 1..4 (small bf16 weights) ------------------------------------
    h = bn_relu(linear(h, mid_cp[0], w2_v, vec("b2", 128)),
                vec("g2", 128), vec("be2", 128))                 # 512 -> 128
    h = linear(h, mid_cp[1], w3_v, vec("b3", CODE_SIZE))         # 128 -> code
    h = bn_relu(linear(h, mid_cp[2], w4_v, vec("b4", 128)),
                vec("g4", 128), vec("be4", 128))                 # code -> 128
    h = bn_relu(linear(h, mid_cp[3], w5_v, vec("b5", 512)),
                vec("g5", 512), vec("be5", 512))                 # 128 -> 512

    # ---- layer 5: 512 -> 2048, int8 weight, N-chunked + tanh + store --------
    h5 = h.astype(jnp.bfloat16)                                  # (B, 512)
    for c in range(_N_SLABS):
        w6_cp[c].wait()
        ws = w6_v[c].astype(jnp.bfloat16)                        # (512, 512)
        out = jnp.dot(h5, ws, preferred_element_type=jnp.float32)
        out = out * vec("s6", _SLAB, c * _SLAB) + vec("b6", _SLAB, c * _SLAB)
        o_ref[:, pl.ds(c * _SLAB, _SLAB)] = jnp.tanh(out).astype(o_ref.dtype)


# ---------------------------------------------------------------------------
# Parameter setup (deterministic, PyTorch-default-style init) + packing
# ---------------------------------------------------------------------------
def init_params(key):
    """Master f32 params.  Weights stored pre-transposed as (in, out)."""
    params = []
    for (din, dout), mode in zip(_LAYER_DIMS, _LAYER_MODES):
        key, kw, kb = jax.random.split(key, 3)
        bound = 1.0 / (float(din) ** 0.5)
        w = jax.random.uniform(kw, (din, dout), jnp.float32, -bound, bound)
        b = jax.random.uniform(kb, (dout,), jnp.float32, -bound, bound)
        if mode == "bn_relu":
            gamma = jnp.ones((dout,), jnp.float32)    # BatchNorm1d weight
            beta = jnp.zeros((dout,), jnp.float32)    # BatchNorm1d bias
        else:
            gamma = beta = None
        params.append((w, b, gamma, beta))
    return params


def _quantize_per_out_channel(w):
    """Symmetric int8 quantization with a per-output-channel f32 scale."""
    amax = jnp.max(jnp.abs(w), axis=0)
    scale = jnp.maximum(amax, 1e-12) / 127.0
    q = jnp.clip(jnp.round(w / scale), -127.0, 127.0).astype(jnp.int8)
    return q, scale.astype(jnp.float32)


def pack_params(params):
    """Kernel-ready layout: int8 slabs for W1/W6, bf16 mids, one packed vec."""
    (w1, b1, g1, be1), (w2, b2, g2, be2), (w3, b3, _, _), \
        (w4, b4, g4, be4), (w5, b5, g5, be5), (w6, b6, _, _) = params

    w1_q, s1 = _quantize_per_out_channel(w1)              # (2048, 512) int8
    w1_slabs = w1_q.reshape(_N_SLABS, _SLAB, 512)         # K-slabs
    w6_q, s6 = _quantize_per_out_channel(w6)               # (512, 2048) int8
    w6_slabs = jnp.stack(
        [w6_q[:, c * _SLAB:(c + 1) * _SLAB] for c in range(_N_SLABS)], axis=0)

    seg_values = {
        "b1": b1, "g1": g1, "be1": be1,
        "b2": b2, "g2": g2, "be2": be2,
        "b3": b3,
        "b4": b4, "g4": g4, "be4": be4,
        "b5": b5, "g5": g5, "be5": be5,
        "b6": b6, "s1": s1, "s6": s6,
    }
    parts = []
    for name, n in _VEC_SEGS:
        a = seg_values[name].astype(jnp.float32)
        padded = ((n + 127) // 128) * 128
        parts.append(jnp.pad(a, (0, padded - n)))
    vec = jnp.concatenate(parts).reshape(1, _VEC_LEN)

    weights = (
        w1_slabs,
        w2.astype(jnp.bfloat16), w3.astype(jnp.bfloat16),
        w4.astype(jnp.bfloat16), w5.astype(jnp.bfloat16),
        w6_slabs,
    )
    return weights, vec


# ---------------------------------------------------------------------------
# Forward wrapper: single fused pallas_call
# ---------------------------------------------------------------------------
def autoencoder_2048_forward(x, packed_params):
    """x: (B, 2048) f32 -> (B, 2048) f32 (tanh output)."""
    weights, vec = packed_params
    B, Din = x.shape
    assert Din == _LAYER_DIMS[0][0]
    Dout = _LAYER_DIMS[-1][1]

    in_specs = [
        pl.BlockSpec((B, Din), lambda i: (0, 0)),          # activations (bf16)
        pl.BlockSpec((1, _VEC_LEN), lambda i: (0, 0)),     # packed biases/BN/scales
    ] + [pl.BlockSpec(memory_space=pl.ANY)] * 6            # weights stay in HBM

    scratch_shapes = [
        pltpu.VMEM((_N_SLABS, _SLAB, 512), jnp.int8),      # W1 slabs (int8)
        pltpu.VMEM((512, 128), jnp.bfloat16),              # W2
        pltpu.VMEM((128, CODE_SIZE), jnp.bfloat16),        # W3
        pltpu.VMEM((CODE_SIZE, 128), jnp.bfloat16),        # W4
        pltpu.VMEM((128, 512), jnp.bfloat16),              # W5
        pltpu.VMEM((_N_SLABS, _SLAB, _SLAB), jnp.int8),    # W6 slabs (int8)
        pltpu.SemaphoreType.DMA((_N_SLABS,)),              # W1 slab sems
        pltpu.SemaphoreType.DMA((4,)),                     # W2..W5 sems
        pltpu.SemaphoreType.DMA((_N_SLABS,)),              # W6 slab sems
    ]

    fused = pl.pallas_call(
        _fused_ae_kernel,
        out_shape=jax.ShapeDtypeStruct((B, Dout), jnp.float32),
        grid=(1,),
        in_specs=in_specs,
        out_specs=pl.BlockSpec((B, Dout), lambda i: (0, 0)),
        scratch_shapes=scratch_shapes,
        compiler_params=pltpu.CompilerParams(
            dimension_semantics=("arbitrary",),
            vmem_limit_bytes=32 << 20,
        ),
    )
    return fused(x.astype(jnp.bfloat16), vec, *weights)


# ---------------------------------------------------------------------------
if __name__ == "__main__":
    key = jax.random.PRNGKey(0)
    pkey, xkey = jax.random.split(key)

    params = init_params(pkey)
    packed = pack_params(params)
    x = jax.random.normal(xkey, (8, 2048), dtype=jnp.float32)   # batch=8

    out = autoencoder_2048_forward(x, packed)
    out = jax.block_until_ready(out)

    assert out.shape == (8, 2048) and out.dtype == jnp.float32
    assert bool(jnp.all(jnp.isfinite(out)))
    print("KERNEL_OK")
</pallas_src>

<mosaic_0001>
module attributes {stable_mosaic.version = 11 : i64} {
  func.func @_fused_ae_kernel(%arg0: i32, %arg1: memref<8x2048xbf16, #tpu.memory_space<vmem>>, %arg2: memref<1x8576xf32, #tpu.memory_space<vmem>>, %arg3: memref<4x512x512xi8, #tpu.memory_space<any>>, %arg4: memref<512x128xbf16, #tpu.memory_space<any>>, %arg5: memref<128x32xbf16, #tpu.memory_space<any>>, %arg6: memref<32x128xbf16, #tpu.memory_space<any>>, %arg7: memref<128x512xbf16, #tpu.memory_space<any>>, %arg8: memref<4x512x512xi8, #tpu.memory_space<any>>, %arg9: memref<8x2048xf32, #tpu.memory_space<vmem>>, %arg10: memref<4x512x512xi8, #tpu.memory_space<vmem>>, %arg11: memref<512x128xbf16, #tpu.memory_space<vmem>>, %arg12: memref<128x32xbf16, #tpu.memory_space<vmem>>, %arg13: memref<32x128xbf16, #tpu.memory_space<vmem>>, %arg14: memref<128x512xbf16, #tpu.memory_space<vmem>>, %arg15: memref<4x512x512xi8, #tpu.memory_space<vmem>>, %arg16: memref<4x!tpu.dma_semaphore, #tpu.memory_space<semaphore_mem>>, %arg17: memref<4x!tpu.dma_semaphore, #tpu.memory_space<semaphore_mem>>, %arg18: memref<4x!tpu.dma_semaphore, #tpu.memory_space<semaphore_mem>>) attributes {dimension_semantics = [#tpu.dimension_semantics<arbitrary>], iteration_bounds = array<i64: 1>, scalar_prefetch = 0 : i64, scratch_operands = 9 : i64, tpu.core_type = #tpu.core_type<tc>, window_params = [{pipeline_mode = #tpu.pipeline_mode<synchronous>, transform_indices = @transform_0, window_bounds = array<i64: 8, 2048>}, {pipeline_mode = #tpu.pipeline_mode<synchronous>, transform_indices = @transform_1, window_bounds = array<i64: 1, 8576>}, {}, {}, {}, {}, {}, {}, {pipeline_mode = #tpu.pipeline_mode<synchronous>, transform_indices = @transform_8, window_bounds = array<i64: 8, 2048>}]} {
    %c0_i32 = arith.constant 0 : i32
    %c0_i32_0 = arith.constant 0 : i32
    %c0_i32_1 = arith.constant 0 : i32
    %c0_i32_2 = arith.constant 0 : i32
    %c0_i32_3 = arith.constant 0 : i32
    %0 = tpu.memref_slice %arg3[%c0_i32, %c0_i32_2, %c0_i32_3] : memref<4x512x512xi8, #tpu.memory_space<any>> -> memref<1x512x512xi8, #tpu.memory_space<any>>
    %1 = tpu.memref_squeeze %0 : memref<1x512x512xi8, #tpu.memory_space<any>> -> memref<512x512xi8, #tpu.memory_space<any>>
    %c0_i32_4 = arith.constant 0 : i32
    %c0_i32_5 = arith.constant 0 : i32
    %2 = tpu.memref_slice %arg10[%c0_i32_0, %c0_i32_4, %c0_i32_5] : memref<4x512x512xi8, #tpu.memory_space<vmem>> -> memref<1x512x512xi8, #tpu.memory_space<vmem>>
    %3 = tpu.memref_squeeze %2 : memref<1x512x512xi8, #tpu.memory_space<vmem>> -> memref<512x512xi8, #tpu.memory_space<vmem>>
    %4 = tpu.memref_slice %arg16[%c0_i32_1] : memref<4x!tpu.dma_semaphore, #tpu.memory_space<semaphore_mem>> -> memref<1x!tpu.dma_semaphore, #tpu.memory_space<semaphore_mem>>
    %5 = tpu.memref_squeeze %4 : memref<1x!tpu.dma_semaphore, #tpu.memory_space<semaphore_mem>> -> memref<!tpu.dma_semaphore, #tpu.memory_space<semaphore_mem>>
    tpu.enqueue_dma source(%1 : memref<512x512xi8, #tpu.memory_space<any>>) target(%3 : memref<512x512xi8, #tpu.memory_space<vmem>>) target_semaphore(%5 : memref<!tpu.dma_semaphore, #tpu.memory_space<semaphore_mem>>)
    %c1_i32 = arith.constant 1 : i32
    %c1_i32_6 = arith.constant 1 : i32
    %c1_i32_7 = arith.constant 1 : i32
    %c0_i32_8 = arith.constant 0 : i32
    %c0_i32_9 = arith.constant 0 : i32
    %6 = tpu.memref_slice %arg3[%c1_i32, %c0_i32_8, %c0_i32_9] : memref<4x512x512xi8, #tpu.memory_space<any>> -> memref<1x512x512xi8, #tpu.memory_space<any>>
    %7 = tpu.memref_squeeze %6 : memref<1x512x512xi8, #tpu.memory_space<any>> -> memref<512x512xi8, #tpu.memory_space<any>>
    %c0_i32_10 = arith.constant 0 : i32
    %c0_i32_11 = arith.constant 0 : i32
    %8 = tpu.memref_slice %arg10[%c1_i32_6, %c0_i32_10, %c0_i32_11] : memref<4x512x512xi8, #tpu.memory_space<vmem>> -> memref<1x512x512xi8, #tpu.memory_space<vmem>>
    %9 = tpu.memref_squeeze %8 : memref<1x512x512xi8, #tpu.memory_space<vmem>> -> memref<512x512xi8, #tpu.memory_space<vmem>>
    %10 = tpu.memref_slice %arg16[%c1_i32_7] : memref<4x!tpu.dma_semaphore, #tpu.memory_space<semaphore_mem>> -> memref<1x!tpu.dma_semaphore, #tpu.memory_space<semaphore_mem>>
    %11 = tpu.memref_squeeze %10 : memref<1x!tpu.dma_semaphore, #tpu.memory_space<semaphore_mem>> -> memref<!tpu.dma_semaphore, #tpu.memory_space<semaphore_mem>>
    tpu.enqueue_dma source(%7 : memref<512x512xi8, #tpu.memory_space<any>>) target(%9 : memref<512x512xi8, #tpu.memory_space<vmem>>) target_semaphore(%11 : memref<!tpu.dma_semaphore, #tpu.memory_space<semaphore_mem>>)
    %c2_i32 = arith.constant 2 : i32
    %c2_i32_12 = arith.constant 2 : i32
    %c2_i32_13 = arith.constant 2 : i32
    %c0_i32_14 = arith.constant 0 : i32
    %c0_i32_15 = arith.constant 0 : i32
    %12 = tpu.memref_slice %arg3[%c2_i32, %c0_i32_14, %c0_i32_15] : memref<4x512x512xi8, #tpu.memory_space<any>> -> memref<1x512x512xi8, #tpu.memory_space<any>>
    %13 = tpu.memref_squeeze %12 : memref<1x512x512xi8, #tpu.memory_space<any>> -> memref<512x512xi8, #tpu.memory_space<any>>
    %c0_i32_16 = arith.constant 0 : i32
    %c0_i32_17 = arith.constant 0 : i32
    %14 = tpu.memref_slice %arg10[%c2_i32_12, %c0_i32_16, %c0_i32_17] : memref<4x512x512xi8, #tpu.memory_space<vmem>> -> memref<1x512x512xi8, #tpu.memory_space<vmem>>
    %15 = tpu.memref_squeeze %14 : memref<1x512x512xi8, #tpu.memory_space<vmem>> -> memref<512x512xi8, #tpu.memory_space<vmem>>
    %16 = tpu.memref_slice %arg16[%c2_i32_13] : memref<4x!tpu.dma_semaphore, #tpu.memory_space<semaphore_mem>> -> memref<1x!tpu.dma_semaphore, #tpu.memory_space<semaphore_mem>>
    %17 = tpu.memref_squeeze %16 : memref<1x!tpu.dma_semaphore, #tpu.memory_space<semaphore_mem>> -> memref<!tpu.dma_semaphore, #tpu.memory_space<semaphore_mem>>
    tpu.enqueue_dma source(%13 : memref<512x512xi8, #tpu.memory_space<any>>) target(%15 : memref<512x512xi8, #tpu.memory_space<vmem>>) target_semaphore(%17 : memref<!tpu.dma_semaphore, #tpu.memory_space<semaphore_mem>>)
    %c3_i32 = arith.constant 3 : i32
    %c3_i32_18 = arith.constant 3 : i32
    %c3_i32_19 = arith.constant 3 : i32
    %c0_i32_20 = arith.constant 0 : i32
    %c0_i32_21 = arith.constant 0 : i32
    %18 = tpu.memref_slice %arg3[%c3_i32, %c0_i32_20, %c0_i32_21] : memref<4x512x512xi8, #tpu.memory_space<any>> -> memref<1x512x512xi8, #tpu.memory_space<any>>
    %19 = tpu.memref_squeeze %18 : memref<1x512x512xi8, #tpu.memory_space<any>> -> memref<512x512xi8, #tpu.memory_space<any>>
    %c0_i32_22 = arith.constant 0 : i32
    %c0_i32_23 = arith.constant 0 : i32
    %20 = tpu.memref_slice %arg10[%c3_i32_18, %c0_i32_22, %c0_i32_23] : memref<4x512x512xi8, #tpu.memory_space<vmem>> -> memref<1x512x512xi8, #tpu.memory_space<vmem>>
    %21 = tpu.memref_squeeze %20 : memref<1x512x512xi8, #tpu.memory_space<vmem>> -> memref<512x512xi8, #tpu.memory_space<vmem>>
    %22 = tpu.memref_slice %arg16[%c3_i32_19] : memref<4x!tpu.dma_semaphore, #tpu.memory_space<semaphore_mem>> -> memref<1x!tpu.dma_semaphore, #tpu.memory_space<semaphore_mem>>
    %23 = tpu.memref_squeeze %22 : memref<1x!tpu.dma_semaphore, #tpu.memory_space<semaphore_mem>> -> memref<!tpu.dma_semaphore, #tpu.memory_space<semaphore_mem>>
    tpu.enqueue_dma source(%19 : memref<512x512xi8, #tpu.memory_space<any>>) target(%21 : memref<512x512xi8, #tpu.memory_space<vmem>>) target_semaphore(%23 : memref<!tpu.dma_semaphore, #tpu.memory_space<semaphore_mem>>)
    %c0_i32_24 = arith.constant 0 : i32
    %24 = tpu.memref_slice %arg17[%c0_i32_24] : memref<4x!tpu.dma_semaphore, #tpu.memory_space<semaphore_mem>> -> memref<1x!tpu.dma_semaphore, #tpu.memory_space<semaphore_mem>>
    %25 = tpu.memref_squeeze %24 : memref<1x!tpu.dma_semaphore, #tpu.memory_space<semaphore_mem>> -> memref<!tpu.dma_semaphore, #tpu.memory_space<semaphore_mem>>
    tpu.enqueue_dma source(%arg4 : memref<512x128xbf16, #tpu.memory_space<any>>) target(%arg11 : memref<512x128xbf16, #tpu.memory_space<vmem>>) target_semaphore(%25 : memref<!tpu.dma_semaphore, #tpu.memory_space<semaphore_mem>>)
    %c1_i32_25 = arith.constant 1 : i32
    %26 = tpu.memref_slice %arg17[%c1_i32_25] : memref<4x!tpu.dma_semaphore, #tpu.memory_space<semaphore_mem>> -> memref<1x!tpu.dma_semaphore, #tpu.memory_space<semaphore_mem>>
    %27 = tpu.memref_squeeze %26 : memref<1x!tpu.dma_semaphore, #tpu.memory_space<semaphore_mem>> -> memref<!tpu.dma_semaphore, #tpu.memory_space<semaphore_mem>>
    tpu.enqueue_dma source(%arg5 : memref<128x32xbf16, #tpu.memory_space<any>>) target(%arg12 : memref<128x32xbf16, #tpu.memory_space<vmem>>) target_semaphore(%27 : memref<!tpu.dma_semaphore, #tpu.memory_space<semaphore_mem>>)
    %c2_i32_26 = arith.constant 2 : i32
    %28 = tpu.memref_slice %arg17[%c2_i32_26] : memref<4x!tpu.dma_semaphore, #tpu.memory_space<semaphore_mem>> -> memref<1x!tpu.dma_semaphore, #tpu.memory_space<semaphore_mem>>
    %29 = tpu.memref_squeeze %28 : memref<1x!tpu.dma_semaphore, #tpu.memory_space<semaphore_mem>> -> memref<!tpu.dma_semaphore, #tpu.memory_space<semaphore_mem>>
    tpu.enqueue_dma source(%arg6 : memref<32x128xbf16, #tpu.memory_space<any>>) target(%arg13 : memref<32x128xbf16, #tpu.memory_space<vmem>>) target_semaphore(%29 : memref<!tpu.dma_semaphore, #tpu.memory_space<semaphore_mem>>)
    %c3_i32_27 = arith.constant 3 : i32
    %30 = tpu.memref_slice %arg17[%c3_i32_27] : memref<4x!tpu.dma_semaphore, #tpu.memory_space<semaphore_mem>> -> memref<1x!tpu.dma_semaphore, #tpu.memory_space<semaphore_mem>>
    %31 = tpu.memref_squeeze %30 : memref<1x!tpu.dma_semaphore, #tpu.memory_space<semaphore_mem>> -> memref<!tpu.dma_semaphore, #tpu.memory_space<semaphore_mem>>
    tpu.enqueue_dma source(%arg7 : memref<128x512xbf16, #tpu.memory_space<any>>) target(%arg14 : memref<128x512xbf16, #tpu.memory_space<vmem>>) target_semaphore(%31 : memref<!tpu.dma_semaphore, #tpu.memory_space<semaphore_mem>>)
    %c0_i32_28 = arith.constant 0 : i32
    %c0_i32_29 = arith.constant 0 : i32
    %c0_i32_30 = arith.constant 0 : i32
    %c0_i32_31 = arith.constant 0 : i32
    %c0_i32_32 = arith.constant 0 : i32
    %32 = tpu.memref_slice %arg8[%c0_i32_28, %c0_i32_31, %c0_i32_32] : memref<4x512x512xi8, #tpu.memory_space<any>> -> memref<1x512x512xi8, #tpu.memory_space<any>>
    %33 = tpu.memref_squeeze %32 : memref<1x512x512xi8, #tpu.memory_space<any>> -> memref<512x512xi8, #tpu.memory_space<any>>
    %c0_i32_33 = arith.constant 0 : i32
    %c0_i32_34 = arith.constant 0 : i32
    %34 = tpu.memref_slice %arg15[%c0_i32_29, %c0_i32_33, %c0_i32_34] : memref<4x512x512xi8, #tpu.memory_space<vmem>> -> memref<1x512x512xi8, #tpu.memory_space<vmem>>
    %35 = tpu.memref_squeeze %34 : memref<1x512x512xi8, #tpu.memory_space<vmem>> -> memref<512x512xi8, #tpu.memory_space<vmem>>
    %36 = tpu.memref_slice %arg18[%c0_i32_30] : memref<4x!tpu.dma_semaphore, #tpu.memory_space<semaphore_mem>> -> memref<1x!tpu.dma_semaphore, #tpu.memory_space<semaphore_mem>>
    %37 = tpu.memref_squeeze %36 : memref<1x!tpu.dma_semaphore, #tpu.memory_space<semaphore_mem>> -> memref<!tpu.dma_semaphore, #tpu.memory_space<semaphore_mem>>
    tpu.enqueue_dma source(%33 : memref<512x512xi8, #tpu.memory_space<any>>) target(%35 : memref<512x512xi8, #tpu.memory_space<vmem>>) target_semaphore(%37 : memref<!tpu.dma_semaphore, #tpu.memory_space<semaphore_mem>>)
    %c1_i32_35 = arith.constant 1 : i32
    %c1_i32_36 = arith.constant 1 : i32
    %c1_i32_37 = arith.constant 1 : i32
    %c0_i32_38 = arith.constant 0 : i32
    %c0_i32_39 = arith.constant 0 : i32
    %38 = tpu.memref_slice %arg8[%c1_i32_35, %c0_i32_38, %c0_i32_39] : memref<4x512x512xi8, #tpu.memory_space<any>> -> memref<1x512x512xi8, #tpu.memory_space<any>>
    %39 = tpu.memref_squeeze %38 : memref<1x512x512xi8, #tpu.memory_space<any>> -> memref<512x512xi8, #tpu.memory_space<any>>
    %c0_i32_40 = arith.constant 0 : i32
    %c0_i32_41 = arith.constant 0 : i32
    %40 = tpu.memref_slice %arg15[%c1_i32_36, %c0_i32_40, %c0_i32_41] : memref<4x512x512xi8, #tpu.memory_space<vmem>> -> memref<1x512x512xi8, #tpu.memory_space<vmem>>
    %41 = tpu.memref_squeeze %40 : memref<1x512x512xi8, #tpu.memory_space<vmem>> -> memref<512x512xi8, #tpu.memory_space<vmem>>
    %42 = tpu.memref_slice %arg18[%c1_i32_37] : memref<4x!tpu.dma_semaphore, #tpu.memory_space<semaphore_mem>> -> memref<1x!tpu.dma_semaphore, #tpu.memory_space<semaphore_mem>>
    %43 = tpu.memref_squeeze %42 : memref<1x!tpu.dma_semaphore, #tpu.memory_space<semaphore_mem>> -> memref<!tpu.dma_semaphore, #tpu.memory_space<semaphore_mem>>
    tpu.enqueue_dma source(%39 : memref<512x512xi8, #tpu.memory_space<any>>) target(%41 : memref<512x512xi8, #tpu.memory_space<vmem>>) target_semaphore(%43 : memref<!tpu.dma_semaphore, #tpu.memory_space<semaphore_mem>>)
    %c2_i32_42 = arith.constant 2 : i32
    %c2_i32_43 = arith.constant 2 : i32
    %c2_i32_44 = arith.constant 2 : i32
    %c0_i32_45 = arith.constant 0 : i32
    %c0_i32_46 = arith.constant 0 : i32
    %44 = tpu.memref_slice %arg8[%c2_i32_42, %c0_i32_45, %c0_i32_46] : memref<4x512x512xi8, #tpu.memory_space<any>> -> memref<1x512x512xi8, #tpu.memory_space<any>>
    %45 = tpu.memref_squeeze %44 : memref<1x512x512xi8, #tpu.memory_space<any>> -> memref<512x512xi8, #tpu.memory_space<any>>
    %c0_i32_47 = arith.constant 0 : i32
    %c0_i32_48 = arith.constant 0 : i32
    %46 = tpu.memref_slice %arg15[%c2_i32_43, %c0_i32_47, %c0_i32_48] : memref<4x512x512xi8, #tpu.memory_space<vmem>> -> memref<1x512x512xi8, #tpu.memory_space<vmem>>
    %47 = tpu.memref_squeeze %46 : memref<1x512x512xi8, #tpu.memory_space<vmem>> -> memref<512x512xi8, #tpu.memory_space<vmem>>
    %48 = tpu.memref_slice %arg18[%c2_i32_44] : memref<4x!tpu.dma_semaphore, #tpu.memory_space<semaphore_mem>> -> memref<1x!tpu.dma_semaphore, #tpu.memory_space<semaphore_mem>>
    %49 = tpu.memref_squeeze %48 : memref<1x!tpu.dma_semaphore, #tpu.memory_space<semaphore_mem>> -> memref<!tpu.dma_semaphore, #tpu.memory_space<semaphore_mem>>
    tpu.enqueue_dma source(%45 : memref<512x512xi8, #tpu.memory_space<any>>) target(%47 : memref<512x512xi8, #tpu.memory_space<vmem>>) target_semaphore(%49 : memref<!tpu.dma_semaphore, #tpu.memory_space<semaphore_mem>>)
    %c3_i32_49 = arith.constant 3 : i32
    %c3_i32_50 = arith.constant 3 : i32
    %c3_i32_51 = arith.constant 3 : i32
    %c0_i32_52 = arith.constant 0 : i32
    %c0_i32_53 = arith.constant 0 : i32
    %50 = tpu.memref_slice %arg8[%c3_i32_49, %c0_i32_52, %c0_i32_53] : memref<4x512x512xi8, #tpu.memory_space<any>> -> memref<1x512x512xi8, #tpu.memory_space<any>>
    %51 = tpu.memref_squeeze %50 : memref<1x512x512xi8, #tpu.memory_space<any>> -> memref<512x512xi8, #tpu.memory_space<any>>
    %c0_i32_54 = arith.constant 0 : i32
    %c0_i32_55 = arith.constant 0 : i32
    %52 = tpu.memref_slice %arg15[%c3_i32_50, %c0_i32_54, %c0_i32_55] : memref<4x512x512xi8, #tpu.memory_space<vmem>> -> memref<1x512x512xi8, #tpu.memory_space<vmem>>
    %53 = tpu.memref_squeeze %52 : memref<1x512x512xi8, #tpu.memory_space<vmem>> -> memref<512x512xi8, #tpu.memory_space<vmem>>
    %54 = tpu.memref_slice %arg18[%c3_i32_51] : memref<4x!tpu.dma_semaphore, #tpu.memory_space<semaphore_mem>> -> memref<1x!tpu.dma_semaphore, #tpu.memory_space<semaphore_mem>>
    %55 = tpu.memref_squeeze %54 : memref<1x!tpu.dma_semaphore, #tpu.memory_space<semaphore_mem>> -> memref<!tpu.dma_semaphore, #tpu.memory_space<semaphore_mem>>
    tpu.enqueue_dma source(%51 : memref<512x512xi8, #tpu.memory_space<any>>) target(%53 : memref<512x512xi8, #tpu.memory_space<vmem>>) target_semaphore(%55 : memref<!tpu.dma_semaphore, #tpu.memory_space<semaphore_mem>>)
    %cst = arith.constant 0.000000e+00 : f32
    %56 = vector.broadcast %cst : f32 to vector<8x512xf32>
    %c0_i32_56 = arith.constant 0 : i32
    %c0_i32_57 = arith.constant 0 : i32
    %c0_i32_58 = arith.constant 0 : i32
    %c0_i32_59 = arith.constant 0 : i32
    %c0_i32_60 = arith.constant 0 : i32
    %57 = tpu.memref_slice %arg3[%c0_i32_56, %c0_i32_59, %c0_i32_60] : memref<4x512x512xi8, #tpu.memory_space<any>> -> memref<1x512x512xi8, #tpu.memory_space<any>>
    %58 = tpu.memref_squeeze %57 : memref<1x512x512xi8, #tpu.memory_space<any>> -> memref<512x512xi8, #tpu.memory_space<any>>
    %c0_i32_61 = arith.constant 0 : i32
    %c0_i32_62 = arith.constant 0 : i32
    %59 = tpu.memref_slice %arg10[%c0_i32_57, %c0_i32_61, %c0_i32_62] : memref<4x512x512xi8, #tpu.memory_space<vmem>> -> memref<1x512x512xi8, #tpu.memory_space<vmem>>
    %60 = tpu.memref_squeeze %59 : memref<1x512x512xi8, #tpu.memory_space<vmem>> -> memref<512x512xi8, #tpu.memory_space<vmem>>
    %61 = tpu.memref_slice %arg16[%c0_i32_58] : memref<4x!tpu.dma_semaphore, #tpu.memory_space<semaphore_mem>> -> memref<1x!tpu.dma_semaphore, #tpu.memory_space<semaphore_mem>>
    %62 = tpu.memref_squeeze %61 : memref<1x!tpu.dma_semaphore, #tpu.memory_space<semaphore_mem>> -> memref<!tpu.dma_semaphore, #tpu.memory_space<semaphore_mem>>
    tpu.wait_dma2 semaphore(%62 : memref<!tpu.dma_semaphore, #tpu.memory_space<semaphore_mem>>) src(%58 : memref<512x512xi8, #tpu.memory_space<any>>) dst(%60 : memref<512x512xi8, #tpu.memory_space<vmem>>)
    %c0 = arith.constant 0 : index
    %c0_63 = arith.constant 0 : index
    %63 = vector.load %arg1[%c0, %c0_63] : memref<8x2048xbf16, #tpu.memory_space<vmem>>, vector<8x512xbf16>
    %c0_64 = arith.constant 0 : index
    %c0_65 = arith.constant 0 : index
    %c0_66 = arith.constant 0 : index
    %64 = vector.load %arg10[%c0_64, %c0_65, %c0_66] : memref<4x512x512xi8, #tpu.memory_space<vmem>>, vector<1x512x512xi8>
    %65 = vector.shape_cast %64 : vector<1x512x512xi8> to vector<512x512xi8>
    %66 = arith.sitofp %65 : vector<512x512xi8> to vector<512x512xbf16>
    %cst_67 = arith.constant dense<0.000000e+00> : vector<8x512xf32>
    %67 = tpu.matmul %63, %66, %cst_67 {dimension_numbers = #tpu.dot_dimension_numbers<[1], [0], [0], [1], [0, 0, 1, 1], [], []>} : vector<8x512xbf16>, vector<512x512xbf16>, vector<8x512xf32> -> vector<8x512xf32>
    %68 = arith.addf %56, %67 : vector<8x512xf32>
    %c1_i32_68 = arith.constant 1 : i32
    %c1_i32_69 = arith.constant 1 : i32
    %c1_i32_70 = arith.constant 1 : i32
    %c0_i32_71 = arith.constant 0 : i32
    %c0_i32_72 = arith.constant 0 : i32
    %69 = tpu.memref_slice %arg3[%c1_i32_68, %c0_i32_71, %c0_i32_72] : memref<4x512x512xi8, #tpu.memory_space<any>> -> memref<1x512x512xi8, #tpu.memory_space<any>>
    %70 = tpu.memref_squeeze %69 : memref<1x512x512xi8, #tpu.memory_space<any>> -> memref<512x512xi8, #tpu.memory_space<any>>
    %c0_i32_73 = arith.constant 0 : i32
    %c0_i32_74 = arith.constant 0 : i32
    %71 = tpu.memref_slice %arg10[%c1_i32_69, %c0_i32_73, %c0_i32_74] : memref<4x512x512xi8, #tpu.memory_space<vmem>> -> memref<1x512x512xi8, #tpu.memory_space<vmem>>
    %72 = tpu.memref_squeeze %71 : memref<1x512x512xi8, #tpu.memory_space<vmem>> -> memref<512x512xi8, #tpu.memory_space<vmem>>
    %73 = tpu.memref_slice %arg16[%c1_i32_70] : memref<4x!tpu.dma_semaphore, #tpu.memory_space<semaphore_mem>> -> memref<1x!tpu.dma_semaphore, #tpu.memory_space<semaphore_mem>>
    %74 = tpu.memref_squeeze %73 : memref<1x!tpu.dma_semaphore, #tpu.memory_space<semaphore_mem>> -> memref<!tpu.dma_semaphore, #tpu.memory_space<semaphore_mem>>
    tpu.wait_dma2 semaphore(%74 : memref<!tpu.dma_semaphore, #tpu.memory_space<semaphore_mem>>) src(%70 : memref<512x512xi8, #tpu.memory_space<any>>) dst(%72 : memref<512x512xi8, #tpu.memory_space<vmem>>)
    %c0_75 = arith.constant 0 : index
    %c512 = arith.constant 512 : index
    %75 = vector.load %arg1[%c0_75, %c512] : memref<8x2048xbf16, #tpu.memory_space<vmem>>, vector<8x512xbf16>
    %c1 = arith.constant 1 : index
    %c0_76 = arith.constant 0 : index
    %c0_77 = arith.constant 0 : index
    %76 = vector.load %arg10[%c1, %c0_76, %c0_77] : memref<4x512x512xi8, #tpu.memory_space<vmem>>, vector<1x512x512xi8>
    %77 = vector.shape_cast %76 : vector<1x512x512xi8> to vector<512x512xi8>
    %78 = arith.sitofp %77 : vector<512x512xi8> to vector<512x512xbf16>
    %cst_78 = arith.constant dense<0.000000e+00> : vector<8x512xf32>
    %79 = tpu.matmul %75, %78, %cst_78 {dimension_numbers = #tpu.dot_dimension_numbers<[1], [0], [0], [1], [0, 0, 1, 1], [], []>} : vector<8x512xbf16>, vector<512x512xbf16>, vector<8x512xf32> -> vector<8x512xf32>
    %80 = arith.addf %68, %79 : vector<8x512xf32>
    %c2_i32_79 = arith.constant 2 : i32
    %c2_i32_80 = arith.constant 2 : i32
    %c2_i32_81 = arith.constant 2 : i32
    %c0_i32_82 = arith.constant 0 : i32
    %c0_i32_83 = arith.constant 0 : i32
    %81 = tpu.memref_slice %arg3[%c2_i32_79, %c0_i32_82, %c0_i32_83] : memref<4x512x512xi8, #tpu.memory_space<any>> -> memref<1x512x512xi8, #tpu.memory_space<any>>
    %82 = tpu.memref_squeeze %81 : memref<1x512x512xi8, #tpu.memory_space<any>> -> memref<512x512xi8, #tpu.memory_space<any>>
    %c0_i32_84 = arith.constant 0 : i32
    %c0_i32_85 = arith.constant 0 : i32
    %83 = tpu.memref_slice %arg10[%c2_i32_80, %c0_i32_84, %c0_i32_85] : memref<4x512x512xi8, #tpu.memory_space<vmem>> -> memref<1x512x512xi8, #tpu.memory_space<vmem>>
    %84 = tpu.memref_squeeze %83 : memref<1x512x512xi8, #tpu.memory_space<vmem>> -> memref<512x512xi8, #tpu.memory_space<vmem>>
    %85 = tpu.memref_slice %arg16[%c2_i32_81] : memref<4x!tpu.dma_semaphore, #tpu.memory_space<semaphore_mem>> -> memref<1x!tpu.dma_semaphore, #tpu.memory_space<semaphore_mem>>
    %86 = tpu.memref_squeeze %85 : memref<1x!tpu.dma_semaphore, #tpu.memory_space<semaphore_mem>> -> memref<!tpu.dma_semaphore, #tpu.memory_space<semaphore_mem>>
    tpu.wait_dma2 semaphore(%86 : memref<!tpu.dma_semaphore, #tpu.memory_space<semaphore_mem>>) src(%82 : memref<512x512xi8, #tpu.memory_space<any>>) dst(%84 : memref<512x512xi8, #tpu.memory_space<vmem>>)
    %c0_86 = arith.constant 0 : index
    %c1024 = arith.constant 1024 : index
    %87 = vector.load %arg1[%c0_86, %c1024] : memref<8x2048xbf16, #tpu.memory_space<vmem>>, vector<8x512xbf16>
    %c2 = arith.constant 2 : index
    %c0_87 = arith.constant 0 : index
    %c0_88 = arith.constant 0 : index
    %88 = vector.load %arg10[%c2, %c0_87, %c0_88] : memref<4x512x512xi8, #tpu.memory_space<vmem>>, vector<1x512x512xi8>
    %89 = vector.shape_cast %88 : vector<1x512x512xi8> to vector<512x512xi8>
    %90 = arith.sitofp %89 : vector<512x512xi8> to vector<512x512xbf16>
    %cst_89 = arith.constant dense<0.000000e+00> : vector<8x512xf32>
    %91 = tpu.matmul %87, %90, %cst_89 {dimension_numbers = #tpu.dot_dimension_numbers<[1], [0], [0], [1], [0, 0, 1, 1], [], []>} : vector<8x512xbf16>, vector<512x512xbf16>, vector<8x512xf32> -> vector<8x512xf32>
    %92 = arith.addf %80, %91 : vector<8x512xf32>
    %c3_i32_90 = arith.constant 3 : i32
    %c3_i32_91 = arith.constant 3 : i32
    %c3_i32_92 = arith.constant 3 : i32
    %c0_i32_93 = arith.constant 0 : i32
    %c0_i32_94 = arith.constant 0 : i32
    %93 = tpu.memref_slice %arg3[%c3_i32_90, %c0_i32_93, %c0_i32_94] : memref<4x512x512xi8, #tpu.memory_space<any>> -> memref<1x512x512xi8, #tpu.memory_space<any>>
    %94 = tpu.memref_squeeze %93 : memref<1x512x512xi8, #tpu.memory_space<any>> -> memref<512x512xi8, #tpu.memory_space<any>>
    %c0_i32_95 = arith.constant 0 : i32
    %c0_i32_96 = arith.constant 0 : i32
    %95 = tpu.memref_slice %arg10[%c3_i32_91, %c0_i32_95, %c0_i32_96] : memref<4x512x512xi8, #tpu.memory_space<vmem>> -> memref<1x512x512xi8, #tpu.memory_space<vmem>>
    %96 = tpu.memref_squeeze %95 : memref<1x512x512xi8, #tpu.memory_space<vmem>> -> memref<512x512xi8, #tpu.memory_space<vmem>>
    %97 = tpu.memref_slice %arg16[%c3_i32_92] : memref<4x!tpu.dma_semaphore, #tpu.memory_space<semaphore_mem>> -> memref<1x!tpu.dma_semaphore, #tpu.memory_space<semaphore_mem>>
    %98 = tpu.memref_squeeze %97 : memref<1x!tpu.dma_semaphore, #tpu.memory_space<semaphore_mem>> -> memref<!tpu.dma_semaphore, #tpu.memory_space<semaphore_mem>>
    tpu.wait_dma2 semaphore(%98 : memref<!tpu.dma_semaphore, #tpu.memory_space<semaphore_mem>>) src(%94 : memref<512x512xi8, #tpu.memory_space<any>>) dst(%96 : memref<512x512xi8, #tpu.memory_space<vmem>>)
    %c0_97 = arith.constant 0 : index
    %c1536 = arith.constant 1536 : index
    %99 = vector.load %arg1[%c0_97, %c1536] : memref<8x2048xbf16, #tpu.memory_space<vmem>>, vector<8x512xbf16>
    %c3 = arith.constant 3 : index
    %c0_98 = arith.constant 0 : index
    %c0_99 = arith.constant 0 : index
    %100 = vector.load %arg10[%c3, %c0_98, %c0_99] : memref<4x512x512xi8, #tpu.memory_space<vmem>>, vector<1x512x512xi8>
    %101 = vector.shape_cast %100 : vector<1x512x512xi8> to vector<512x512xi8>
    %102 = arith.sitofp %101 : vector<512x512xi8> to vector<512x512xbf16>
    %cst_100 = arith.constant dense<0.000000e+00> : vector<8x512xf32>
    %103 = tpu.matmul %99, %102, %cst_100 {dimension_numbers = #tpu.dot_dimension_numbers<[1], [0], [0], [1], [0, 0, 1, 1], [], []>} : vector<8x512xbf16>, vector<512x512xbf16>, vector<8x512xf32> -> vector<8x512xf32>
    %104 = arith.addf %92, %103 : vector<8x512xf32>
    %c0_101 = arith.constant 0 : index
    %c6016 = arith.constant 6016 : index
    %105 = vector.load %arg2[%c0_101, %c6016] : memref<1x8576xf32, #tpu.memory_space<vmem>>, vector<1x512xf32>
    %106 = vector.broadcast %105 : vector<1x512xf32> to vector<8x512xf32>
    %107 = arith.mulf %104, %106 : vector<8x512xf32>
    %c0_102 = arith.constant 0 : index
    %c0_103 = arith.constant 0 : index
    %108 = vector.load %arg2[%c0_102, %c0_103] : memref<1x8576xf32, #tpu.memory_space<vmem>>, vector<1x512xf32>
    %109 = vector.broadcast %108 : vector<1x512xf32> to vector<8x512xf32>
    %110 = arith.addf %107, %109 : vector<8x512xf32>
    %c0_104 = arith.constant 0 : index
    %c512_105 = arith.constant 512 : index
    %111 = vector.load %arg2[%c0_104, %c512_105] : memref<1x8576xf32, #tpu.memory_space<vmem>>, vector<1x512xf32>
    %c0_106 = arith.constant 0 : index
    %c1024_107 = arith.constant 1024 : index
    %112 = vector.load %arg2[%c0_106, %c1024_107] : memref<1x8576xf32, #tpu.memory_space<vmem>>, vector<1x512xf32>
    %cst_108 = arith.constant dense<0.000000e+00> : vector<512xf32>
    %113 = vector.multi_reduction <add>, %110, %cst_108 [0] : vector<8x512xf32> to vector<512xf32>
    %114 = vector.shape_cast %113 : vector<512xf32> to vector<1x512xf32>
    %cst_109 = arith.constant 8.000000e+00 : f32
    %115 = vector.broadcast %cst_109 : f32 to vector<1x512xf32>
    %116 = arith.divf %114, %115 : vector<1x512xf32>
    %117 = vector.broadcast %116 : vector<1x512xf32> to vector<8x512xf32>
    %118 = arith.subf %110, %117 : vector<8x512xf32>
    %119 = arith.mulf %118, %118 : vector<8x512xf32>
    %cst_110 = arith.constant dense<0.000000e+00> : vector<512xf32>
    %120 = vector.multi_reduction <add>, %119, %cst_110 [0] : vector<8x512xf32> to vector<512xf32>
    %121 = vector.shape_cast %120 : vector<512xf32> to vector<1x512xf32>
    %cst_111 = arith.constant 8.000000e+00 : f32
    %122 = vector.broadcast %cst_111 : f32 to vector<1x512xf32>
    %123 = arith.divf %121, %122 : vector<1x512xf32>
    %cst_112 = arith.constant 9.99999974E-6 : f32
    %124 = vector.broadcast %cst_112 : f32 to vector<1x512xf32>
    %125 = arith.addf %123, %124 : vector<1x512xf32>
    %126 = math.rsqrt %125 : vector<1x512xf32>
    %127 = vector.broadcast %126 : vector<1x512xf32> to vector<8x512xf32>
    %128 = arith.mulf %118, %127 : vector<8x512xf32>
    %129 = vector.broadcast %111 : vector<1x512xf32> to vector<8x512xf32>
    %130 = arith.mulf %128, %129 : vector<8x512xf32>
    %131 = vector.broadcast %112 : vector<1x512xf32> to vector<8x512xf32>
    %132 = arith.addf %130, %131 : vector<8x512xf32>
    %cst_113 = arith.constant 0.000000e+00 : f32
    %133 = vector.broadcast %cst_113 : f32 to vector<8x512xf32>
    %134 = arith.maximumf %132, %133 : vector<8x512xf32>
    %c0_114 = arith.constant 0 : index
    %c1536_115 = arith.constant 1536 : index
    %135 = vector.load %arg2[%c0_114, %c1536_115] : memref<1x8576xf32, #tpu.memory_space<vmem>>, vector<1x128xf32>
    %c0_i32_116 = arith.constant 0 : i32
    %136 = tpu.memref_slice %arg17[%c0_i32_116] : memref<4x!tpu.dma_semaphore, #tpu.memory_space<semaphore_mem>> -> memref<1x!tpu.dma_semaphore, #tpu.memory_space<semaphore_mem>>
    %137 = tpu.memref_squeeze %136 : memref<1x!tpu.dma_semaphore, #tpu.memory_space<semaphore_mem>> -> memref<!tpu.dma_semaphore, #tpu.memory_space<semaphore_mem>>
    tpu.wait_dma2 semaphore(%137 : memref<!tpu.dma_semaphore, #tpu.memory_space<semaphore_mem>>) src(%arg4 : memref<512x128xbf16, #tpu.memory_space<any>>) dst(%arg11 : memref<512x128xbf16, #tpu.memory_space<vmem>>)
    %138 = arith.truncf %134 : vector<8x512xf32> to vector<8x512xbf16>
    %c0_117 = arith.constant 0 : index
    %c0_118 = arith.constant 0 : index
    %139 = vector.load %arg11[%c0_117, %c0_118] : memref<512x128xbf16, #tpu.memory_space<vmem>>, vector<512x128xbf16>
    %cst_119 = arith.constant dense<0.000000e+00> : vector<8x128xf32>
    %140 = tpu.matmul %138, %139, %cst_119 {dimension_numbers = #tpu.dot_dimension_numbers<[1], [0], [0], [1], [0, 0, 1, 1], [], []>} : vector<8x512xbf16>, vector<512x128xbf16>, vector<8x128xf32> -> vector<8x128xf32>
    %141 = vector.broadcast %135 : vector<1x128xf32> to vector<8x128xf32>
    %142 = arith.addf %140, %141 : vector<8x128xf32>
    %c0_120 = arith.constant 0 : index
    %c1664 = arith.constant 1664 : index
    %143 = vector.load %arg2[%c0_120, %c1664] : memref<1x8576xf32, #tpu.memory_space<vmem>>, vector<1x128xf32>
    %c0_121 = arith.constant 0 : index
    %c1792 = arith.constant 1792 : index
    %144 = vector.load %arg2[%c0_121, %c1792] : memref<1x8576xf32, #tpu.memory_space<vmem>>, vector<1x128xf32>
    %cst_122 = arith.constant dense<0.000000e+00> : vector<128xf32>
    %145 = vector.multi_reduction <add>, %142, %cst_122 [0] : vector<8x128xf32> to vector<128xf32>
    %146 = vector.shape_cast %145 : vector<128xf32> to vector<1x128xf32>
    %cst_123 = arith.constant 8.000000e+00 : f32
    %147 = vector.broadcast %cst_123 : f32 to vector<1x128xf32>
    %148 = arith.divf %146, %147 : vector<1x128xf32>
    %149 = vector.broadcast %148 : vector<1x128xf32> to vector<8x128xf32>
    %150 = arith.subf %142, %149 : vector<8x128xf32>
    %151 = arith.mulf %150, %150 : vector<8x128xf32>
    %cst_124 = arith.constant dense<0.000000e+00> : vector<128xf32>
    %152 = vector.multi_reduction <add>, %151, %cst_124 [0] : vector<8x128xf32> to vector<128xf32>
    %153 = vector.shape_cast %152 : vector<128xf32> to vector<1x128xf32>
    %cst_125 = arith.constant 8.000000e+00 : f32
    %154 = vector.broadcast %cst_125 : f32 to vector<1x128xf32>
    %155 = arith.divf %153, %154 : vector<1x128xf32>
    %cst_126 = arith.constant 9.99999974E-6 : f32
    %156 = vector.broadcast %cst_126 : f32 to vector<1x128xf32>
    %157 = arith.addf %155, %156 : vector<1x128xf32>
    %158 = math.rsqrt %157 : vector<1x128xf32>
    %159 = vector.broadcast %158 : vector<1x128xf32> to vector<8x128xf32>
    %160 = arith.mulf %150, %159 : vector<8x128xf32>
    %161 = vector.broadcast %143 : vector<1x128xf32> to vector<8x128xf32>
    %162 = arith.mulf %160, %161 : vector<8x128xf32>
    %163 = vector.broadcast %144 : vector<1x128xf32> to vector<8x128xf32>
    %164 = arith.addf %162, %163 : vector<8x128xf32>
    %cst_127 = arith.constant 0.000000e+00 : f32
    %165 = vector.broadcast %cst_127 : f32 to vector<8x128xf32>
    %166 = arith.maximumf %164, %165 : vector<8x128xf32>
    %c0_128 = arith.constant 0 : index
    %c1920 = arith.constant 1920 : index
    %167 = vector.load %arg2[%c0_128, %c1920] : memref<1x8576xf32, #tpu.memory_space<vmem>>, vector<1x32xf32>
    %c1_i32_129 = arith.constant 1 : i32
    %168 = tpu.memref_slice %arg17[%c1_i32_129] : memref<4x!tpu.dma_semaphore, #tpu.memory_space<semaphore_mem>> -> memref<1x!tpu.dma_semaphore, #tpu.memory_space<semaphore_mem>>
    %169 = tpu.memref_squeeze %168 : memref<1x!tpu.dma_semaphore, #tpu.memory_space<semaphore_mem>> -> memref<!tpu.dma_semaphore, #tpu.memory_space<semaphore_mem>>
    tpu.wait_dma2 semaphore(%169 : memref<!tpu.dma_semaphore, #tpu.memory_space<semaphore_mem>>) src(%arg5 : memref<128x32xbf16, #tpu.memory_space<any>>) dst(%arg12 : memref<128x32xbf16, #tpu.memory_space<vmem>>)
    %170 = arith.truncf %166 : vector<8x128xf32> to vector<8x128xbf16>
    %c0_130 = arith.constant 0 : index
    %c0_131 = arith.constant 0 : index
    %171 = vector.load %arg12[%c0_130, %c0_131] : memref<128x32xbf16, #tpu.memory_space<vmem>>, vector<128x32xbf16>
    %cst_132 = arith.constant dense<0.000000e+00> : vector<8x32xf32>
    %172 = tpu.matmul %170, %171, %cst_132 {dimension_numbers = #tpu.dot_dimension_numbers<[1], [0], [0], [1], [0, 0, 1, 1], [], []>} : vector<8x128xbf16>, vector<128x32xbf16>, vector<8x32xf32> -> vector<8x32xf32>
    %173 = vector.broadcast %167 : vector<1x32xf32> to vector<8x32xf32>
    %174 = arith.addf %172, %173 : vector<8x32xf32>
    %c0_133 = arith.constant 0 : index
    %c2048 = arith.constant 2048 : index
    %175 = vector.load %arg2[%c0_133, %c2048] : memref<1x8576xf32, #tpu.memory_space<vmem>>, vector<1x128xf32>
    %c2_i32_134 = arith.constant 2 : i32
    %176 = tpu.memref_slice %arg17[%c2_i32_134] : memref<4x!tpu.dma_semaphore, #tpu.memory_space<semaphore_mem>> -> memref<1x!tpu.dma_semaphore, #tpu.memory_space<semaphore_mem>>
    %177 = tpu.memref_squeeze %176 : memref<1x!tpu.dma_semaphore, #tpu.memory_space<semaphore_mem>> -> memref<!tpu.dma_semaphore, #tpu.memory_space<semaphore_mem>>
    tpu.wait_dma2 semaphore(%177 : memref<!tpu.dma_semaphore, #tpu.memory_space<semaphore_mem>>) src(%arg6 : memref<32x128xbf16, #tpu.memory_space<any>>) dst(%arg13 : memref<32x128xbf16, #tpu.memory_space<vmem>>)
    %178 = arith.truncf %174 : vector<8x32xf32> to vector<8x32xbf16>
    %c0_135 = arith.constant 0 : index
    %c0_136 = arith.constant 0 : index
    %179 = vector.load %arg13[%c0_135, %c0_136] : memref<32x128xbf16, #tpu.memory_space<vmem>>, vector<32x128xbf16>
    %cst_137 = arith.constant dense<0.000000e+00> : vector<8x128xf32>
    %180 = tpu.matmul %178, %179, %cst_137 {dimension_numbers = #tpu.dot_dimension_numbers<[1], [0], [0], [1], [0, 0, 1, 1], [], []>} : vector<8x32xbf16>, vector<32x128xbf16>, vector<8x128xf32> -> vector<8x128xf32>
    %181 = vector.broadcast %175 : vector<1x128xf32> to vector<8x128xf32>
    %182 = arith.addf %180, %181 : vector<8x128xf32>
    %c0_138 = arith.constant 0 : index
    %c2176 = arith.constant 2176 : index
    %183 = vector.load %arg2[%c0_138, %c2176] : memref<1x8576xf32, #tpu.memory_space<vmem>>, vector<1x128xf32>
    %c0_139 = arith.constant 0 : index
    %c2304 = arith.constant 2304 : index
    %184 = vector.load %arg2[%c0_139, %c2304] : memref<1x8576xf32, #tpu.memory_space<vmem>>, vector<1x128xf32>
    %cst_140 = arith.constant dense<0.000000e+00> : vector<128xf32>
    %185 = vector.multi_reduction <add>, %182, %cst_140 [0] : vector<8x128xf32> to vector<128xf32>
    %186 = vector.shape_cast %185 : vector<128xf32> to vector<1x128xf32>
    %cst_141 = arith.constant 8.000000e+00 : f32
    %187 = vector.broadcast %cst_141 : f32 to vector<1x128xf32>
    %188 = arith.divf %186, %187 : vector<1x128xf32>
    %189 = vector.broadcast %188 : vector<1x128xf32> to vector<8x128xf32>
    %190 = arith.subf %182, %189 : vector<8x128xf32>
    %191 = arith.mulf %190, %190 : vector<8x128xf32>
    %cst_142 = arith.constant dense<0.000000e+00> : vector<128xf32>
    %192 = vector.multi_reduction <add>, %191, %cst_142 [0] : vector<8x128xf32> to vector<128xf32>
    %193 = vector.shape_cast %192 : vector<128xf32> to vector<1x128xf32>
    %cst_143 = arith.constant 8.000000e+00 : f32
    %194 = vector.broadcast %cst_143 : f32 to vector<1x128xf32>
    %195 = arith.divf %193, %194 : vector<1x128xf32>
    %cst_144 = arith.constant 9.99999974E-6 : f32
    %196 = vector.broadcast %cst_144 : f32 to vector<1x128xf32>
    %197 = arith.addf %195, %196 : vector<1x128xf32>
    %198 = math.rsqrt %197 : vector<1x128xf32>
    %199 = vector.broadcast %198 : vector<1x128xf32> to vector<8x128xf32>
    %200 = arith.mulf %190, %199 : vector<8x128xf32>
    %201 = vector.broadcast %183 : vector<1x128xf32> to vector<8x128xf32>
    %202 = arith.mulf %200, %201 : vector<8x128xf32>
    %203 = vector.broadcast %184 : vector<1x128xf32> to vector<8x128xf32>
    %204 = arith.addf %202, %203 : vector<8x128xf32>
    %cst_145 = arith.constant 0.000000e+00 : f32
    %205 = vector.broadcast %cst_145 : f32 to vector<8x128xf32>
    %206 = arith.maximumf %204, %205 : vector<8x128xf32>
    %c0_146 = arith.constant 0 : index
    %c2432 = arith.constant 2432 : index
    %207 = vector.load %arg2[%c0_146, %c2432] : memref<1x8576xf32, #tpu.memory_space<vmem>>, vector<1x512xf32>
    %c3_i32_147 = arith.constant 3 : i32
    %208 = tpu.memref_slice %arg17[%c3_i32_147] : memref<4x!tpu.dma_semaphore, #tpu.memory_space<semaphore_mem>> -> memref<1x!tpu.dma_semaphore, #tpu.memory_space<semaphore_mem>>
    %209 = tpu.memref_squeeze %208 : memref<1x!tpu.dma_semaphore, #tpu.memory_space<semaphore_mem>> -> memref<!tpu.dma_semaphore, #tpu.memory_space<semaphore_mem>>
    tpu.wait_dma2 semaphore(%209 : memref<!tpu.dma_semaphore, #tpu.memory_space<semaphore_mem>>) src(%arg7 : memref<128x512xbf16, #tpu.memory_space<any>>) dst(%arg14 : memref<128x512xbf16, #tpu.memory_space<vmem>>)
    %210 = arith.truncf %206 : vector<8x128xf32> to vector<8x128xbf16>
    %c0_148 = arith.constant 0 : index
    %c0_149 = arith.constant 0 : index
    %211 = vector.load %arg14[%c0_148, %c0_149] : memref<128x512xbf16, #tpu.memory_space<vmem>>, vector<128x512xbf16>
    %cst_150 = arith.constant dense<0.000000e+00> : vector<8x512xf32>
    %212 = tpu.matmul %210, %211, %cst_150 {dimension_numbers = #tpu.dot_dimension_numbers<[1], [0], [0], [1], [0, 0, 1, 1], [], []>} : vector<8x128xbf16>, vector<128x512xbf16>, vector<8x512xf32> -> vector<8x512xf32>
    %213 = vector.broadcast %207 : vector<1x512xf32> to vector<8x512xf32>
    %214 = arith.addf %212, %213 : vector<8x512xf32>
    %c0_151 = arith.constant 0 : index
    %c2944 = arith.constant 2944 : index
    %215 = vector.load %arg2[%c0_151, %c2944] : memref<1x8576xf32, #tpu.memory_space<vmem>>, vector<1x512xf32>
    %c0_152 = arith.constant 0 : index
    %c3456 = arith.constant 3456 : index
    %216 = vector.load %arg2[%c0_152, %c3456] : memref<1x8576xf32, #tpu.memory_space<vmem>>, vector<1x512xf32>
    %cst_153 = arith.constant dense<0.000000e+00> : vector<512xf32>
    %217 = vector.multi_reduction <add>, %214, %cst_153 [0] : vector<8x512xf32> to vector<512xf32>
    %218 = vector.shape_cast %217 : vector<512xf32> to vector<1x512xf32>
    %cst_154 = arith.constant 8.000000e+00 : f32
    %219 = vector.broadcast %cst_154 : f32 to vector<1x512xf32>
    %220 = arith.divf %218, %219 : vector<1x512xf32>
    %221 = vector.broadcast %220 : vector<1x512xf32> to vector<8x512xf32>
    %222 = arith.subf %214, %221 : vector<8x512xf32>
    %223 = arith.mulf %222, %222 : vector<8x512xf32>
    %cst_155 = arith.constant dense<0.000000e+00> : vector<512xf32>
    %224 = vector.multi_reduction <add>, %223, %cst_155 [0] : vector<8x512xf32> to vector<512xf32>
    %225 = vector.shape_cast %224 : vector<512xf32> to vector<1x512xf32>
    %cst_156 = arith.constant 8.000000e+00 : f32
    %226 = vector.broadcast %cst_156 : f32 to vector<1x512xf32>
    %227 = arith.divf %225, %226 : vector<1x512xf32>
    %cst_157 = arith.constant 9.99999974E-6 : f32
    %228 = vector.broadcast %cst_157 : f32 to vector<1x512xf32>
    %229 = arith.addf %227, %228 : vector<1x512xf32>
    %230 = math.rsqrt %229 : vector<1x512xf32>
    %231 = vector.broadcast %230 : vector<1x512xf32> to vector<8x512xf32>
    %232 = arith.mulf %222, %231 : vector<8x512xf32>
    %233 = vector.broadcast %215 : vector<1x512xf32> to vector<8x512xf32>
    %234 = arith.mulf %232, %233 : vector<8x512xf32>
    %235 = vector.broadcast %216 : vector<1x512xf32> to vector<8x512xf32>
    %236 = arith.addf %234, %235 : vector<8x512xf32>
    %cst_158 = arith.constant 0.000000e+00 : f32
    %237 = vector.broadcast %cst_158 : f32 to vector<8x512xf32>
    %238 = arith.maximumf %236, %237 : vector<8x512xf32>
    %239 = arith.truncf %238 : vector<8x512xf32> to vector<8x512xbf16>
    %c0_i32_159 = arith.constant 0 : i32
    %c0_i32_160 = arith.constant 0 : i32
    %c0_i32_161 = arith.constant 0 : i32
    %c0_i32_162 = arith.constant 0 : i32
    %c0_i32_163 = arith.constant 0 : i32
    %240 = tpu.memref_slice %arg8[%c0_i32_159, %c0_i32_162, %c0_i32_163] : memref<4x512x512xi8, #tpu.memory_space<any>> -> memref<1x512x512xi8, #tpu.memory_space<any>>
    %241 = tpu.memref_squeeze %240 : memref<1x512x512xi8, #tpu.memory_space<any>> -> memref<512x512xi8, #tpu.memory_space<any>>
    %c0_i32_164 = arith.constant 0 : i32
    %c0_i32_165 = arith.constant 0 : i32
    %242 = tpu.memref_slice %arg15[%c0_i32_160, %c0_i32_164, %c0_i32_165] : memref<4x512x512xi8, #tpu.memory_space<vmem>> -> memref<1x512x512xi8, #tpu.memory_space<vmem>>
    %243 = tpu.memref_squeeze %242 : memref<1x512x512xi8, #tpu.memory_space<vmem>> -> memref<512x512xi8, #tpu.memory_space<vmem>>
    %244 = tpu.memref_slice %arg18[%c0_i32_161] : memref<4x!tpu.dma_semaphore, #tpu.memory_space<semaphore_mem>> -> memref<1x!tpu.dma_semaphore, #tpu.memory_space<semaphore_mem>>
    %245 = tpu.memref_squeeze %244 : memref<1x!tpu.dma_semaphore, #tpu.memory_space<semaphore_mem>> -> memref<!tpu.dma_semaphore, #tpu.memory_space<semaphore_mem>>
    tpu.wait_dma2 semaphore(%245 : memref<!tpu.dma_semaphore, #tpu.memory_space<semaphore_mem>>) src(%241 : memref<512x512xi8, #tpu.memory_space<any>>) dst(%243 : memref<512x512xi8, #tpu.memory_space<vmem>>)
    %c0_166 = arith.constant 0 : index
    %c0_167 = arith.constant 0 : index
    %c0_168 = arith.constant 0 : index
    %246 = vector.load %arg15[%c0_166, %c0_167, %c0_168] : memref<4x512x512xi8, #tpu.memory_space<vmem>>, vector<1x512x512xi8>
    %247 = vector.shape_cast %246 : vector<1x512x512xi8> to vector<512x512xi8>
    %248 = arith.sitofp %247 : vector<512x512xi8> to vector<512x512xbf16>
    %cst_169 = arith.constant dense<0.000000e+00> : vector<8x512xf32>
    %249 = tpu.matmul %239, %248, %cst_169 {dimension_numbers = #tpu.dot_dimension_numbers<[1], [0], [0], [1], [0, 0, 1, 1], [], []>} : vector<8x512xbf16>, vector<512x512xbf16>, vector<8x512xf32> -> vector<8x512xf32>
    %c0_170 = arith.constant 0 : index
    %c6528 = arith.constant 6528 : index
    %250 = vector.load %arg2[%c0_170, %c6528] : memref<1x8576xf32, #tpu.memory_space<vmem>>, vector<1x512xf32>
    %251 = vector.broadcast %250 : vector<1x512xf32> to vector<8x512xf32>
    %252 = arith.mulf %249, %251 : vector<8x512xf32>
    %c0_171 = arith.constant 0 : index
    %c3968 = arith.constant 3968 : index
    %253 = vector.load %arg2[%c0_171, %c3968] : memref<1x8576xf32, #tpu.memory_space<vmem>>, vector<1x512xf32>
    %254 = vector.broadcast %253 : vector<1x512xf32> to vector<8x512xf32>
    %255 = arith.addf %252, %254 : vector<8x512xf32>
    %256 = math.tanh %255 : vector<8x512xf32>
    %c0_172 = arith.constant 0 : index
    %c0_173 = arith.constant 0 : index
    %257 = vector.load %arg9[%c0_172, %c0_173] : memref<8x2048xf32, #tpu.memory_space<vmem>>, vector<8x512xf32>
    tpu.vector_store %arg9[%c0_172, %c0_173], %256 {strides = array<i32>} : memref<8x2048xf32, #tpu.memory_space<vmem>>, vector<8x512xf32>,
    %c1_i32_174 = arith.constant 1 : i32
    %c1_i32_175 = arith.constant 1 : i32
    %c1_i32_176 = arith.constant 1 : i32
    %c0_i32_177 = arith.constant 0 : i32
    %c0_i32_178 = arith.constant 0 : i32
    %258 = tpu.memref_slice %arg8[%c1_i32_174, %c0_i32_177, %c0_i32_178] : memref<4x512x512xi8, #tpu.memory_space<any>> -> memref<1x512x512xi8, #tpu.memory_space<any>>
    %259 = tpu.memref_squeeze %258 : memref<1x512x512xi8, #tpu.memory_space<any>> -> memref<512x512xi8, #tpu.memory_space<any>>
    %c0_i32_179 = arith.constant 0 : i32
    %c0_i32_180 = arith.constant 0 : i32
    %260 = tpu.memref_slice %arg15[%c1_i32_175, %c0_i32_179, %c0_i32_180] : memref<4x512x512xi8, #tpu.memory_space<vmem>> -> memref<1x512x512xi8, #tpu.memory_space<vmem>>
    %261 = tpu.memref_squeeze %260 : memref<1x512x512xi8, #tpu.memory_space<vmem>> -> memref<512x512xi8, #tpu.memory_space<vmem>>
    %262 = tpu.memref_slice %arg18[%c1_i32_176] : memref<4x!tpu.dma_semaphore, #tpu.memory_space<semaphore_mem>> -> memref<1x!tpu.dma_semaphore, #tpu.memory_space<semaphore_mem>>
    %263 = tpu.memref_squeeze %262 : memref<1x!tpu.dma_semaphore, #tpu.memory_space<semaphore_mem>> -> memref<!tpu.dma_semaphore, #tpu.memory_space<semaphore_mem>>
    tpu.wait_dma2 semaphore(%263 : memref<!tpu.dma_semaphore, #tpu.memory_space<semaphore_mem>>) src(%259 : memref<512x512xi8, #tpu.memory_space<any>>) dst(%261 : memref<512x512xi8, #tpu.memory_space<vmem>>)
    %c1_181 = arith.constant 1 : index
    %c0_182 = arith.constant 0 : index
    %c0_183 = arith.constant 0 : index
    %264 = vector.load %arg15[%c1_181, %c0_182, %c0_183] : memref<4x512x512xi8, #tpu.memory_space<vmem>>, vector<1x512x512xi8>
    %265 = vector.shape_cast %264 : vector<1x512x512xi8> to vector<512x512xi8>
    %266 = arith.sitofp %265 : vector<512x512xi8> to vector<512x512xbf16>
    %cst_184 = arith.constant dense<0.000000e+00> : vector<8x512xf32>
    %267 = tpu.matmul %239, %266, %cst_184 {dimension_numbers = #tpu.dot_dimension_numbers<[1], [0], [0], [1], [0, 0, 1, 1], [], []>} : vector<8x512xbf16>, vector<512x512xbf16>, vector<8x512xf32> -> vector<8x512xf32>
    %c0_185 = arith.constant 0 : index
    %c7040 = arith.constant 7040 : index
    %268 = vector.load %arg2[%c0_185, %c7040] : memref<1x8576xf32, #tpu.memory_space<vmem>>, vector<1x512xf32>
    %269 = vector.broadcast %268 : vector<1x512xf32> to vector<8x512xf32>
    %270 = arith.mulf %267, %269 : vector<8x512xf32>
    %c0_186 = arith.constant 0 : index
    %c4480 = arith.constant 4480 : index
    %271 = vector.load %arg2[%c0_186, %c4480] : memref<1x8576xf32, #tpu.memory_space<vmem>>, vector<1x512xf32>
    %272 = vector.broadcast %271 : vector<1x512xf32> to vector<8x512xf32>
    %273 = arith.addf %270, %272 : vector<8x512xf32>
    %274 = math.tanh %273 : vector<8x512xf32>
    %c0_187 = arith.constant 0 : index
    %c512_188 = arith.constant 512 : index
    %275 = vector.load %arg9[%c0_187, %c512_188] : memref<8x2048xf32, #tpu.memory_space<vmem>>, vector<8x512xf32>
    tpu.vector_store %arg9[%c0_187, %c512_188], %274 {strides = array<i32>} : memref<8x2048xf32, #tpu.memory_space<vmem>>, vector<8x512xf32>,
    %c2_i32_189 = arith.constant 2 : i32
    %c2_i32_190 = arith.constant 2 : i32
    %c2_i32_191 = arith.constant 2 : i32
    %c0_i32_192 = arith.constant 0 : i32
    %c0_i32_193 = arith.constant 0 : i32
    %276 = tpu.memref_slice %arg8[%c2_i32_189, %c0_i32_192, %c0_i32_193] : memref<4x512x512xi8, #tpu.memory_space<any>> -> memref<1x512x512xi8, #tpu.memory_space<any>>
    %277 = tpu.memref_squeeze %276 : memref<1x512x512xi8, #tpu.memory_space<any>> -> memref<512x512xi8, #tpu.memory_space<any>>
    %c0_i32_194 = arith.constant 0 : i32
    %c0_i32_195 = arith.constant 0 : i32
    %278 = tpu.memref_slice %arg15[%c2_i32_190, %c0_i32_194, %c0_i32_195] : memref<4x512x512xi8, #tpu.memory_space<vmem>> -> memref<1x512x512xi8, #tpu.memory_space<vmem>>
    %279 = tpu.memref_squeeze %278 : memref<1x512x512xi8, #tpu.memory_space<vmem>> -> memref<512x512xi8, #tpu.memory_space<vmem>>
    %280 = tpu.memref_slice %arg18[%c2_i32_191] : memref<4x!tpu.dma_semaphore, #tpu.memory_space<semaphore_mem>> -> memref<1x!tpu.dma_semaphore, #tpu.memory_space<semaphore_mem>>
    %281 = tpu.memref_squeeze %280 : memref<1x!tpu.dma_semaphore, #tpu.memory_space<semaphore_mem>> -> memref<!tpu.dma_semaphore, #tpu.memory_space<semaphore_mem>>
    tpu.wait_dma2 semaphore(%281 : memref<!tpu.dma_semaphore, #tpu.memory_space<semaphore_mem>>) src(%277 : memref<512x512xi8, #tpu.memory_space<any>>) dst(%279 : memref<512x512xi8, #tpu.memory_space<vmem>>)
    %c2_196 = arith.constant 2 : index
    %c0_197 = arith.constant 0 : index
    %c0_198 = arith.constant 0 : index
    %282 = vector.load %arg15[%c2_196, %c0_197, %c0_198] : memref<4x512x512xi8, #tpu.memory_space<vmem>>, vector<1x512x512xi8>
    %283 = vector.shape_cast %282 : vector<1x512x512xi8> to vector<512x512xi8>
    %284 = arith.sitofp %283 : vector<512x512xi8> to vector<512x512xbf16>
    %cst_199 = arith.constant dense<0.000000e+00> : vector<8x512xf32>
    %285 = tpu.matmul %239, %284, %cst_199 {dimension_numbers = #tpu.dot_dimension_numbers<[1], [0], [0], [1], [0, 0, 1, 1], [], []>} : vector<8x512xbf16>, vector<512x512xbf16>, vector<8x512xf32> -> vector<8x512xf32>
    %c0_200 = arith.constant 0 : index
    %c7552 = arith.constant 7552 : index
    %286 = vector.load %arg2[%c0_200, %c7552] : memref<1x8576xf32, #tpu.memory_space<vmem>>, vector<1x512xf32>
    %287 = vector.broadcast %286 : vector<1x512xf32> to vector<8x512xf32>
    %288 = arith.mulf %285, %287 : vector<8x512xf32>
    %c0_201 = arith.constant 0 : index
    %c4992 = arith.constant 4992 : index
    %289 = vector.load %arg2[%c0_201, %c4992] : memref<1x8576xf32, #tpu.memory_space<vmem>>, vector<1x512xf32>
    %290 = vector.broadcast %289 : vector<1x512xf32> to vector<8x512xf32>
    %291 = arith.addf %288, %290 : vector<8x512xf32>
    %292 = math.tanh %291 : vector<8x512xf32>
    %c0_202 = arith.constant 0 : index
    %c1024_203 = arith.constant 1024 : index
    %293 = vector.load %arg9[%c0_202, %c1024_203] : memref<8x2048xf32, #tpu.memory_space<vmem>>, vector<8x512xf32>
    tpu.vector_store %arg9[%c0_202, %c1024_203], %292 {strides = array<i32>} : memref<8x2048xf32, #tpu.memory_space<vmem>>, vector<8x512xf32>,
    %c3_i32_204 = arith.constant 3 : i32
    %c3_i32_205 = arith.constant 3 : i32
    %c3_i32_206 = arith.constant 3 : i32
    %c0_i32_207 = arith.constant 0 : i32
    %c0_i32_208 = arith.constant 0 : i32
    %294 = tpu.memref_slice %arg8[%c3_i32_204, %c0_i32_207, %c0_i32_208] : memref<4x512x512xi8, #tpu.memory_space<any>> -> memref<1x512x512xi8, #tpu.memory_space<any>>
    %295 = tpu.memref_squeeze %294 : memref<1x512x512xi8, #tpu.memory_space<any>> -> memref<512x512xi8, #tpu.memory_space<any>>
    %c0_i32_209 = arith.constant 0 : i32
    %c0_i32_210 = arith.constant 0 : i32
    %296 = tpu.memref_slice %arg15[%c3_i32_205, %c0_i32_209, %c0_i32_210] : memref<4x512x512xi8, #tpu.memory_space<vmem>> -> memref<1x512x512xi8, #tpu.memory_space<vmem>>
    %297 = tpu.memref_squeeze %296 : memref<1x512x512xi8, #tpu.memory_space<vmem>> -> memref<512x512xi8, #tpu.memory_space<vmem>>
    %298 = tpu.memref_slice %arg18[%c3_i32_206] : memref<4x!tpu.dma_semaphore, #tpu.memory_space<semaphore_mem>> -> memref<1x!tpu.dma_semaphore, #tpu.memory_space<semaphore_mem>>
    %299 = tpu.memref_squeeze %298 : memref<1x!tpu.dma_semaphore, #tpu.memory_space<semaphore_mem>> -> memref<!tpu.dma_semaphore, #tpu.memory_space<semaphore_mem>>
    tpu.wait_dma2 semaphore(%299 : memref<!tpu.dma_semaphore, #tpu.memory_space<semaphore_mem>>) src(%295 : memref<512x512xi8, #tpu.memory_space<any>>) dst(%297 : memref<512x512xi8, #tpu.memory_space<vmem>>)
    %c3_211 = arith.constant 3 : index
    %c0_212 = arith.constant 0 : index
    %c0_213 = arith.constant 0 : index
    %300 = vector.load %arg15[%c3_211, %c0_212, %c0_213] : memref<4x512x512xi8, #tpu.memory_space<vmem>>, vector<1x512x512xi8>
    %301 = vector.shape_cast %300 : vector<1x512x512xi8> to vector<512x512xi8>
    %302 = arith.sitofp %301 : vector<512x512xi8> to vector<512x512xbf16>
    %cst_214 = arith.constant dense<0.000000e+00> : vector<8x512xf32>
    %303 = tpu.matmul %239, %302, %cst_214 {dimension_numbers = #tpu.dot_dimension_numbers<[1], [0], [0], [1], [0, 0, 1, 1], [], []>} : vector<8x512xbf16>, vector<512x512xbf16>, vector<8x512xf32> -> vector<8x512xf32>
    %c0_215 = arith.constant 0 : index
    %c8064 = arith.constant 8064 : index
    %304 = vector.load %arg2[%c0_215, %c8064] : memref<1x8576xf32, #tpu.memory_space<vmem>>, vector<1x512xf32>
    %305 = vector.broadcast %304 : vector<1x512xf32> to vector<8x512xf32>
    %306 = arith.mulf %303, %305 : vector<8x512xf32>
    %c0_216 = arith.constant 0 : index
    %c5504 = arith.constant 5504 : index
    %307 = vector.load %arg2[%c0_216, %c5504] : memref<1x8576xf32, #tpu.memory_space<vmem>>, vector<1x512xf32>
    %308 = vector.broadcast %307 : vector<1x512xf32> to vector<8x512xf32>
    %309 = arith.addf %306, %308 : vector<8x512xf32>
    %310 = math.tanh %309 : vector<8x512xf32>
    %c0_217 = arith.constant 0 : index
    %c1536_218 = arith.constant 1536 : index
    %311 = vector.load %arg9[%c0_217, %c1536_218] : memref<8x2048xf32, #tpu.memory_space<vmem>>, vector<8x512xf32>
    tpu.vector_store %arg9[%c0_217, %c1536_218], %310 {strides = array<i32>} : memref<8x2048xf32, #tpu.memory_space<vmem>>, vector<8x512xf32>,
    return
  }
  func.func @transform_0(%arg0: i32) -> (i32, i32) {
    %c0_i32 = arith.constant 0 : i32
    %c0_i32_0 = arith.constant 0 : i32
    %c0_i32_1 = arith.constant 0 : i32
    return %c0_i32, %c0_i32_0 : i32, i32
  }
  func.func @transform_1(%arg0: i32) -> (i32, i32) {
    %c0_i32 = arith.constant 0 : i32
    %c0_i32_0 = arith.constant 0 : i32
    %c0_i32_1 = arith.constant 0 : i32
    return %c0_i32, %c0_i32_0 : i32, i32
  }
  func.func @transform_8(%arg0: i32) -> (i32, i32) {
    %c0_i32 = arith.constant 0 : i32
    %c0_i32_0 = arith.constant 0 : i32
    %c0_i32_1 = arith.constant 0 : i32
    return %c0_i32, %c0_i32_0 : i32, i32
  }
}

</mosaic_0001>

<llo_original>
// kernel: tpu_custom_call.1
$region0: #{tpu_custom_call.1}
  #allocation0 [shape = 'u32[]', space=smem, size = 0x4, offset = 0x4, fixed_abs, tag = 'smem constant byte address 0x4 - core index']
  #allocation1 [shape = 'u32[144,128]{1,0:T(1,128)}', space=vmem, size = 0x12000, scoped, tag = 'internal scratch']
  #allocation2 [shape = 's8[4,512,512]{2,1,0:T(32,128)(4,1)}', space=vmem, size = 0x100000, scoped, tag = 'scratch operand']
  #allocation3 [shape = 'bf16[512,128]{1,0:T(16,128)(2,1)}', space=vmem, size = 0x20000, scoped, tag = 'scratch operand']
  #allocation4 [shape = 'bf16[128,32]{1,0:T(16,128)(2,1)}', space=vmem, size = 0x8000, scoped, tag = 'scratch operand']
  #allocation5 [shape = 'bf16[32,128]{1,0:T(16,128)(2,1)}', space=vmem, size = 0x2000, scoped, tag = 'scratch operand']
  #allocation6 [shape = 'bf16[128,512]{1,0:T(16,128)(2,1)}', space=vmem, size = 0x20000, scoped, tag = 'scratch operand']
  #allocation7 [shape = 's8[4,512,512]{2,1,0:T(32,128)(4,1)}', space=vmem, size = 0x100000, scoped, tag = 'scratch operand']
  #allocation8 [shape = 's32[4]{0}', space=sflag, size = 0x10, scoped, tag = 'scratch operand']
  #allocation9 [shape = 's32[4]{0}', space=sflag, size = 0x10, scoped, tag = 'scratch operand']
  #allocation10 [shape = 's32[4]{0}', space=sflag, size = 0x10, scoped, tag = 'scratch operand']
  #allocation15 [shape = 's32[]', space=sflag, size = 0x4, offset = 0, fixed_abs, tag = 'sflag constant byte address 0x0 - dummy sync flag']
  #allocation16 [shape = 's32[]', space=sflag, size = 0x4, offset = 0, fixed_abs, tag = 'sflag constant byte address 0x0 - dummy sync flag']
  #allocation17 [shape = 'u32[]', space=smem, size = 0x4, offset = 0x44, fixed_abs, tag = 'smem constant byte address 0x44 - assertion arg 0']
  #allocation18 [shape = 'u32[]', space=smem, size = 0x4, offset = 0x48, fixed_abs, tag = 'smem constant byte address 0x48 - assertion arg 1']
  #allocation19 [shape = 's32[]', space=sflag, size = 0x4, offset = 0, fixed_abs, tag = 'sflag constant byte address 0x0 - dummy sync flag']
  #allocation20 [shape = 's32[]', space=sflag, size = 0x4, offset = 0, fixed_abs, tag = 'sflag constant byte address 0x0 - dummy sync flag']
  #allocation21 [shape = 's32[]', space=sflag, size = 0x4, offset = 0, fixed_abs, tag = 'sflag constant byte address 0x0 - dummy sync flag']
  #allocation22 [shape = 's32[]', space=sflag, size = 0x4, offset = 0, fixed_abs, tag = 'sflag constant byte address 0x0 - dummy sync flag']
  #allocation23 [shape = 's32[]', space=sflag, size = 0x4, offset = 0, fixed_abs, tag = 'sflag constant byte address 0x0 - dummy sync flag']
  #allocation24 [shape = 's32[]', space=sflag, size = 0x4, offset = 0, fixed_abs, tag = 'sflag constant byte address 0x0 - dummy sync flag']
  #allocation25 [shape = 's32[]', space=sflag, size = 0x4, offset = 0, fixed_abs, tag = 'sflag constant byte address 0x0 - dummy sync flag']
  #allocation26 [shape = 's32[]', space=sflag, size = 0x4, offset = 0, fixed_abs, tag = 'sflag constant byte address 0x0 - dummy sync flag']
  #allocation27 [shape = 's32[]', space=sflag, size = 0x4, offset = 0, fixed_abs, tag = 'sflag constant byte address 0x0 - dummy sync flag']
  #allocation28 [shape = 's32[]', space=sflag, size = 0x4, offset = 0, fixed_abs, tag = 'sflag constant byte address 0x0 - dummy sync flag']
  #allocation29 [shape = 's32[]', space=sflag, size = 0x4, offset = 0, fixed_abs, tag = 'sflag constant byte address 0x0 - dummy sync flag']
  #allocation31 [shape = 's32[]', space=sflag, size = 0x4, offset = 0, fixed_abs, tag = 'sflag constant byte address 0x0 - dummy sync flag']
  #allocation32 [shape = 's32[]', space=sflag, size = 0x4, offset = 0, fixed_abs, tag = 'sflag constant byte address 0x0 - dummy sync flag']
  #allocation33 [shape = 's32[]', space=sflag, size = 0x4, offset = 0, fixed_abs, tag = 'sflag constant byte address 0x0 - dummy sync flag']
  #allocation34 [shape = 's32[]', space=sflag, size = 0x4, offset = 0, fixed_abs, tag = 'sflag constant byte address 0x0 - dummy sync flag']
  #allocation35 [shape = 's32[]', space=sflag, size = 0x4, offset = 0, fixed_abs, tag = 'sflag constant byte address 0x0 - dummy sync flag']
  #allocation36 [shape = 's32[]', space=sflag, size = 0x4, offset = 0, fixed_abs, tag = 'sflag constant byte address 0x0 - dummy sync flag']
  #allocation37 [shape = 's32[]', space=sflag, size = 0x4, offset = 0, fixed_abs, tag = 'sflag constant byte address 0x0 - dummy sync flag']
  #allocation38 [shape = 's32[]', space=sflag, size = 0x4, offset = 0, fixed_abs, tag = 'sflag constant byte address 0x0 - dummy sync flag']
  %s0 = inlined_call_operand.hbm [shape: bf16[8,2048], index: 0, kind: input, shape index: {}]
  %s1 = inlined_call_operand.vmem [shape: f32[1,8576], index: 1, kind: input, shape index: {}]
  %s2 = inlined_call_operand.hbm [shape: s8[4,512,512], index: 2, kind: input, shape index: {}]
  %s3 = inlined_call_operand.hbm [shape: bf16[512,128], index: 3, kind: input, shape index: {}]
  %s4 = inlined_call_operand.vmem [shape: bf16[128,32], index: 4, kind: input, shape index: {}]
  %s5 = inlined_call_operand.vmem [shape: bf16[32,128], index: 5, kind: input, shape index: {}]
  %s6 = inlined_call_operand.hbm [shape: bf16[128,512], index: 6, kind: input, shape index: {}]
  %s7 = inlined_call_operand.hbm [shape: s8[4,512,512], index: 7, kind: input, shape index: {}]
  %s8 = inlined_call_operand.hbm [shape: f32[8,2048], index: 8, kind: output, shape index: {}]
  %s9 = sld [smem:[#allocation0]]
  $region126: #{tpu_custom_call.1} parent=0
    _
  %s11 = ssub.s32 1, %s9
  %s12 = scalar_select 0, %s11, %s9
  $region1: #{tpu_custom_call.1} parent=0
    #allocation11 [shape = 'u8[32768]{0}', space=vmem, size = 0x8000, scoped, tag = 'input window, operand 0, single buffered']
    #allocation12 [shape = 's32[1]{0}', space=sflag, size = 0x4, scoped, tag = 'scoped memory for tpu_custom_call.1']
    #allocation13 [shape = 's32[1]{0}', space=sflag, size = 0x4, scoped, tag = 'scoped memory for tpu_custom_call.1']
    #allocation14 [shape = 'u8[65536]{0}', space=vmem, size = 0x10000, scoped, tag = 'output window, operand 0, single buffered']
    #allocation30 [shape = 'u32[9]{0}', space=smem, size = 0x24, scoped, tag = 'DMA stride descriptor']
    %13 = vsyncpa [#allocation12], 0
    %14 = vsyncpa [#allocation13], 0
    // Predicated region
    $region2: #{tpu_custom_call.1} parent=1 // pred_check
      _
    $region3: #{tpu_custom_call.1} parent=1 // pred_check_branch
      %16 = sbr.rel (0) target = $region5
    $region4: #{tpu_custom_call.1} parent=1 // pred_region
      %s18 = ssub.s32 1024, 1024
      %19 = vsyncadd [#allocation12], %s18
      %s21 = sshll.u32 [#allocation11], 4
      %s22 = int_to_ptr.vmem [resolvable:$true] %s21
      %24 = dma.hbm_to_vmem [thread:$0]  %s0, 1024, %s22, [#allocation12]
    $region5: #{tpu_custom_call.1} parent=1 // pred_fallthru
      _
    // Predicated region
    $region6: #{tpu_custom_call.1} parent=1 // pred_check
      _
    $region7: #{tpu_custom_call.1} parent=1 // pred_check_branch
      %26 = sbr.rel (0) target = $region9
    $region8: #{tpu_custom_call.1} parent=1 // pred_region
      _
    $region9: #{tpu_custom_call.1} parent=1 // pred_fallthru
      _
    // Predicated region
    $region10: #{tpu_custom_call.1} parent=1 // pred_check
      _
    $region11: #{tpu_custom_call.1} parent=1 // pred_check_branch
      %28 = sbr.rel (0) target = $region13
    $region12: #{tpu_custom_call.1} parent=1 // pred_region
      %29 = dma.done [#allocation12], 1024
    $region13: #{tpu_custom_call.1} parent=1 // pred_fallthru
      _
    // Predicated region
    $region14: #{tpu_custom_call.1} parent=1 // pred_check
      _
    $region15: #{tpu_custom_call.1} parent=1 // pred_check_branch
      %32 = sbr.rel target = $region17
    $region16: #{tpu_custom_call.1} parent=1 // pred_region
      %33 = sst [smem:[#allocation17]] [#allocation16]
      %34 = sst [smem:[#allocation18]] [#allocation15]
    $region17: #{tpu_custom_call.1} parent=1 // pred_fallthru
      _
    %36 = shalt.err (0)
    %s38 = sshll.u32 [#allocation2], 4
    %s39 = int_to_ptr.vmem [resolvable:$true] %s38
    %41 = dma.hbm_to_vmem [thread:$0]  %s2, 8192, %s39, [#allocation8]
    %s42 = scalar_lea.hbm %s2, 8192
    %s43 = scalar_lea.vmem [#allocation2], 512
    %s44 = scalar_lea.sflag [#allocation8], 1
    // Predicated region
    $region18: #{tpu_custom_call.1} parent=1 // pred_check
      _
    $region19: #{tpu_custom_call.1} parent=1 // pred_check_branch
      %46 = sbr.rel target = $region21
    $region20: #{tpu_custom_call.1} parent=1 // pred_region
      %47 = sst [smem:[#allocation17]] [#allocation20]
      %48 = sst [smem:[#allocation18]] [#allocation19]
    $region21: #{tpu_custom_call.1} parent=1 // pred_fallthru
      _
    %50 = shalt.err (0)
    %s52 = sshll.u32 %s43, 4
    %s53 = int_to_ptr.vmem [resolvable:$true] %s52
    %55 = dma.hbm_to_vmem [thread:$0]  %s42, 8192, %s53, %s44
    %s56 = scalar_lea.hbm %s2, 16384
    %s57 = scalar_lea.vmem [#allocation2], 1024
    %s58 = scalar_lea.sflag [#allocation8], 2
    // Predicated region
    $region22: #{tpu_custom_call.1} parent=1 // pred_check
      _
    $region23: #{tpu_custom_call.1} parent=1 // pred_check_branch
      %60 = sbr.rel target = $region25
    $region24: #{tpu_custom_call.1} parent=1 // pred_region
      %61 = sst [smem:[#allocation17]] [#allocation22]
      %62 = sst [smem:[#allocation18]] [#allocation21]
    $region25: #{tpu_custom_call.1} parent=1 // pred_fallthru
      _
    %64 = shalt.err (0)
    %s66 = sshll.u32 %s57, 4
    %s67 = int_to_ptr.vmem [resolvable:$true] %s66
    %69 = dma.hbm_to_vmem [thread:$0]  %s56, 8192, %s67, %s58
    %s70 = scalar_lea.hbm %s2, 24576
    %s71 = scalar_lea.vmem [#allocation2], 1536
    %s72 = scalar_lea.sflag [#allocation8], 3
    // Predicated region
    $region26: #{tpu_custom_call.1} parent=1 // pred_check
      _
    $region27: #{tpu_custom_call.1} parent=1 // pred_check_branch
      %74 = sbr.rel target = $region29
    $region28: #{tpu_custom_call.1} parent=1 // pred_region
      %75 = sst [smem:[#allocation17]] [#allocation24]
      %76 = sst [smem:[#allocation18]] [#allocation23]
    $region29: #{tpu_custom_call.1} parent=1 // pred_fallthru
      _
    %78 = shalt.err (0)
    %s80 = sshll.u32 %s71, 4
    %s81 = int_to_ptr.vmem [resolvable:$true] %s80
    %83 = dma.hbm_to_vmem [thread:$0]  %s70, 8192, %s81, %s72
    // Predicated region
    $region30: #{tpu_custom_call.1} parent=1 // pred_check
      _
    $region31: #{tpu_custom_call.1} parent=1 // pred_check_branch
      %85 = sbr.rel target = $region33
    $region32: #{tpu_custom_call.1} parent=1 // pred_region
      %86 = sst [smem:[#allocation17]] [#allocation26]
      %87 = sst [smem:[#allocation18]] [#allocation25]
    $region33: #{tpu_custom_call.1} parent=1 // pred_fallthru
      _
    %89 = shalt.err (0)
    %s91 = sshll.u32 [#allocation3], 4
    %s92 = int_to_ptr.vmem [resolvable:$true] %s91
    %94 = dma.hbm_to_vmem [thread:$0]  %s3, 4096, %s92, [#allocation9]
    %s95 = scalar_lea.sflag [#allocation9], 1
    %p97 = scmp.lt.u32.totalorder 64, 8
    %p98 = pneg %p97
    // Predicated region
    $region34: #{tpu_custom_call.1} parent=1 // pred_check
      _
    $region35: #{tpu_custom_call.1} parent=1 // pred_check_branch
      %100 = sbr.rel (%p97) target = $region37
    $region36: #{tpu_custom_call.1} parent=1 // pred_region
      %s115 = sand.u32 64, 7
      %p116 = scmp.eq.s32.totalorder %s115, 0
      // Predicated region
      $region49: #{tpu_custom_call.1} parent=36 // pred_check
        %p117 = pneg %p116
      $region50: #{tpu_custom_call.1} parent=36 // pred_check_branch
        %119 = sbr.rel (%p117) target = $region52
      $region51: #{tpu_custom_call.1} parent=36 // pred_region
        loop: start=0, step=1, limit=1
        $region53: #{tpu_custom_call.1} parent=51 // loop_pre_header
          _
        $region54: #{tpu_custom_call.1} parent=51 // loop_header
          %s121 = sphi 0, %s125
          %p122 = scmp.ge.s32.totalorder %s121, 1
          %s126 = sphi %s4, %s4
          %s127 = sphi [#allocation4], [#allocation4]
        $region55: #{tpu_custom_call.1} parent=51 // loop_header_branch
          %124 = sbr.rel (%p122) target = $region59
        $region56: #{tpu_custom_call.1} parent=51 // loop_body
          %v128 = vld [vmem:[%s126] sm:$0xff]
          %129 = vst [vmem:[%s127] sm:$0xff] %v128
          %v130 = vld [vmem:[%s126 + $0x8] sm:$0xff]
          %131 = vst [vmem:[%s127 + $0x8] sm:$0xff] %v130
          %v132 = vld [vmem:[%s126 + $0x10] sm:$0xff]
          %133 = vst [vmem:[%s127 + $0x10] sm:$0xff] %v132
          %v134 = vld [vmem:[%s126 + $0x18] sm:$0xff]
          %135 = vst [vmem:[%s127 + $0x18] sm:$0xff] %v134
          %v136 = vld [vmem:[%s126 + $0x20] sm:$0xff]
          %137 = vst [vmem:[%s127 + $0x20] sm:$0xff] %v136
          %v138 = vld [vmem:[%s126 + $0x28] sm:$0xff]
          %139 = vst [vmem:[%s127 + $0x28] sm:$0xff] %v138
          %v140 = vld [vmem:[%s126 + $0x30] sm:$0xff]
          %141 = vst [vmem:[%s127 + $0x30] sm:$0xff] %v140
          %v142 = vld [vmem:[%s126 + $0x38] sm:$0xff]
          %143 = vst [vmem:[%s127 + $0x38] sm:$0xff] %v142
        $region57: #{tpu_custom_call.1} parent=51 // loop_footer
          %s125 = sadd.s32 1, %s121
        $region58: #{tpu_custom_call.1} parent=51 // loop_footer_branch
          %120 = sbr.rel target = $region54
        $region59: #{tpu_custom_call.1} parent=51 // loop_exit
          _
      $region52: #{tpu_custom_call.1} parent=36 // pred_fallthru
        _
      %p144 = pneg %p116
      // Predicated region
      $region60: #{tpu_custom_call.1} parent=36 // pred_check
        _
      $region61: #{tpu_custom_call.1} parent=36 // pred_check_branch
        %146 = sbr.rel (%p116) target = $region63
      $region62: #{tpu_custom_call.1} parent=36 // pred_region
        %s147 = sand.u32 64, 7
      $region63: #{tpu_custom_call.1} parent=36 // pred_fallthru
        _
    $region37: #{tpu_custom_call.1} parent=1 // pred_fallthru
      _
    // Predicated region
    $region38: #{tpu_custom_call.1} parent=1 // pred_check
      %p101 = pneg %p97
    $region39: #{tpu_custom_call.1} parent=1 // pred_check_branch
      %103 = sbr.rel (%p101) target = $region41
    $region40: #{tpu_custom_call.1} parent=1 // pred_region
      %s104 = sshllo.u32 0, 64
      loop: start=0, step=1, limit=1
      $region42: #{tpu_custom_call.1} parent=40 // loop_pre_header
        _
      $region43: #{tpu_custom_call.1} parent=40 // loop_header
        %s106 = sphi 0, %s110
        %p107 = scmp.ge.s32.totalorder %s106, 1
        %s111 = sphi %s4, %s4
        %s112 = sphi [#allocation4], [#allocation4]
      $region44: #{tpu_custom_call.1} parent=40 // loop_header_branch
        %109 = sbr.rel (%p107) target = $region48
      $region45: #{tpu_custom_call.1} parent=40 // loop_body
        %v113 = vld [vmem:[%s111] sm:%s104]
        %114 = vst [vmem:[%s112] sm:%s104] %v113
      $region46: #{tpu_custom_call.1} parent=40 // loop_footer
        %s110 = sadd.s32 1, %s106
      $region47: #{tpu_custom_call.1} parent=40 // loop_footer_branch
        %105 = sbr.rel target = $region43
      $region48: #{tpu_custom_call.1} parent=40 // loop_exit
        _
    $region41: #{tpu_custom_call.1} parent=1 // pred_fallthru
      _
    // Predicated region
    $region64: #{tpu_custom_call.1} parent=1 // pred_check
      _
    $region65: #{tpu_custom_call.1} parent=1 // pred_check_branch
      %150 = sbr.rel (0) target = $region67
    $region66: #{tpu_custom_call.1} parent=1 // pred_region
      %151 = vsyncadd %s95, 1024
    $region67: #{tpu_custom_call.1} parent=1 // pred_fallthru
      _
    %s152 = scalar_lea.sflag [#allocation9], 2
    %p154 = scmp.lt.u32.totalorder 16, 8
    %p155 = pneg %p154
    // Predicated region
    $region68: #{tpu_custom_call.1} parent=1 // pred_check
      _
    $region69: #{tpu_custom_call.1} parent=1 // pred_check_branch
      %157 = sbr.rel (%p154) target = $region71
    $region70: #{tpu_custom_call.1} parent=1 // pred_region
      %s172 = sand.u32 16, 7
      %p173 = scmp.eq.s32.totalorder %s172, 0
      // Predicated region
      $region83: #{tpu_custom_call.1} parent=70 // pred_check
        %p174 = pneg %p173
      $region84: #{tpu_custom_call.1} parent=70 // pred_check_branch
        %176 = sbr.rel (%p174) target = $region86
      $region85: #{tpu_custom_call.1} parent=70 // pred_region
        loop: start=0, step=1, limit=1
        $region87: #{tpu_custom_call.1} parent=85 // loop_pre_header
          _
        $region88: #{tpu_custom_call.1} parent=85 // loop_header
          %s178 = sphi 0, %s182
          %p179 = scmp.ge.s32.totalorder %s178, 1
          %s183 = sphi %s5, %s5
          %s184 = sphi [#allocation5], [#allocation5]
        $region89: #{tpu_custom_call.1} parent=85 // loop_header_branch
          %181 = sbr.rel (%p179) target = $region93
        $region90: #{tpu_custom_call.1} parent=85 // loop_body
          %v185 = vld [vmem:[%s183] sm:$0xff]
          %186 = vst [vmem:[%s184] sm:$0xff] %v185
          %v187 = vld [vmem:[%s183 + $0x8] sm:$0xff]
          %188 = vst [vmem:[%s184 + $0x8] sm:$0xff] %v187
        $region91: #{tpu_custom_call.1} parent=85 // loop_footer
          %s182 = sadd.s32 1, %s178
        $region92: #{tpu_custom_call.1} parent=85 // loop_footer_branch
          %177 = sbr.rel target = $region88
        $region93: #{tpu_custom_call.1} parent=85 // loop_exit
          _
      $region86: #{tpu_custom_call.1} parent=70 // pred_fallthru
        _
      %p189 = pneg %p173
      // Predicated region
      $region94: #{tpu_custom_call.1} parent=70 // pred_check
        _
      $region95: #{tpu_custom_call.1} parent=70 // pred_check_branch
        %191 = sbr.rel (%p173) target = $region97
      $region96: #{tpu_custom_call.1} parent=70 // pred_region
        %s192 = sand.u32 16, 7
      $region97: #{tpu_custom_call.1} parent=70 // pred_fallthru
        _
    $region71: #{tpu_custom_call.1} parent=1 // pred_fallthru
      _
    // Predicated region
    $region72: #{tpu_custom_call.1} parent=1 // pred_check
      %p158 = pneg %p154
    $region73: #{tpu_custom_call.1} parent=1 // pred_check_branch
      %160 = sbr.rel (%p158) target = $region75
    $region74: #{tpu_custom_call.1} parent=1 // pred_region
      %s161 = sshllo.u32 0, 16
      loop: start=0, step=1, limit=1
      $region76: #{tpu_custom_call.1} parent=74 // loop_pre_header
        _
      $region77: #{tpu_custom_call.1} parent=74 // loop_header
        %s163 = sphi 0, %s167
        %p164 = scmp.ge.s32.totalorder %s163, 1
        %s168 = sphi %s5, %s5
        %s169 = sphi [#allocation5], [#allocation5]
      $region78: #{tpu_custom_call.1} parent=74 // loop_header_branch
        %166 = sbr.rel (%p164) target = $region82
      $region79: #{tpu_custom_call.1} parent=74 // loop_body
        %v170 = vld [vmem:[%s168] sm:%s161]
        %171 = vst [vmem:[%s169] sm:%s161] %v170
      $region80: #{tpu_custom_call.1} parent=74 // loop_footer
        %s167 = sadd.s32 1, %s163
      $region81: #{tpu_custom_call.1} parent=74 // loop_footer_branch
        %162 = sbr.rel target = $region77
      $region82: #{tpu_custom_call.1} parent=74 // loop_exit
        _
    $region75: #{tpu_custom_call.1} parent=1 // pred_fallthru
      _
    // Predicated region
    $region98: #{tpu_custom_call.1} parent=1 // pred_check
      _
    $region99: #{tpu_custom_call.1} parent=1 // pred_check_branch
      %195 = sbr.rel (0) target = $region101
    $region100: #{tpu_custom_call.1} parent=1 // pred_region
      %196 = vsyncadd %s152, 256
    $region101: #{tpu_custom_call.1} parent=1 // pred_fallthru
      _
    %s197 = scalar_lea.sflag [#allocation9], 3
    %s199 = sshll.u32 1, 14
    %s200 = sxor.u32 4294967295, %s199
    %s202 = sld [smem:[#allocation0]]
    %s203 = sadd.s32 2, %s202
    %s205 = sshll.u32 7, 26
    %s206 = sxor.u32 4294967295, %s205
    %s207 = sand.u32 0, %s206
    %s208 = sshll.u32 %s203, 26
    %s209 = sor.u32 %s207, %s208
    %s210 = sshll.u32 [#allocation6], 4
    %s211 = int_to_ptr.vmem [resolvable:$true] %s210
    %214 = sst [smem:[#allocation30]] 512
    %s215 = scalar_lea.smem [#allocation30], 1
    %216 = sst [smem:[%s215]] 512
    %s217 = scalar_lea.smem [#allocation30], 2
    %218 = sst [smem:[%s217]] 4
    %s219 = scalar_lea.smem [#allocation30], 3
    %220 = sst [smem:[%s219]] 64
    %s221 = scalar_lea.smem [#allocation30], 4
    %222 = sst [smem:[%s221]] 128
    %s223 = scalar_lea.smem [#allocation30], 5
    %224 = sst [smem:[%s223]] 2
    %s225 = scalar_lea.smem [#allocation30], 6
    %226 = sst [smem:[%s225]] 256
    %s227 = scalar_lea.smem [#allocation30], 7
    %228 = sst [smem:[%s227]] 64
    %s229 = scalar_lea.smem [#allocation30], 8
    %230 = sst [smem:[%s229]] 4
    %232 = dma.general %s6, 4096, %s211, %s197, [#allocation29], [#allocation30], %s209, 0
    // Predicated region
    $region102: #{tpu_custom_call.1} parent=1 // pred_check
      _
    $region103: #{tpu_custom_call.1} parent=1 // pred_check_branch
      %234 = sbr.rel target = $region105
    $region104: #{tpu_custom_call.1} parent=1 // pred_region
      %235 = sst [smem:[#allocation17]] [#allocation32]
      %236 = sst [smem:[#allocation18]] [#allocation31]
    $region105: #{tpu_custom_call.1} parent=1 // pred_fallthru
      _
    %238 = shalt.err (0)
    %s240 = sshll.u32 [#allocation7], 4
    %s241 = int_to_ptr.vmem [resolvable:$true] %s240
    %243 = dma.hbm_to_vmem [thread:$0]  %s7, 8192, %s241, [#allocation10]
    %s244 = scalar_lea.hbm %s7, 8192
    %s245 = scalar_lea.vmem [#allocation7], 512
    %s246 = scalar_lea.sflag [#allocation10], 1
    // Predicated region
    $region106: #{tpu_custom_call.1} parent=1 // pred_check
      _
    $region107: #{tpu_custom_call.1} parent=1 // pred_check_branch
      %248 = sbr.rel target = $region109
    $region108: #{tpu_custom_call.1} parent=1 // pred_region
      %249 = sst [smem:[#allocation17]] [#allocation34]
      %250 = sst [smem:[#allocation18]] [#allocation33]
    $region109: #{tpu_custom_call.1} parent=1 // pred_fallthru
      _
    %252 = shalt.err (0)
    %s254 = sshll.u32 %s245, 4
    %s255 = int_to_ptr.vmem [resolvable:$true] %s254
    %257 = dma.hbm_to_vmem [thread:$0]  %s244, 8192, %s255, %s246
    %s258 = scalar_lea.hbm %s7, 16384
    %s259 = scalar_lea.vmem [#allocation7], 1024
    %s260 = scalar_lea.sflag [#allocation10], 2
    // Predicated region
    $region110: #{tpu_custom_call.1} parent=1 // pred_check
      _
    $region111: #{tpu_custom_call.1} parent=1 // pred_check_branch
      %262 = sbr.rel target = $region113
    $region112: #{tpu_custom_call.1} parent=1 // pred_region
      %263 = sst [smem:[#allocation17]] [#allocation36]
      %264 = sst [smem:[#allocation18]] [#allocation35]
    $region113: #{tpu_custom_call.1} parent=1 // pred_fallthru
      _
    %266 = shalt.err (0)
    %s268 = sshll.u32 %s259, 4
    %s269 = int_to_ptr.vmem [resolvable:$true] %s268
    %271 = dma.hbm_to_vmem [thread:$0]  %s258, 8192, %s269, %s260
    %s272 = scalar_lea.hbm %s7, 24576
    %s273 = scalar_lea.vmem [#allocation7], 1536
    %s274 = scalar_lea.sflag [#allocation10], 3
    // Predicated region
    $region114: #{tpu_custom_call.1} parent=1 // pred_check
      _
    $region115: #{tpu_custom_call.1} parent=1 // pred_check_branch
      %276 = sbr.rel target = $region117
    $region116: #{tpu_custom_call.1} parent=1 // pred_region
      %277 = sst [smem:[#allocation17]] [#allocation38]
      %278 = sst [smem:[#allocation18]] [#allocation37]
    $region117: #{tpu_custom_call.1} parent=1 // pred_fallthru
      _
    %280 = shalt.err (0)
    %s282 = sshll.u32 %s273, 4
    %s283 = int_to_ptr.vmem [resolvable:$true] %s282
    %285 = dma.hbm_to_vmem [thread:$0]  %s272, 8192, %s283, %s274
    %s286 = smul.u32 2, 64
    %s287 = smul.u32 %s286, 4
    %s288 = sshll.u32 %s287, 4
    %289 = dma.done [#allocation8], %s288
    %v290 = vld [vmem:[#allocation11] sm:$0xff]
    %v291 = vld [vmem:[#allocation11 + $0x8] sm:$0xff]
    %v292 = vld [vmem:[#allocation2] sm:$0xff]
    %v293 = vld [vmem:[#allocation2 + $0x8] sm:$0xff]
    %v294 = vld [vmem:[#allocation2 + $0x10] sm:$0xff]
    %v295 = vld [vmem:[#allocation2 + $0x18] sm:$0xff]
    %v296 = vld [vmem:[#allocation2 + $0x20] sm:$0xff]
    %v297 = vld [vmem:[#allocation2 + $0x28] sm:$0xff]
    %v298 = vld [vmem:[#allocation2 + $0x30] sm:$0xff]
    %v299 = vld [vmem:[#allocation2 + $0x38] sm:$0xff]
    %v300 = vld [vmem:[#allocation2 + $0x40] sm:$0xff]
    %v301 = vld [vmem:[#allocation2 + $0x48] sm:$0xff]
    %v302 = vld [vmem:[#allocation2 + $0x50] sm:$0xff]
    %v303 = vld [vmem:[#allocation2 + $0x58] sm:$0xff]
    %v304 = vld [vmem:[#allocation2 + $0x60] sm:$0xff]
    %v305 = vld [vmem:[#allocation2 + $0x68] sm:$0xff]
    %v306 = vld [vmem:[#allocation2 + $0x70] sm:$0xff]
    %v307 = vld [vmem:[#allocation2 + $0x78] sm:$0xff]
    %v308 = vld [vmem:[#allocation2 + $0x80] sm:$0xff]
    %v309 = vld [vmem:[#allocation2 + $0x88] sm:$0xff]
    %v310 = vld [vmem:[#allocation2 + $0x90] sm:$0xff]
    %v311 = vld [vmem:[#allocation2 + $0x98] sm:$0xff]
    %v312 = vld [vmem:[#allocation2 + $0xa0] sm:$0xff]
    %v313 = vld [vmem:[#allocation2 + $0xa8] sm:$0xff]
    %v314 = vld [vmem:[#allocation2 + $0xb0] sm:$0xff]
    %v315 = vld [vmem:[#allocation2 + $0xb8] sm:$0xff]
    %v316 = vld [vmem:[#allocation2 + $0xc0] sm:$0xff]
    %v317 = vld [vmem:[#allocation2 + $0xc8] sm:$0xff]
    %v318 = vld [vmem:[#allocation2 + $0xd0] sm:$0xff]
    %v319 = vld [vmem:[#allocation2 + $0xd8] sm:$0xff]
    %v320 = vld [vmem:[#allocation2 + $0xe0] sm:$0xff]
    %v321 = vld [vmem:[#allocation2 + $0xe8] sm:$0xff]
    %v322 = vld [vmem:[#allocation2 + $0xf0] sm:$0xff]
    %v323 = vld [vmem:[#allocation2 + $0xf8] sm:$0xff]
    %v324 = vld [vmem:[#allocation2 + $0x100] sm:$0xff]
    %v325 = vld [vmem:[#allocation2 + $0x108] sm:$0xff]
    %v326 = vld [vmem:[#allocation2 + $0x110] sm:$0xff]
    %v327 = vld [vmem:[#allocation2 + $0x118] sm:$0xff]
    %v328 = vld [vmem:[#allocation2 + $0x120] sm:$0xff]
    %v329 = vld [vmem:[#allocation2 + $0x128] sm:$0xff]
    %v330 = vld [vmem:[#allocation2 + $0x130] sm:$0xff]
    %v331 = vld [vmem:[#allocation2 + $0x138] sm:$0xff]
    %v332 = vld [vmem:[#allocation2 + $0x140] sm:$0xff]
    %v333 = vld [vmem:[#allocation2 + $0x148] sm:$0xff]
    %v334 = vld [vmem:[#allocation2 + $0x150] sm:$0xff]
    %v335 = vld [vmem:[#allocation2 + $0x158] sm:$0xff]
    %v336 = vld [vmem:[#allocation2 + $0x160] sm:$0xff]
    %v337 = vld [vmem:[#allocation2 + $0x168] sm:$0xff]
    %v338 = vld [vmem:[#allocation2 + $0x170] sm:$0xff]
    %v339 = vld [vmem:[#allocation2 + $0x178] sm:$0xff]
    %v340 = vld [vmem:[#allocation2 + $0x180] sm:$0xff]
    %v341 = vld [vmem:[#allocation2 + $0x188] sm:$0xff]
    %v342 = vld [vmem:[#allocation2 + $0x190] sm:$0xff]
    %v343 = vld [vmem:[#allocation2 + $0x198] sm:$0xff]
    %v344 = vld [vmem:[#allocation2 + $0x1a0] sm:$0xff]
    %v345 = vld [vmem:[#allocation2 + $0x1a8] sm:$0xff]
    %v346 = vld [vmem:[#allocation2 + $0x1b0] sm:$0xff]
    %v347 = vld [vmem:[#allocation2 + $0x1b8] sm:$0xff]
    %v348 = vld [vmem:[#allocation2 + $0x1c0] sm:$0xff]
    %v349 = vld [vmem:[#allocation2 + $0x1c8] sm:$0xff]
    %v350 = vld [vmem:[#allocation2 + $0x1d0] sm:$0xff]
    %v351 = vld [vmem:[#allocation2 + $0x1d8] sm:$0xff]
    %v352 = vld [vmem:[#allocation2 + $0x1e0] sm:$0xff]
    %v353 = vld [vmem:[#allocation2 + $0x1e8] sm:$0xff]
    %v354 = vld [vmem:[#allocation2 + $0x1f0] sm:$0xff]
    %v355 = vld [vmem:[#allocation2 + $0x1f8] sm:$0xff]
    %v356 = vunpack.c.l.s8.bf16 %v292
    %v357 = vunpack.c.l.s8.bf16 %v293
    %v358 = vunpack.c.l.s8.bf16 %v294
    %v359 = vunpack.c.l.s8.bf16 %v295
    %v360 = vunpack.c.h.s8.bf16 %v292
    %v361 = vunpack.c.h.s8.bf16 %v293
    %v362 = vunpack.c.h.s8.bf16 %v294
    %v363 = vunpack.c.h.s8.bf16 %v295
    %v364 = vunpack.c.l.s8.bf16 %v296
    %v365 = vunpack.c.l.s8.bf16 %v297
    %v366 = vunpack.c.l.s8.bf16 %v298
    %v367 = vunpack.c.l.s8.bf16 %v299
    %v368 = vunpack.c.h.s8.bf16 %v296
    %v369 = vunpack.c.h.s8.bf16 %v297
    %v370 = vunpack.c.h.s8.bf16 %v298
    %v371 = vunpack.c.h.s8.bf16 %v299
    %v372 = vunpack.c.l.s8.bf16 %v300
    %v373 = vunpack.c.l.s8.bf16 %v301
    %v374 = vunpack.c.l.s8.bf16 %v302
    %v375 = vunpack.c.l.s8.bf16 %v303
    %v376 = vunpack.c.h.s8.bf16 %v300
    %v377 = vunpack.c.h.s8.bf16 %v301
    %v378 = vunpack.c.h.s8.bf16 %v302
    %v379 = vunpack.c.h.s8.bf16 %v303
    %v380 = vunpack.c.l.s8.bf16 %v304
    %v381 = vunpack.c.l.s8.bf16 %v305
    %v382 = vunpack.c.l.s8.bf16 %v306
    %v383 = vunpack.c.l.s8.bf16 %v307
    %v384 = vunpack.c.h.s8.bf16 %v304
    %v385 = vunpack.c.h.s8.bf16 %v305
    %v386 = vunpack.c.h.s8.bf16 %v306
    %v387 = vunpack.c.h.s8.bf16 %v307
    %v388 = vunpack.c.l.s8.bf16 %v308
    %v389 = vunpack.c.l.s8.bf16 %v309
    %v390 = vunpack.c.l.s8.bf16 %v310
    %v391 = vunpack.c.l.s8.bf16 %v311
    %v392 = vunpack.c.h.s8.bf16 %v308
    %v393 = vunpack.c.h.s8.bf16 %v309
    %v394 = vunpack.c.h.s8.bf16 %v310
    %v395 = vunpack.c.h.s8.bf16 %v311
    %v396 = vunpack.c.l.s8.bf16 %v312
    %v397 = vunpack.c.l.s8.bf16 %v313
    %v398 = vunpack.c.l.s8.bf16 %v314
    %v399 = vunpack.c.l.s8.bf16 %v315
    %v400 = vunpack.c.h.s8.bf16 %v312
    %v401 = vunpack.c.h.s8.bf16 %v313
    %v402 = vunpack.c.h.s8.bf16 %v314
    %v403 = vunpack.c.h.s8.bf16 %v315
    %v404 = vunpack.c.l.s8.bf16 %v316
    %v405 = vunpack.c.l.s8.bf16 %v317
    %v406 = vunpack.c.l.s8.bf16 %v318
    %v407 = vunpack.c.l.s8.bf16 %v319
    %v408 = vunpack.c.h.s8.bf16 %v316
    %v409 = vunpack.c.h.s8.bf16 %v317
    %v410 = vunpack.c.h.s8.bf16 %v318
    %v411 = vunpack.c.h.s8.bf16 %v319
    %v412 = vunpack.c.l.s8.bf16 %v320
    %v413 = vunpack.c.l.s8.bf16 %v321
    %v414 = vunpack.c.l.s8.bf16 %v322
    %v415 = vunpack.c.l.s8.bf16 %v323
    %v416 = vunpack.c.h.s8.bf16 %v320
    %v417 = vunpack.c.h.s8.bf16 %v321
    %v418 = vunpack.c.h.s8.bf16 %v322
    %v419 = vunpack.c.h.s8.bf16 %v323
    %v420 = vunpack.c.l.s8.bf16 %v324
    %v421 = vunpack.c.l.s8.bf16 %v325
    %v422 = vunpack.c.l.s8.bf16 %v326
    %v423 = vunpack.c.l.s8.bf16 %v327
    %v424 = vunpack.c.h.s8.bf16 %v324
    %v425 = vunpack.c.h.s8.bf16 %v325
    %v426 = vunpack.c.h.s8.bf16 %v326
    %v427 = vunpack.c.h.s8.bf16 %v327
    %v428 = vunpack.c.l.s8.bf16 %v328
    %v429 = vunpack.c.l.s8.bf16 %v329
    %v430 = vunpack.c.l.s8.bf16 %v330
    %v431 = vunpack.c.l.s8.bf16 %v331
    %v432 = vunpack.c.h.s8.bf16 %v328
    %v433 = vunpack.c.h.s8.bf16 %v329
    %v434 = vunpack.c.h.s8.bf16 %v330
    %v435 = vunpack.c.h.s8.bf16 %v331
    %v436 = vunpack.c.l.s8.bf16 %v332
    %v437 = vunpack.c.l.s8.bf16 %v333
    %v438 = vunpack.c.l.s8.bf16 %v334
    %v439 = vunpack.c.l.s8.bf16 %v335
    %v440 = vunpack.c.h.s8.bf16 %v332
    %v441 = vunpack.c.h.s8.bf16 %v333
    %v442 = vunpack.c.h.s8.bf16 %v334
    %v443 = vunpack.c.h.s8.bf16 %v335
    %v444 = vunpack.c.l.s8.bf16 %v336
    %v445 = vunpack.c.l.s8.bf16 %v337
    %v446 = vunpack.c.l.s8.bf16 %v338
    %v447 = vunpack.c.l.s8.bf16 %v339
    %v448 = vunpack.c.h.s8.bf16 %v336
    %v449 = vunpack.c.h.s8.bf16 %v337
    %v450 = vunpack.c.h.s8.bf16 %v338
    %v451 = vunpack.c.h.s8.bf16 %v339
    %v452 = vunpack.c.l.s8.bf16 %v340
    %v453 = vunpack.c.l.s8.bf16 %v341
    %v454 = vunpack.c.l.s8.bf16 %v342
    %v455 = vunpack.c.l.s8.bf16 %v343
    %v456 = vunpack.c.h.s8.bf16 %v340
    %v457 = vunpack.c.h.s8.bf16 %v341
    %v458 = vunpack.c.h.s8.bf16 %v342
    %v459 = vunpack.c.h.s8.bf16 %v343
    %v460 = vunpack.c.l.s8.bf16 %v344
    %v461 = vunpack.c.l.s8.bf16 %v345
    %v462 = vunpack.c.l.s8.bf16 %v346
    %v463 = vunpack.c.l.s8.bf16 %v347
    %v464 = vunpack.c.h.s8.bf16 %v344
    %v465 = vunpack.c.h.s8.bf16 %v345
    %v466 = vunpack.c.h.s8.bf16 %v346
    %v467 = vunpack.c.h.s8.bf16 %v347
    %v468 = vunpack.c.l.s8.bf16 %v348
    %v469 = vunpack.c.l.s8.bf16 %v349
    %v470 = vunpack.c.l.s8.bf16 %v350
    %v471 = vunpack.c.l.s8.bf16 %v351
    %v472 = vunpack.c.h.s8.bf16 %v348
    %v473 = vunpack.c.h.s8.bf16 %v349
    %v474 = vunpack.c.h.s8.bf16 %v350
    %v475 = vunpack.c.h.s8.bf16 %v351
    %v476 = vunpack.c.l.s8.bf16 %v352
    %v477 = vunpack.c.l.s8.bf16 %v353
    %v478 = vunpack.c.l.s8.bf16 %v354
    %v479 = vunpack.c.l.s8.bf16 %v355
    %v480 = vunpack.c.h.s8.bf16 %v352
    %v481 = vunpack.c.h.s8.bf16 %v353
    %v482 = vunpack.c.h.s8.bf16 %v354
    %v483 = vunpack.c.h.s8.bf16 %v355
    %s484 = sshll.u32 %s287, 4
    %485 = dma.done %s44, %s484
    %v486 = vld [vmem:[#allocation11 + $0x10] sm:$0xff]
    %v487 = vld [vmem:[#allocation11 + $0x18] sm:$0xff]
    %v488 = vld [vmem:[%s43] sm:$0xff]
    %v489 = vld [vmem:[%s43 + $0x8] sm:$0xff]
    %v490 = vld [vmem:[%s43 + $0x10] sm:$0xff]
    %v491 = vld [vmem:[%s43 + $0x18] sm:$0xff]
    %v492 = vld [vmem:[%s43 + $0x20] sm:$0xff]
    %v493 = vld [vmem:[%s43 + $0x28] sm:$0xff]
    %v494 = vld [vmem:[%s43 + $0x30] sm:$0xff]
    %v495 = vld [vmem:[%s43 + $0x38] sm:$0xff]
    %v496 = vld [vmem:[%s43 + $0x40] sm:$0xff]
    %v497 = vld [vmem:[%s43 + $0x48] sm:$0xff]
    %v498 = vld [vmem:[%s43 + $0x50] sm:$0xff]
    %v499 = vld [vmem:[%s43 + $0x58] sm:$0xff]
    %v500 = vld [vmem:[%s43 + $0x60] sm:$0xff]
    %v501 = vld [vmem:[%s43 + $0x68] sm:$0xff]
    %v502 = vld [vmem:[%s43 + $0x70] sm:$0xff]
    %v503 = vld [vmem:[%s43 + $0x78] sm:$0xff]
    %v504 = vld [vmem:[%s43 + $0x80] sm:$0xff]
    %v505 = vld [vmem:[%s43 + $0x88] sm:$0xff]
    %v506 = vld [vmem:[%s43 + $0x90] sm:$0xff]
    %v507 = vld [vmem:[%s43 + $0x98] sm:$0xff]
    %v508 = vld [vmem:[%s43 + $0xa0] sm:$0xff]
    %v509 = vld [vmem:[%s43 + $0xa8] sm:$0xff]
    %v510 = vld [vmem:[%s43 + $0xb0] sm:$0xff]
    %v511 = vld [vmem:[%s43 + $0xb8] sm:$0xff]
    %v512 = vld [vmem:[%s43 + $0xc0] sm:$0xff]
    %v513 = vld [vmem:[%s43 + $0xc8] sm:$0xff]
    %v514 = vld [vmem:[%s43 + $0xd0] sm:$0xff]
    %v515 = vld [vmem:[%s43 + $0xd8] sm:$0xff]
    %v516 = vld [vmem:[%s43 + $0xe0] sm:$0xff]
    %v517 = vld [vmem:[%s43 + $0xe8] sm:$0xff]
    %v518 = vld [vmem:[%s43 + $0xf0] sm:$0xff]
    %v519 = vld [vmem:[%s43 + $0xf8] sm:$0xff]
    %v520 = vld [vmem:[%s43 + $0x100] sm:$0xff]
    %v521 = vld [vmem:[%s43 + $0x108] sm:$0xff]
    %v522 = vld [vmem:[%s43 + $0x110] sm:$0xff]
    %v523 = vld [vmem:[%s43 + $0x118] sm:$0xff]
    %v524 = vld [vmem:[%s43 + $0x120] sm:$0xff]
    %v525 = vld [vmem:[%s43 + $0x128] sm:$0xff]
    %v526 = vld [vmem:[%s43 + $0x130] sm:$0xff]
    %v527 = vld [vmem:[%s43 + $0x138] sm:$0xff]
    %v528 = vld [vmem:[%s43 + $0x140] sm:$0xff]
    %v529 = vld [vmem:[%s43 + $0x148] sm:$0xff]
    %v530 = vld [vmem:[%s43 + $0x150] sm:$0xff]
    %v531 = vld [vmem:[%s43 + $0x158] sm:$0xff]
    %v532 = vld [vmem:[%s43 + $0x160] sm:$0xff]
    %v533 = vld [vmem:[%s43 + $0x168] sm:$0xff]
    %v534 = vld [vmem:[%s43 + $0x170] sm:$0xff]
    %v535 = vld [vmem:[%s43 + $0x178] sm:$0xff]
    %v536 = vld [vmem:[%s43 + $0x180] sm:$0xff]
    %v537 = vld [vmem:[%s43 + $0x188] sm:$0xff]
    %v538 = vld [vmem:[%s43 + $0x190] sm:$0xff]
    %v539 = vld [vmem:[%s43 + $0x198] sm:$0xff]
    %v540 = vld [vmem:[%s43 + $0x1a0] sm:$0xff]
    %v541 = vld [vmem:[%s43 + $0x1a8] sm:$0xff]
    %v542 = vld [vmem:[%s43 + $0x1b0] sm:$0xff]
    %v543 = vld [vmem:[%s43 + $0x1b8] sm:$0xff]
    %v544 = vld [vmem:[%s43 + $0x1c0] sm:$0xff]
    %v545 = vld [vmem:[%s43 + $0x1c8] sm:$0xff]
    %v546 = vld [vmem:[%s43 + $0x1d0] sm:$0xff]
    %v547 = vld [vmem:[%s43 + $0x1d8] sm:$0xff]
    %v548 = vld [vmem:[%s43 + $0x1e0] sm:$0xff]
    %v549 = vld [vmem:[%s43 + $0x1e8] sm:$0xff]
    %v550 = vld [vmem:[%s43 + $0x1f0] sm:$0xff]
    %v551 = vld [vmem:[%s43 + $0x1f8] sm:$0xff]
    %v552 = vunpack.c.l.s8.bf16 %v488
    %v553 = vunpack.c.l.s8.bf16 %v489
    %v554 = vunpack.c.l.s8.bf16 %v490
    %v555 = vunpack.c.l.s8.bf16 %v491
    %v556 = vunpack.c.h.s8.bf16 %v488
    %v557 = vunpack.c.h.s8.bf16 %v489
    %v558 = vunpack.c.h.s8.bf16 %v490
    %v559 = vunpack.c.h.s8.bf16 %v491
    %v560 = vunpack.c.l.s8.bf16 %v492
    %v561 = vunpack.c.l.s8.bf16 %v493
    %v562 = vunpack.c.l.s8.bf16 %v494
    %v563 = vunpack.c.l.s8.bf16 %v495
    %v564 = vunpack.c.h.s8.bf16 %v492
    %v565 = vunpack.c.h.s8.bf16 %v493
    %v566 = vunpack.c.h.s8.bf16 %v494
    %v567 = vunpack.c.h.s8.bf16 %v495
    %v568 = vunpack.c.l.s8.bf16 %v496
    %v569 = vunpack.c.l.s8.bf16 %v497
    %v570 = vunpack.c.l.s8.bf16 %v498
    %v571 = vunpack.c.l.s8.bf16 %v499
    %v572 = vunpack.c.h.s8.bf16 %v496
    %v573 = vunpack.c.h.s8.bf16 %v497
    %v574 = vunpack.c.h.s8.bf16 %v498
    %v575 = vunpack.c.h.s8.bf16 %v499
    %v576 = vunpack.c.l.s8.bf16 %v500
    %v577 = vunpack.c.l.s8.bf16 %v501
    %v578 = vunpack.c.l.s8.bf16 %v502
    %v579 = vunpack.c.l.s8.bf16 %v503
    %v580 = vunpack.c.h.s8.bf16 %v500
    %v581 = vunpack.c.h.s8.bf16 %v501
    %v582 = vunpack.c.h.s8.bf16 %v502
    %v583 = vunpack.c.h.s8.bf16 %v503
    %v584 = vunpack.c.l.s8.bf16 %v504
    %v585 = vunpack.c.l.s8.bf16 %v505
    %v586 = vunpack.c.l.s8.bf16 %v506
    %v587 = vunpack.c.l.s8.bf16 %v507
    %v588 = vunpack.c.h.s8.bf16 %v504
    %v589 = vunpack.c.h.s8.bf16 %v505
    %v590 = vunpack.c.h.s8.bf16 %v506
    %v591 = vunpack.c.h.s8.bf16 %v507
    %v592 = vunpack.c.l.s8.bf16 %v508
    %v593 = vunpack.c.l.s8.bf16 %v509
    %v594 = vunpack.c.l.s8.bf16 %v510
    %v595 = vunpack.c.l.s8.bf16 %v511
    %v596 = vunpack.c.h.s8.bf16 %v508
    %v597 = vunpack.c.h.s8.bf16 %v509
    %v598 = vunpack.c.h.s8.bf16 %v510
    %v599 = vunpack.c.h.s8.bf16 %v511
    %v600 = vunpack.c.l.s8.bf16 %v512
    %v601 = vunpack.c.l.s8.bf16 %v513
    %v602 = vunpack.c.l.s8.bf16 %v514
    %v603 = vunpack.c.l.s8.bf16 %v515
    %v604 = vunpack.c.h.s8.bf16 %v512
    %v605 = vunpack.c.h.s8.bf16 %v513
    %v606 = vunpack.c.h.s8.bf16 %v514
    %v607 = vunpack.c.h.s8.bf16 %v515
    %v608 = vunpack.c.l.s8.bf16 %v516
    %v609 = vunpack.c.l.s8.bf16 %v517
    %v610 = vunpack.c.l.s8.bf16 %v518
    %v611 = vunpack.c.l.s8.bf16 %v519
    %v612 = vunpack.c.h.s8.bf16 %v516
    %v613 = vunpack.c.h.s8.bf16 %v517
    %v614 = vunpack.c.h.s8.bf16 %v518
    %v615 = vunpack.c.h.s8.bf16 %v519
    %v616 = vunpack.c.l.s8.bf16 %v520
    %v617 = vunpack.c.l.s8.bf16 %v521
    %v618 = vunpack.c.l.s8.bf16 %v522
    %v619 = vunpack.c.l.s8.bf16 %v523
    %v620 = vunpack.c.h.s8.bf16 %v520
    %v621 = vunpack.c.h.s8.bf16 %v521
    %v622 = vunpack.c.h.s8.bf16 %v522
    %v623 = vunpack.c.h.s8.bf16 %v523
    %v624 = vunpack.c.l.s8.bf16 %v524
    %v625 = vunpack.c.l.s8.bf16 %v525
    %v626 = vunpack.c.l.s8.bf16 %v526
    %v627 = vunpack.c.l.s8.bf16 %v527
    %v628 = vunpack.c.h.s8.bf16 %v524
    %v629 = vunpack.c.h.s8.bf16 %v525
    %v630 = vunpack.c.h.s8.bf16 %v526
    %v631 = vunpack.c.h.s8.bf16 %v527
    %v632 = vunpack.c.l.s8.bf16 %v528
    %v633 = vunpack.c.l.s8.bf16 %v529
    %v634 = vunpack.c.l.s8.bf16 %v530
    %v635 = vunpack.c.l.s8.bf16 %v531
    %v636 = vunpack.c.h.s8.bf16 %v528
    %v637 = vunpack.c.h.s8.bf16 %v529
    %v638 = vunpack.c.h.s8.bf16 %v530
    %v639 = vunpack.c.h.s8.bf16 %v531
    %v640 = vunpack.c.l.s8.bf16 %v532
    %v641 = vunpack.c.l.s8.bf16 %v533
    %v642 = vunpack.c.l.s8.bf16 %v534
    %v643 = vunpack.c.l.s8.bf16 %v535
    %v644 = vunpack.c.h.s8.bf16 %v532
    %v645 = vunpack.c.h.s8.bf16 %v533
    %v646 = vunpack.c.h.s8.bf16 %v534
    %v647 = vunpack.c.h.s8.bf16 %v535
    %v648 = vunpack.c.l.s8.bf16 %v536
    %v649 = vunpack.c.l.s8.bf16 %v537
    %v650 = vunpack.c.l.s8.bf16 %v538
    %v651 = vunpack.c.l.s8.bf16 %v539
    %v652 = vunpack.c.h.s8.bf16 %v536
    %v653 = vunpack.c.h.s8.bf16 %v537
    %v654 = vunpack.c.h.s8.bf16 %v538
    %v655 = vunpack.c.h.s8.bf16 %v539
    %v656 = vunpack.c.l.s8.bf16 %v540
    %v657 = vunpack.c.l.s8.bf16 %v541
    %v658 = vunpack.c.l.s8.bf16 %v542
    %v659 = vunpack.c.l.s8.bf16 %v543
    %v660 = vunpack.c.h.s8.bf16 %v540
    %v661 = vunpack.c.h.s8.bf16 %v541
    %v662 = vunpack.c.h.s8.bf16 %v542
    %v663 = vunpack.c.h.s8.bf16 %v543
    %v664 = vunpack.c.l.s8.bf16 %v544
    %v665 = vunpack.c.l.s8.bf16 %v545
    %v666 = vunpack.c.l.s8.bf16 %v546
    %v667 = vunpack.c.l.s8.bf16 %v547
    %v668 = vunpack.c.h.s8.bf16 %v544
    %v669 = vunpack.c.h.s8.bf16 %v545
    %v670 = vunpack.c.h.s8.bf16 %v546
    %v671 = vunpack.c.h.s8.bf16 %v547
    %v672 = vunpack.c.l.s8.bf16 %v548
    %v673 = vunpack.c.l.s8.bf16 %v549
    %v674 = vunpack.c.l.s8.bf16 %v550
    %v675 = vunpack.c.l.s8.bf16 %v551
    %v676 = vunpack.c.h.s8.bf16 %v548
    %v677 = vunpack.c.h.s8.bf16 %v549
    %v678 = vunpack.c.h.s8.bf16 %v550
    %v679 = vunpack.c.h.s8.bf16 %v551
    %v682 = vunpack.c.l.b16 %v486
    %v683 = vunpack.c.h.b16 %v486
    %v684 = vunpack.c.l.b16 %v487
    %v685 = vunpack.c.h.b16 %v487
    %v686 = vpack.c.b16 %v682, %v682
    %v687 = vpack.c.b16 %v683, %v683
    %v688 = vpack.c.b16 %v684, %v684
    %v689 = vpack.c.b16 %v685, %v685
    %694 = vmatprep.subr.bf16.mxu0 %v553
    %695 = vmatpush1.bf16.msra.mxu0 %v552
    %696 = vmatprep.subr.bf16.mxu0 %v557
    %697 = vmatpush1.bf16.msra.mxu0 %v556
    %698 = vmatprep.subr.bf16.mxu0 %v561
    %699 = vmatpush1.bf16.msra.mxu0 %v560
    %700 = vmatprep.subr.bf16.mxu0 %v565
    %701 = vmatpush1.bf16.msra.mxu0 %v564
    %702 = vmatprep.subr.bf16.mxu0 %v569
    %703 = vmatpush1.bf16.msra.mxu0 %v568
    %704 = vmatprep.subr.bf16.mxu0 %v573
    %705 = vmatpush1.bf16.msra.mxu0 %v572
    %706 = vmatprep.subr.bf16.mxu0 %v577
    %707 = vmatpush1.bf16.msra.mxu0 %v576
    %708 = vmatprep.subr.bf16.mxu0 %v581
    %709 = vmatpush1.bf16.msra.mxu0 %v580
    %710 = vmatprep.subr.bf16.mxu0 %v585
    %711 = vmatpush1.bf16.msra.mxu0 %v584
    %712 = vmatprep.subr.bf16.mxu0 %v589
    %713 = vmatpush1.bf16.msra.mxu0 %v588
    %714 = vmatprep.subr.bf16.mxu0 %v593
    %715 = vmatpush1.bf16.msra.mxu0 %v592
    %716 = vmatprep.subr.bf16.mxu0 %v597
    %717 = vmatpush1.bf16.msra.mxu0 %v596
    %718 = vmatprep.subr.bf16.mxu0 %v601
    %719 = vmatpush1.bf16.msra.mxu0 %v600
    %720 = vmatprep.subr.bf16.mxu0 %v605
    %721 = vmatpush1.bf16.msra.mxu0 %v604
    %722 = vmatprep.subr.bf16.mxu0 %v609
    %723 = vmatpush1.bf16.msra.mxu0 %v608
    %724 = vmatprep.subr.bf16.mxu0 %v613
    %725 = vmatpush1.bf16.msra.mxu0 %v612
    %726 = vmatprep.mubr.bf16.mxu0 %v687
    %727 = vmatmul.mubr.bf16.gmra.mrb[0].mxu0 %v686
    %v728 = vpop.f32.mrb[0].mxu0
    %v729 = vadd.f32 0.0, %v728
    %v730 = vpop.f32.mrb[0].mxu0
    %v731 = vadd.f32 0.0, %v730
    %v732 = vpop.f32.mrb[0].mxu0
    %v733 = vpop.f32.mrb[0].mxu0
    %734 = vdwg.mxu0
    %735 = vmatprep.subr.bf16.mxu0 %v617
    %736 = vmatpush1.bf16.msra.mxu0 %v616
    %737 = vmatprep.subr.bf16.mxu0 %v621
    %738 = vmatpush1.bf16.msra.mxu0 %v620
    %739 = vmatprep.subr.bf16.mxu0 %v625
    %740 = vmatpush1.bf16.msra.mxu0 %v624
    %741 = vmatprep.subr.bf16.mxu0 %v629
    %742 = vmatpush1.bf16.msra.mxu0 %v628
    %743 = vmatprep.subr.bf16.mxu0 %v633
    %744 = vmatpush1.bf16.msra.mxu0 %v632
    %745 = vmatprep.subr.bf16.mxu0 %v637
    %746 = vmatpush1.bf16.msra.mxu0 %v636
    %747 = vmatprep.subr.bf16.mxu0 %v641
    %748 = vmatpush1.bf16.msra.mxu0 %v640
    %749 = vmatprep.subr.bf16.mxu0 %v645
    %750 = vmatpush1.bf16.msra.mxu0 %v644
    %751 = vmatprep.subr.bf16.mxu0 %v649
    %752 = vmatpush1.bf16.msra.mxu0 %v648
    %753 = vmatprep.subr.bf16.mxu0 %v653
    %754 = vmatpush1.bf16.msra.mxu0 %v652
    %755 = vmatprep.subr.bf16.mxu0 %v657
    %756 = vmatpush1.bf16.msra.mxu0 %v656
    %757 = vmatprep.subr.bf16.mxu0 %v661
    %758 = vmatpush1.bf16.msra.mxu0 %v660
    %759 = vmatprep.subr.bf16.mxu0 %v665
    %760 = vmatpush1.bf16.msra.mxu0 %v664
    %761 = vmatprep.subr.bf16.mxu0 %v669
    %762 = vmatpush1.bf16.msra.mxu0 %v668
    %763 = vmatprep.subr.bf16.mxu0 %v673
    %764 = vmatpush1.bf16.msra.mxu0 %v672
    %765 = vmatprep.subr.bf16.mxu0 %v677
    %766 = vmatpush1.bf16.msra.mxu0 %v676
    %767 = vmatprep.mubr.bf16.mxu0 %v689
    %768 = vmatmul.mubr.bf16.gmra.mrb[0].mxu0 %v688
    %v769 = vpop.f32.mrb[0].mxu0
    %v770 = vadd.f32 %v729, %v769
    %v771 = vpop.f32.mrb[0].mxu0
    %v772 = vadd.f32 %v731, %v771
    %v773 = vpop.f32.mrb[0].mxu0
    %v774 = vpop.f32.mrb[0].mxu0
    %775 = vdwg.mxu0
    %776 = vmatprep.subr.bf16.mxu0 %v555
    %777 = vmatpush1.bf16.msra.mxu0 %v554
    %778 = vmatprep.subr.bf16.mxu0 %v559
    %779 = vmatpush1.bf16.msra.mxu0 %v558
    %780 = vmatprep.subr.bf16.mxu0 %v563
    %781 = vmatpush1.bf16.msra.mxu0 %v562
    %782 = vmatprep.subr.bf16.mxu0 %v567
    %783 = vmatpush1.bf16.msra.mxu0 %v566
    %784 = vmatprep.subr.bf16.mxu0 %v571
    %785 = vmatpush1.bf16.msra.mxu0 %v570
    %786 = vmatprep.subr.bf16.mxu0 %v575
    %787 = vmatpush1.bf16.msra.mxu0 %v574
    %788 = vmatprep.subr.bf16.mxu0 %v579
    %789 = vmatpush1.bf16.msra.mxu0 %v578
    %790 = vmatprep.subr.bf16.mxu0 %v583
    %791 = vmatpush1.bf16.msra.mxu0 %v582
    %792 = vmatprep.subr.bf16.mxu0 %v587
    %793 = vmatpush1.bf16.msra.mxu0 %v586
    %794 = vmatprep.subr.bf16.mxu0 %v591
    %795 = vmatpush1.bf16.msra.mxu0 %v590
    %796 = vmatprep.subr.bf16.mxu0 %v595
    %797 = vmatpush1.bf16.msra.mxu0 %v594
    %798 = vmatprep.subr.bf16.mxu0 %v599
    %799 = vmatpush1.bf16.msra.mxu0 %v598
    %800 = vmatprep.subr.bf16.mxu0 %v603
    %801 = vmatpush1.bf16.msra.mxu0 %v602
    %802 = vmatprep.subr.bf16.mxu0 %v607
    %803 = vmatpush1.bf16.msra.mxu0 %v606
    %804 = vmatprep.subr.bf16.mxu0 %v611
    %805 = vmatpush1.bf16.msra.mxu0 %v610
    %806 = vmatprep.subr.bf16.mxu0 %v615
    %807 = vmatpush1.bf16.msra.mxu0 %v614
    %808 = vmatprep.mubr.bf16.mxu0 %v687
    %809 = vmatmul.mubr.bf16.gmra.mrb[0].mxu0 %v686
    %v810 = vpop.f32.mrb[0].mxu0
    %v811 = vadd.f32 0.0, %v810
    %v812 = vpop.f32.mrb[0].mxu0
    %v813 = vadd.f32 0.0, %v812
    %v814 = vpop.f32.mrb[0].mxu0
    %v815 = vpop.f32.mrb[0].mxu0
    %816 = vdwg.mxu0
    %817 = vmatprep.subr.bf16.mxu0 %v619
    %818 = vmatpush1.bf16.msra.mxu0 %v618
    %819 = vmatprep.subr.bf16.mxu0 %v623
    %820 = vmatpush1.bf16.msra.mxu0 %v622
    %821 = vmatprep.subr.bf16.mxu0 %v627
    %822 = vmatpush1.bf16.msra.mxu0 %v626
    %823 = vmatprep.subr.bf16.mxu0 %v631
    %824 = vmatpush1.bf16.msra.mxu0 %v630
    %825 = vmatprep.subr.bf16.mxu0 %v635
    %826 = vmatpush1.bf16.msra.mxu0 %v634
    %827 = vmatprep.subr.bf16.mxu0 %v639
    %828 = vmatpush1.bf16.msra.mxu0 %v638
    %829 = vmatprep.subr.bf16.mxu0 %v643
    %830 = vmatpush1.bf16.msra.mxu0 %v642
    %831 = vmatprep.subr.bf16.mxu0 %v647
    %832 = vmatpush1.bf16.msra.mxu0 %v646
    %833 = vmatprep.subr.bf16.mxu0 %v651
    %834 = vmatpush1.bf16.msra.mxu0 %v650
    %835 = vmatprep.subr.bf16.mxu0 %v655
    %836 = vmatpush1.bf16.msra.mxu0 %v654
    %837 = vmatprep.subr.bf16.mxu0 %v659
    %838 = vmatpush1.bf16.msra.mxu0 %v658
    %839 = vmatprep.subr.bf16.mxu0 %v663
    %840 = vmatpush1.bf16.msra.mxu0 %v662
    %841 = vmatprep.subr.bf16.mxu0 %v667
    %842 = vmatpush1.bf16.msra.mxu0 %v666
    %843 = vmatprep.subr.bf16.mxu0 %v671
    %844 = vmatpush1.bf16.msra.mxu0 %v670
    %845 = vmatprep.subr.bf16.mxu0 %v675
    %846 = vmatpush1.bf16.msra.mxu0 %v674
    %847 = vmatprep.subr.bf16.mxu0 %v679
    %848 = vmatpush1.bf16.msra.mxu0 %v678
    %849 = vmatprep.mubr.bf16.mxu0 %v689
    %850 = vmatmul.mubr.bf16.gmra.mrb[0].mxu0 %v688
    %v851 = vpop.f32.mrb[0].mxu0
    %v852 = vadd.f32 %v811, %v851
    %v853 = vpop.f32.mrb[0].mxu0
    %v854 = vadd.f32 %v813, %v853
    %v855 = vpop.f32.mrb[0].mxu0
    %v856 = vpop.f32.mrb[0].mxu0
    %857 = vdwg.mxu0
    %v860 = vunpack.c.l.b16 %v290
    %v861 = vunpack.c.h.b16 %v290
    %v862 = vunpack.c.l.b16 %v291
    %v863 = vunpack.c.h.b16 %v291
    %v864 = vpack.c.b16 %v860, %v860
    %v865 = vpack.c.b16 %v861, %v861
    %v866 = vpack.c.b16 %v862, %v862
    %v867 = vpack.c.b16 %v863, %v863
    %872 = vmatprep.subr.bf16.mxu0 %v357
    %873 = vmatpush1.bf16.msra.mxu0 %v356
    %874 = vmatprep.subr.bf16.mxu0 %v361
    %875 = vmatpush1.bf16.msra.mxu0 %v360
    %876 = vmatprep.subr.bf16.mxu0 %v365
    %877 = vmatpush1.bf16.msra.mxu0 %v364
    %878 = vmatprep.subr.bf16.mxu0 %v369
    %879 = vmatpush1.bf16.msra.mxu0 %v368
    %880 = vmatprep.subr.bf16.mxu0 %v373
    %881 = vmatpush1.bf16.msra.mxu0 %v372
    %882 = vmatprep.subr.bf16.mxu0 %v377
    %883 = vmatpush1.bf16.msra.mxu0 %v376
    %884 = vmatprep.subr.bf16.mxu0 %v381
    %885 = vmatpush1.bf16.msra.mxu0 %v380
    %886 = vmatprep.subr.bf16.mxu0 %v385
    %887 = vmatpush1.bf16.msra.mxu0 %v384
    %888 = vmatprep.subr.bf16.mxu0 %v389
    %889 = vmatpush1.bf16.msra.mxu0 %v388
    %890 = vmatprep.subr.bf16.mxu0 %v393
    %891 = vmatpush1.bf16.msra.mxu0 %v392
    %892 = vmatprep.subr.bf16.mxu0 %v397
    %893 = vmatpush1.bf16.msra.mxu0 %v396
    %894 = vmatprep.subr.bf16.mxu0 %v401
    %895 = vmatpush1.bf16.msra.mxu0 %v400
    %896 = vmatprep.subr.bf16.mxu0 %v405
    %897 = vmatpush1.bf16.msra.mxu0 %v404
    %898 = vmatprep.subr.bf16.mxu0 %v409
    %899 = vmatpush1.bf16.msra.mxu0 %v408
    %900 = vmatprep.subr.bf16.mxu0 %v413
    %901 = vmatpush1.bf16.msra.mxu0 %v412
    %902 = vmatprep.subr.bf16.mxu0 %v417
    %903 = vmatpush1.bf16.msra.mxu0 %v416
    %904 = vmatprep.mubr.bf16.mxu0 %v865
    %905 = vmatmul.mubr.bf16.gmra.mrb[0].mxu0 %v864
    %v906 = vpop.f32.mrb[0].mxu0
    %v907 = vadd.f32 %v770, %v906
    %v908 = vpop.f32.mrb[0].mxu0
    %v909 = vadd.f32 %v772, %v908
    %v910 = vpop.f32.mrb[0].mxu0
    %v911 = vpop.f32.mrb[0].mxu0
    %912 = vdwg.mxu0
    %913 = vmatprep.subr.bf16.mxu0 %v421
    %914 = vmatpush1.bf16.msra.mxu0 %v420
    %915 = vmatprep.subr.bf16.mxu0 %v425
    %916 = vmatpush1.bf16.msra.mxu0 %v424
    %917 = vmatprep.subr.bf16.mxu0 %v429
    %918 = vmatpush1.bf16.msra.mxu0 %v428
    %919 = vmatprep.subr.bf16.mxu0 %v433
    %920 = vmatpush1.bf16.msra.mxu0 %v432
    %921 = vmatprep.subr.bf16.mxu0 %v437
    %922 = vmatpush1.bf16.msra.mxu0 %v436
    %923 = vmatprep.subr.bf16.mxu0 %v441
    %924 = vmatpush1.bf16.msra.mxu0 %v440
    %925 = vmatprep.subr.bf16.mxu0 %v445
    %926 = vmatpush1.bf16.msra.mxu0 %v444
    %927 = vmatprep.subr.bf16.mxu0 %v449
    %928 = vmatpush1.bf16.msra.mxu0 %v448
    %929 = vmatprep.subr.bf16.mxu0 %v453
    %930 = vmatpush1.bf16.msra.mxu0 %v452
    %931 = vmatprep.subr.bf16.mxu0 %v457
    %932 = vmatpush1.bf16.msra.mxu0 %v456
    %933 = vmatprep.subr.bf16.mxu0 %v461
    %934 = vmatpush1.bf16.msra.mxu0 %v460
    %935 = vmatprep.subr.bf16.mxu0 %v465
    %936 = vmatpush1.bf16.msra.mxu0 %v464
    %937 = vmatprep.subr.bf16.mxu0 %v469
    %938 = vmatpush1.bf16.msra.mxu0 %v468
    %939 = vmatprep.subr.bf16.mxu0 %v473
    %940 = vmatpush1.bf16.msra.mxu0 %v472
    %941 = vmatprep.subr.bf16.mxu0 %v477
    %942 = vmatpush1.bf16.msra.mxu0 %v476
    %943 = vmatprep.subr.bf16.mxu0 %v481
    %944 = vmatpush1.bf16.msra.mxu0 %v480
    %945 = vmatprep.mubr.bf16.mxu0 %v867
    %946 = vmatmul.mubr.bf16.gmra.mrb[0].mxu0 %v866
    %v947 = vpop.f32.mrb[0].mxu0
    %v948 = vadd.f32 %v907, %v947
    %v949 = vpop.f32.mrb[0].mxu0
    %v950 = vadd.f32 %v909, %v949
    %v951 = vpop.f32.mrb[0].mxu0
    %v952 = vpop.f32.mrb[0].mxu0
    %953 = vdwg.mxu0
    %954 = vmatprep.subr.bf16.mxu0 %v359
    %955 = vmatpush1.bf16.msra.mxu0 %v358
    %956 = vmatprep.subr.bf16.mxu0 %v363
    %957 = vmatpush1.bf16.msra.mxu0 %v362
    %958 = vmatprep.subr.bf16.mxu0 %v367
    %959 = vmatpush1.bf16.msra.mxu0 %v366
    %960 = vmatprep.subr.bf16.mxu0 %v371
    %961 = vmatpush1.bf16.msra.mxu0 %v370
    %962 = vmatprep.subr.bf16.mxu0 %v375
    %963 = vmatpush1.bf16.msra.mxu0 %v374
    %964 = vmatprep.subr.bf16.mxu0 %v379
    %965 = vmatpush1.bf16.msra.mxu0 %v378
    %966 = vmatprep.subr.bf16.mxu0 %v383
    %967 = vmatpush1.bf16.msra.mxu0 %v382
    %968 = vmatprep.subr.bf16.mxu0 %v387
    %969 = vmatpush1.bf16.msra.mxu0 %v386
    %970 = vmatprep.subr.bf16.mxu0 %v391
    %971 = vmatpush1.bf16.msra.mxu0 %v390
    %972 = vmatprep.subr.bf16.mxu0 %v395
    %973 = vmatpush1.bf16.msra.mxu0 %v394
    %974 = vmatprep.subr.bf16.mxu0 %v399
    %975 = vmatpush1.bf16.msra.mxu0 %v398
    %976 = vmatprep.subr.bf16.mxu0 %v403
    %977 = vmatpush1.bf16.msra.mxu0 %v402
    %978 = vmatprep.subr.bf16.mxu0 %v407
    %979 = vmatpush1.bf16.msra.mxu0 %v406
    %980 = vmatprep.subr.bf16.mxu0 %v411
    %981 = vmatpush1.bf16.msra.mxu0 %v410
    %982 = vmatprep.subr.bf16.mxu0 %v415
    %983 = vmatpush1.bf16.msra.mxu0 %v414
    %984 = vmatprep.subr.bf16.mxu0 %v419
    %985 = vmatpush1.bf16.msra.mxu0 %v418
    %986 = vmatprep.mubr.bf16.mxu0 %v865
    %987 = vmatmul.mubr.bf16.gmra.mrb[0].mxu0 %v864
    %v988 = vpop.f32.mrb[0].mxu0
    %v989 = vadd.f32 %v852, %v988
    %v990 = vpop.f32.mrb[0].mxu0
    %v991 = vadd.f32 %v854, %v990
    %v992 = vpop.f32.mrb[0].mxu0
    %v993 = vpop.f32.mrb[0].mxu0
    %994 = vdwg.mxu0
    %995 = vmatprep.subr.bf16.mxu0 %v423
    %996 = vmatpush1.bf16.msra.mxu0 %v422
    %997 = vmatprep.subr.bf16.mxu0 %v427
    %998 = vmatpush1.bf16.msra.mxu0 %v426
    %999 = vmatprep.subr.bf16.mxu0 %v431
    %1000 = vmatpush1.bf16.msra.mxu0 %v430
    %1001 = vmatprep.subr.bf16.mxu0 %v435
    %1002 = vmatpush1.bf16.msra.mxu0 %v434
    %1003 = vmatprep.subr.bf16.mxu0 %v439
    %1004 = vmatpush1.bf16.msra.mxu0 %v438
    %1005 = vmatprep.subr.bf16.mxu0 %v443
    %1006 = vmatpush1.bf16.msra.mxu0 %v442
    %1007 = vmatprep.subr.bf16.mxu0 %v447
    %1008 = vmatpush1.bf16.msra.mxu0 %v446
    %1009 = vmatprep.subr.bf16.mxu0 %v451
    %1010 = vmatpush1.bf16.msra.mxu0 %v450
    %1011 = vmatprep.subr.bf16.mxu0 %v455
    %1012 = vmatpush1.bf16.msra.mxu0 %v454
    %1013 = vmatprep.subr.bf16.mxu0 %v459
    %1014 = vmatpush1.bf16.msra.mxu0 %v458
    %1015 = vmatprep.subr.bf16.mxu0 %v463
    %1016 = vmatpush1.bf16.msra.mxu0 %v462
    %1017 = vmatprep.subr.bf16.mxu0 %v467
    %1018 = vmatpush1.bf16.msra.mxu0 %v466
    %1019 = vmatprep.subr.bf16.mxu0 %v471
    %1020 = vmatpush1.bf16.msra.mxu0 %v470
    %1021 = vmatprep.subr.bf16.mxu0 %v475
    %1022 = vmatpush1.bf16.msra.mxu0 %v474
    %1023 = vmatprep.subr.bf16.mxu0 %v479
    %1024 = vmatpush1.bf16.msra.mxu0 %v478
    %1025 = vmatprep.subr.bf16.mxu0 %v483
    %1026 = vmatpush1.bf16.msra.mxu0 %v482
    %1027 = vmatprep.mubr.bf16.mxu0 %v867
    %1028 = vmatmul.mubr.bf16.gmra.mrb[0].mxu0 %v866
    %v1029 = vpop.f32.mrb[0].mxu0
    %v1030 = vadd.f32 %v989, %v1029
    %v1031 = vpop.f32.mrb[0].mxu0
    %v1032 = vadd.f32 %v991, %v1031
    %v1033 = vpop.f32.mrb[0].mxu0
    %v1034 = vpop.f32.mrb[0].mxu0
    %1035 = vdwg.mxu0
    %s1036 = sshll.u32 %s287, 4
    %1037 = dma.done %s58, %s1036
    %v1038 = vld [vmem:[#allocation11 + $0x20] sm:$0xff]
    %v1039 = vld [vmem:[#allocation11 + $0x28] sm:$0xff]
    %v1040 = vld [vmem:[%s57] sm:$0xff]
    %v1041 = vld [vmem:[%s57 + $0x8] sm:$0xff]
    %v1042 = vld [vmem:[%s57 + $0x10] sm:$0xff]
    %v1043 = vld [vmem:[%s57 + $0x18] sm:$0xff]
    %v1044 = vld [vmem:[%s57 + $0x20] sm:$0xff]
    %v1045 = vld [vmem:[%s57 + $0x28] sm:$0xff]
    %v1046 = vld [vmem:[%s57 + $0x30] sm:$0xff]
    %v1047 = vld [vmem:[%s57 + $0x38] sm:$0xff]
    %v1048 = vld [vmem:[%s57 + $0x40] sm:$0xff]
    %v1049 = vld [vmem:[%s57 + $0x48] sm:$0xff]
    %v1050 = vld [vmem:[%s57 + $0x50] sm:$0xff]
    %v1051 = vld [vmem:[%s57 + $0x58] sm:$0xff]
    %v1052 = vld [vmem:[%s57 + $0x60] sm:$0xff]
    %v1053 = vld [vmem:[%s57 + $0x68] sm:$0xff]
    %v1054 = vld [vmem:[%s57 + $0x70] sm:$0xff]
    %v1055 = vld [vmem:[%s57 + $0x78] sm:$0xff]
    %v1056 = vld [vmem:[%s57 + $0x80] sm:$0xff]
    %v1057 = vld [vmem:[%s57 + $0x88] sm:$0xff]
    %v1058 = vld [vmem:[%s57 + $0x90] sm:$0xff]
    %v1059 = vld [vmem:[%s57 + $0x98] sm:$0xff]
    %v1060 = vld [vmem:[%s57 + $0xa0] sm:$0xff]
    %v1061 = vld [vmem:[%s57 + $0xa8] sm:$0xff]
    %v1062 = vld [vmem:[%s57 + $0xb0] sm:$0xff]
    %v1063 = vld [vmem:[%s57 + $0xb8] sm:$0xff]
    %v1064 = vld [vmem:[%s57 + $0xc0] sm:$0xff]
    %v1065 = vld [vmem:[%s57 + $0xc8] sm:$0xff]
    %v1066 = vld [vmem:[%s57 + $0xd0] sm:$0xff]
    %v1067 = vld [vmem:[%s57 + $0xd8] sm:$0xff]
    %v1068 = vld [vmem:[%s57 + $0xe0] sm:$0xff]
    %v1069 = vld [vmem:[%s57 + $0xe8] sm:$0xff]
    %v1070 = vld [vmem:[%s57 + $0xf0] sm:$0xff]
    %v1071 = vld [vmem:[%s57 + $0xf8] sm:$0xff]
    %v1072 = vld [vmem:[%s57 + $0x100] sm:$0xff]
    %v1073 = vld [vmem:[%s57 + $0x108] sm:$0xff]
    %v1074 = vld [vmem:[%s57 + $0x110] sm:$0xff]
    %v1075 = vld [vmem:[%s57 + $0x118] sm:$0xff]
    %v1076 = vld [vmem:[%s57 + $0x120] sm:$0xff]
    %v1077 = vld [vmem:[%s57 + $0x128] sm:$0xff]
    %v1078 = vld [vmem:[%s57 + $0x130] sm:$0xff]
    %v1079 = vld [vmem:[%s57 + $0x138] sm:$0xff]
    %v1080 = vld [vmem:[%s57 + $0x140] sm:$0xff]
    %v1081 = vld [vmem:[%s57 + $0x148] sm:$0xff]
    %v1082 = vld [vmem:[%s57 + $0x150] sm:$0xff]
    %v1083 = vld [vmem:[%s57 + $0x158] sm:$0xff]
    %v1084 = vld [vmem:[%s57 + $0x160] sm:$0xff]
    %v1085 = vld [vmem:[%s57 + $0x168] sm:$0xff]
    %v1086 = vld [vmem:[%s57 + $0x170] sm:$0xff]
    %v1087 = vld [vmem:[%s57 + $0x178] sm:$0xff]
    %v1088 = vld [vmem:[%s57 + $0x180] sm:$0xff]
    %v1089 = vld [vmem:[%s57 + $0x188] sm:$0xff]
    %v1090 = vld [vmem:[%s57 + $0x190] sm:$0xff]
    %v1091 = vld [vmem:[%s57 + $0x198] sm:$0xff]
    %v1092 = vld [vmem:[%s57 + $0x1a0] sm:$0xff]
    %v1093 = vld [vmem:[%s57 + $0x1a8] sm:$0xff]
    %v1094 = vld [vmem:[%s57 + $0x1b0] sm:$0xff]
    %v1095 = vld [vmem:[%s57 + $0x1b8] sm:$0xff]
    %v1096 = vld [vmem:[%s57 + $0x1c0] sm:$0xff]
    %v1097 = vld [vmem:[%s57 + $0x1c8] sm:$0xff]
    %v1098 = vld [vmem:[%s57 + $0x1d0] sm:$0xff]
    %v1099 = vld [vmem:[%s57 + $0x1d8] sm:$0xff]
    %v1100 = vld [vmem:[%s57 + $0x1e0] sm:$0xff]
    %v1101 = vld [vmem:[%s57 + $0x1e8] sm:$0xff]
    %v1102 = vld [vmem:[%s57 + $0x1f0] sm:$0xff]
    %v1103 = vld [vmem:[%s57 + $0x1f8] sm:$0xff]
    %v1104 = vunpack.c.l.s8.bf16 %v1040
    %v1105 = vunpack.c.l.s8.bf16 %v1041
    %v1106 = vunpack.c.l.s8.bf16 %v1042
    %v1107 = vunpack.c.l.s8.bf16 %v1043
    %v1108 = vunpack.c.h.s8.bf16 %v1040
    %v1109 = vunpack.c.h.s8.bf16 %v1041
    %v1110 = vunpack.c.h.s8.bf16 %v1042
    %v1111 = vunpack.c.h.s8.bf16 %v1043
    %v1112 = vunpack.c.l.s8.bf16 %v1044
    %v1113 = vunpack.c.l.s8.bf16 %v1045
    %v1114 = vunpack.c.l.s8.bf16 %v1046
    %v1115 = vunpack.c.l.s8.bf16 %v1047
    %v1116 = vunpack.c.h.s8.bf16 %v1044
    %v1117 = vunpack.c.h.s8.bf16 %v1045
    %v1118 = vunpack.c.h.s8.bf16 %v1046
    %v1119 = vunpack.c.h.s8.bf16 %v1047
    %v1120 = vunpack.c.l.s8.bf16 %v1048
    %v1121 = vunpack.c.l.s8.bf16 %v1049
    %v1122 = vunpack.c.l.s8.bf16 %v1050
    %v1123 = vunpack.c.l.s8.bf16 %v1051
    %v1124 = vunpack.c.h.s8.bf16 %v1048
    %v1125 = vunpack.c.h.s8.bf16 %v1049
    %v1126 = vunpack.c.h.s8.bf16 %v1050
    %v1127 = vunpack.c.h.s8.bf16 %v1051
    %v1128 = vunpack.c.l.s8.bf16 %v1052
    %v1129 = vunpack.c.l.s8.bf16 %v1053
    %v1130 = vunpack.c.l.s8.bf16 %v1054
    %v1131 = vunpack.c.l.s8.bf16 %v1055
    %v1132 = vunpack.c.h.s8.bf16 %v1052
    %v1133 = vunpack.c.h.s8.bf16 %v1053
    %v1134 = vunpack.c.h.s8.bf16 %v1054
    %v1135 = vunpack.c.h.s8.bf16 %v1055
    %v1136 = vunpack.c.l.s8.bf16 %v1056
    %v1137 = vunpack.c.l.s8.bf16 %v1057
    %v1138 = vunpack.c.l.s8.bf16 %v1058
    %v1139 = vunpack.c.l.s8.bf16 %v1059
    %v1140 = vunpack.c.h.s8.bf16 %v1056
    %v1141 = vunpack.c.h.s8.bf16 %v1057
    %v1142 = vunpack.c.h.s8.bf16 %v1058
    %v1143 = vunpack.c.h.s8.bf16 %v1059
    %v1144 = vunpack.c.l.s8.bf16 %v1060
    %v1145 = vunpack.c.l.s8.bf16 %v1061
    %v1146 = vunpack.c.l.s8.bf16 %v1062
    %v1147 = vunpack.c.l.s8.bf16 %v1063
    %v1148 = vunpack.c.h.s8.bf16 %v1060
    %v1149 = vunpack.c.h.s8.bf16 %v1061
    %v1150 = vunpack.c.h.s8.bf16 %v1062
    %v1151 = vunpack.c.h.s8.bf16 %v1063
    %v1152 = vunpack.c.l.s8.bf16 %v1064
    %v1153 = vunpack.c.l.s8.bf16 %v1065
    %v1154 = vunpack.c.l.s8.bf16 %v1066
    %v1155 = vunpack.c.l.s8.bf16 %v1067
    %v1156 = vunpack.c.h.s8.bf16 %v1064
    %v1157 = vunpack.c.h.s8.bf16 %v1065
    %v1158 = vunpack.c.h.s8.bf16 %v1066
    %v1159 = vunpack.c.h.s8.bf16 %v1067
    %v1160 = vunpack.c.l.s8.bf16 %v1068
    %v1161 = vunpack.c.l.s8.bf16 %v1069
    %v1162 = vunpack.c.l.s8.bf16 %v1070
    %v1163 = vunpack.c.l.s8.bf16 %v1071
    %v1164 = vunpack.c.h.s8.bf16 %v1068
    %v1165 = vunpack.c.h.s8.bf16 %v1069
    %v1166 = vunpack.c.h.s8.bf16 %v1070
    %v1167 = vunpack.c.h.s8.bf16 %v1071
    %v1168 = vunpack.c.l.s8.bf16 %v1072
    %v1169 = vunpack.c.l.s8.bf16 %v1073
    %v1170 = vunpack.c.l.s8.bf16 %v1074
    %v1171 = vunpack.c.l.s8.bf16 %v1075
    %v1172 = vunpack.c.h.s8.bf16 %v1072
    %v1173 = vunpack.c.h.s8.bf16 %v1073
    %v1174 = vunpack.c.h.s8.bf16 %v1074
    %v1175 = vunpack.c.h.s8.bf16 %v1075
    %v1176 = vunpack.c.l.s8.bf16 %v1076
    %v1177 = vunpack.c.l.s8.bf16 %v1077
    %v1178 = vunpack.c.l.s8.bf16 %v1078
    %v1179 = vunpack.c.l.s8.bf16 %v1079
    %v1180 = vunpack.c.h.s8.bf16 %v1076
    %v1181 = vunpack.c.h.s8.bf16 %v1077
    %v1182 = vunpack.c.h.s8.bf16 %v1078
    %v1183 = vunpack.c.h.s8.bf16 %v1079
    %v1184 = vunpack.c.l.s8.bf16 %v1080
    %v1185 = vunpack.c.l.s8.bf16 %v1081
    %v1186 = vunpack.c.l.s8.bf16 %v1082
    %v1187 = vunpack.c.l.s8.bf16 %v1083
    %v1188 = vunpack.c.h.s8.bf16 %v1080
    %v1189 = vunpack.c.h.s8.bf16 %v1081
    %v1190 = vunpack.c.h.s8.bf16 %v1082
    %v1191 = vunpack.c.h.s8.bf16 %v1083
    %v1192 = vunpack.c.l.s8.bf16 %v1084
    %v1193 = vunpack.c.l.s8.bf16 %v1085
    %v1194 = vunpack.c.l.s8.bf16 %v1086
    %v1195 = vunpack.c.l.s8.bf16 %v1087
    %v1196 = vunpack.c.h.s8.bf16 %v1084
    %v1197 = vunpack.c.h.s8.bf16 %v1085
    %v1198 = vunpack.c.h.s8.bf16 %v1086
    %v1199 = vunpack.c.h.s8.bf16 %v1087
    %v1200 = vunpack.c.l.s8.bf16 %v1088
    %v1201 = vunpack.c.l.s8.bf16 %v1089
    %v1202 = vunpack.c.l.s8.bf16 %v1090
    %v1203 = vunpack.c.l.s8.bf16 %v1091
    %v1204 = vunpack.c.h.s8.bf16 %v1088
    %v1205 = vunpack.c.h.s8.bf16 %v1089
    %v1206 = vunpack.c.h.s8.bf16 %v1090
    %v1207 = vunpack.c.h.s8.bf16 %v1091
    %v1208 = vunpack.c.l.s8.bf16 %v1092
    %v1209 = vunpack.c.l.s8.bf16 %v1093
    %v1210 = vunpack.c.l.s8.bf16 %v1094
    %v1211 = vunpack.c.l.s8.bf16 %v1095
    %v1212 = vunpack.c.h.s8.bf16 %v1092
    %v1213 = vunpack.c.h.s8.bf16 %v1093
    %v1214 = vunpack.c.h.s8.bf16 %v1094
    %v1215 = vunpack.c.h.s8.bf16 %v1095
    %v1216 = vunpack.c.l.s8.bf16 %v1096
    %v1217 = vunpack.c.l.s8.bf16 %v1097
    %v1218 = vunpack.c.l.s8.bf16 %v1098
    %v1219 = vunpack.c.l.s8.bf16 %v1099
    %v1220 = vunpack.c.h.s8.bf16 %v1096
    %v1221 = vunpack.c.h.s8.bf16 %v1097
    %v1222 = vunpack.c.h.s8.bf16 %v1098
    %v1223 = vunpack.c.h.s8.bf16 %v1099
    %v1224 = vunpack.c.l.s8.bf16 %v1100
    %v1225 = vunpack.c.l.s8.bf16 %v1101
    %v1226 = vunpack.c.l.s8.bf16 %v1102
    %v1227 = vunpack.c.l.s8.bf16 %v1103
    %v1228 = vunpack.c.h.s8.bf16 %v1100
    %v1229 = vunpack.c.h.s8.bf16 %v1101
    %v1230 = vunpack.c.h.s8.bf16 %v1102
    %v1231 = vunpack.c.h.s8.bf16 %v1103
    %v1234 = vunpack.c.l.b16 %v1038
    %v1235 = vunpack.c.h.b16 %v1038
    %v1236 = vunpack.c.l.b16 %v1039
    %v1237 = vunpack.c.h.b16 %v1039
    %v1238 = vpack.c.b16 %v1234, %v1234
    %v1239 = vpack.c.b16 %v1235, %v1235
    %v1240 = vpack.c.b16 %v1236, %v1236
    %v1241 = vpack.c.b16 %v1237, %v1237
    %1246 = vmatprep.subr.bf16.mxu0 %v1105
    %1247 = vmatpush1.bf16.msra.mxu0 %v1104
    %1248 = vmatprep.subr.bf16.mxu0 %v1109
    %1249 = vmatpush1.bf16.msra.mxu0 %v1108
    %1250 = vmatprep.subr.bf16.mxu0 %v1113
    %1251 = vmatpush1.bf16.msra.mxu0 %v1112
    %1252 = vmatprep.subr.bf16.mxu0 %v1117
    %1253 = vmatpush1.bf16.msra.mxu0 %v1116
    %1254 = vmatprep.subr.bf16.mxu0 %v1121
    %1255 = vmatpush1.bf16.msra.mxu0 %v1120
    %1256 = vmatprep.subr.bf16.mxu0 %v1125
    %1257 = vmatpush1.bf16.msra.mxu0 %v1124
    %1258 = vmatprep.subr.bf16.mxu0 %v1129
    %1259 = vmatpush1.bf16.msra.mxu0 %v1128
    %1260 = vmatprep.subr.bf16.mxu0 %v1133
    %1261 = vmatpush1.bf16.msra.mxu0 %v1132
    %1262 = vmatprep.subr.bf16.mxu0 %v1137
    %1263 = vmatpush1.bf16.msra.mxu0 %v1136
    %1264 = vmatprep.subr.bf16.mxu0 %v1141
    %1265 = vmatpush1.bf16.msra.mxu0 %v1140
    %1266 = vmatprep.subr.bf16.mxu0 %v1145
    %1267 = vmatpush1.bf16.msra.mxu0 %v1144
    %1268 = vmatprep.subr.bf16.mxu0 %v1149
    %1269 = vmatpush1.bf16.msra.mxu0 %v1148
    %1270 = vmatprep.subr.bf16.mxu0 %v1153
    %1271 = vmatpush1.bf16.msra.mxu0 %v1152
    %1272 = vmatprep.subr.bf16.mxu0 %v1157
    %1273 = vmatpush1.bf16.msra.mxu0 %v1156
    %1274 = vmatprep.subr.bf16.mxu0 %v1161
    %1275 = vmatpush1.bf16.msra.mxu0 %v1160
    %1276 = vmatprep.subr.bf16.mxu0 %v1165
    %1277 = vmatpush1.bf16.msra.mxu0 %v1164
    %1278 = vmatprep.mubr.bf16.mxu0 %v1239
    %1279 = vmatmul.mubr.bf16.gmra.mrb[0].mxu0 %v1238
    %v1280 = vpop.f32.mrb[0].mxu0
    %v1281 = vadd.f32 0.0, %v1280
    %v1282 = vpop.f32.mrb[0].mxu0
    %v1283 = vadd.f32 0.0, %v1282
    %v1284 = vpop.f32.mrb[0].mxu0
    %v1285 = vpop.f32.mrb[0].mxu0
    %1286 = vdwg.mxu0
    %1287 = vmatprep.subr.bf16.mxu0 %v1169
    %1288 = vmatpush1.bf16.msra.mxu0 %v1168
    %1289 = vmatprep.subr.bf16.mxu0 %v1173
    %1290 = vmatpush1.bf16.msra.mxu0 %v1172
    %1291 = vmatprep.subr.bf16.mxu0 %v1177
    %1292 = vmatpush1.bf16.msra.mxu0 %v1176
    %1293 = vmatprep.subr.bf16.mxu0 %v1181
    %1294 = vmatpush1.bf16.msra.mxu0 %v1180
    %1295 = vmatprep.subr.bf16.mxu0 %v1185
    %1296 = vmatpush1.bf16.msra.mxu0 %v1184
    %1297 = vmatprep.subr.bf16.mxu0 %v1189
    %1298 = vmatpush1.bf16.msra.mxu0 %v1188
    %1299 = vmatprep.subr.bf16.mxu0 %v1193
    %1300 = vmatpush1.bf16.msra.mxu0 %v1192
    %1301 = vmatprep.subr.bf16.mxu0 %v1197
    %1302 = vmatpush1.bf16.msra.mxu0 %v1196
    %1303 = vmatprep.subr.bf16.mxu0 %v1201
    %1304 = vmatpush1.bf16.msra.mxu0 %v1200
    %1305 = vmatprep.subr.bf16.mxu0 %v1205
    %1306 = vmatpush1.bf16.msra.mxu0 %v1204
    %1307 = vmatprep.subr.bf16.mxu0 %v1209
    %1308 = vmatpush1.bf16.msra.mxu0 %v1208
    %1309 = vmatprep.subr.bf16.mxu0 %v1213
    %1310 = vmatpush1.bf16.msra.mxu0 %v1212
    %1311 = vmatprep.subr.bf16.mxu0 %v1217
    %1312 = vmatpush1.bf16.msra.mxu0 %v1216
    %1313 = vmatprep.subr.bf16.mxu0 %v1221
    %1314 = vmatpush1.bf16.msra.mxu0 %v1220
    %1315 = vmatprep.subr.bf16.mxu0 %v1225
    %1316 = vmatpush1.bf16.msra.mxu0 %v1224
    %1317 = vmatprep.subr.bf16.mxu0 %v1229
    %1318 = vmatpush1.bf16.msra.mxu0 %v1228
    %1319 = vmatprep.mubr.bf16.mxu0 %v1241
    %1320 = vmatmul.mubr.bf16.gmra.mrb[0].mxu0 %v1240
    %v1321 = vpop.f32.mrb[0].mxu0
    %v1322 = vadd.f32 %v1281, %v1321
    %v1323 = vpop.f32.mrb[0].mxu0
    %v1324 = vadd.f32 %v1283, %v1323
    %v1325 = vpop.f32.mrb[0].mxu0
    %v1326 = vpop.f32.mrb[0].mxu0
    %1327 = vdwg.mxu0
    %1328 = vmatprep.subr.bf16.mxu0 %v1107
    %1329 = vmatpush1.bf16.msra.mxu0 %v1106
    %1330 = vmatprep.subr.bf16.mxu0 %v1111
    %1331 = vmatpush1.bf16.msra.mxu0 %v1110
    %1332 = vmatprep.subr.bf16.mxu0 %v1115
    %1333 = vmatpush1.bf16.msra.mxu0 %v1114
    %1334 = vmatprep.subr.bf16.mxu0 %v1119
    %1335 = vmatpush1.bf16.msra.mxu0 %v1118
    %1336 = vmatprep.subr.bf16.mxu0 %v1123
    %1337 = vmatpush1.bf16.msra.mxu0 %v1122
    %1338 = vmatprep.subr.bf16.mxu0 %v1127
    %1339 = vmatpush1.bf16.msra.mxu0 %v1126
    %1340 = vmatprep.subr.bf16.mxu0 %v1131
    %1341 = vmatpush1.bf16.msra.mxu0 %v1130
    %1342 = vmatprep.subr.bf16.mxu0 %v1135
    %1343 = vmatpush1.bf16.msra.mxu0 %v1134
    %1344 = vmatprep.subr.bf16.mxu0 %v1139
    %1345 = vmatpush1.bf16.msra.mxu0 %v1138
    %1346 = vmatprep.subr.bf16.mxu0 %v1143
    %1347 = vmatpush1.bf16.msra.mxu0 %v1142
    %1348 = vmatprep.subr.bf16.mxu0 %v1147
    %1349 = vmatpush1.bf16.msra.mxu0 %v1146
    %1350 = vmatprep.subr.bf16.mxu0 %v1151
    %1351 = vmatpush1.bf16.msra.mxu0 %v1150
    %1352 = vmatprep.subr.bf16.mxu0 %v1155
    %1353 = vmatpush1.bf16.msra.mxu0 %v1154
    %1354 = vmatprep.subr.bf16.mxu0 %v1159
    %1355 = vmatpush1.bf16.msra.mxu0 %v1158
    %1356 = vmatprep.subr.bf16.mxu0 %v1163
    %1357 = vmatpush1.bf16.msra.mxu0 %v1162
    %1358 = vmatprep.subr.bf16.mxu0 %v1167
    %1359 = vmatpush1.bf16.msra.mxu0 %v1166
    %1360 = vmatprep.mubr.bf16.mxu0 %v1239
    %1361 = vmatmul.mubr.bf16.gmra.mrb[0].mxu0 %v1238
    %v1362 = vpop.f32.mrb[0].mxu0
    %v1363 = vadd.f32 0.0, %v1362
    %v1364 = vpop.f32.mrb[0].mxu0
    %v1365 = vadd.f32 0.0, %v1364
    %v1366 = vpop.f32.mrb[0].mxu0
    %v1367 = vpop.f32.mrb[0].mxu0
    %1368 = vdwg.mxu0
    %1369 = vmatprep.subr.bf16.mxu0 %v1171
    %1370 = vmatpush1.bf16.msra.mxu0 %v1170
    %1371 = vmatprep.subr.bf16.mxu0 %v1175
    %1372 = vmatpush1.bf16.msra.mxu0 %v1174
    %1373 = vmatprep.subr.bf16.mxu0 %v1179
    %1374 = vmatpush1.bf16.msra.mxu0 %v1178
    %1375 = vmatprep.subr.bf16.mxu0 %v1183
    %1376 = vmatpush1.bf16.msra.mxu0 %v1182
    %1377 = vmatprep.subr.bf16.mxu0 %v1187
    %1378 = vmatpush1.bf16.msra.mxu0 %v1186
    %1379 = vmatprep.subr.bf16.mxu0 %v1191
    %1380 = vmatpush1.bf16.msra.mxu0 %v1190
    %1381 = vmatprep.subr.bf16.mxu0 %v1195
    %1382 = vmatpush1.bf16.msra.mxu0 %v1194
    %1383 = vmatprep.subr.bf16.mxu0 %v1199
    %1384 = vmatpush1.bf16.msra.mxu0 %v1198
    %1385 = vmatprep.subr.bf16.mxu0 %v1203
    %1386 = vmatpush1.bf16.msra.mxu0 %v1202
    %1387 = vmatprep.subr.bf16.mxu0 %v1207
    %1388 = vmatpush1.bf16.msra.mxu0 %v1206
    %1389 = vmatprep.subr.bf16.mxu0 %v1211
    %1390 = vmatpush1.bf16.msra.mxu0 %v1210
    %1391 = vmatprep.subr.bf16.mxu0 %v1215
    %1392 = vmatpush1.bf16.msra.mxu0 %v1214
    %1393 = vmatprep.subr.bf16.mxu0 %v1219
    %1394 = vmatpush1.bf16.msra.mxu0 %v1218
    %1395 = vmatprep.subr.bf16.mxu0 %v1223
    %1396 = vmatpush1.bf16.msra.mxu0 %v1222
    %1397 = vmatprep.subr.bf16.mxu0 %v1227
    %1398 = vmatpush1.bf16.msra.mxu0 %v1226
    %1399 = vmatprep.subr.bf16.mxu0 %v1231
    %1400 = vmatpush1.bf16.msra.mxu0 %v1230
    %1401 = vmatprep.mubr.bf16.mxu0 %v1241
    %1402 = vmatmul.mubr.bf16.gmra.mrb[0].mxu0 %v1240
    %v1403 = vpop.f32.mrb[0].mxu0
    %v1404 = vadd.f32 %v1363, %v1403
    %v1405 = vpop.f32.mrb[0].mxu0
    %v1406 = vadd.f32 %v1365, %v1405
    %v1407 = vpop.f32.mrb[0].mxu0
    %v1408 = vpop.f32.mrb[0].mxu0
    %1409 = vdwg.mxu0
    %v1410 = vadd.f32 %v948, %v1322
    %v1411 = vadd.f32 %v950, %v1324
    %v1412 = vadd.f32 %v1030, %v1404
    %v1413 = vadd.f32 %v1032, %v1406
    %s1414 = sshll.u32 %s287, 4
    %1415 = dma.done %s72, %s1414
    %v1416 = vld [vmem:[#allocation11 + $0x30] sm:$0xff]
    %v1417 = vld [vmem:[#allocation11 + $0x38] sm:$0xff]
    %v1418 = vld [vmem:[%s71] sm:$0xff]
    %v1419 = vld [vmem:[%s71 + $0x8] sm:$0xff]
    %v1420 = vld [vmem:[%s71 + $0x10] sm:$0xff]
    %v1421 = vld [vmem:[%s71 + $0x18] sm:$0xff]
    %v1422 = vld [vmem:[%s71 + $0x20] sm:$0xff]
    %v1423 = vld [vmem:[%s71 + $0x28] sm:$0xff]
    %v1424 = vld [vmem:[%s71 + $0x30] sm:$0xff]
    %v1425 = vld [vmem:[%s71 + $0x38] sm:$0xff]
    %v1426 = vld [vmem:[%s71 + $0x40] sm:$0xff]
    %v1427 = vld [vmem:[%s71 + $0x48] sm:$0xff]
    %v1428 = vld [vmem:[%s71 + $0x50] sm:$0xff]
    %v1429 = vld [vmem:[%s71 + $0x58] sm:$0xff]
    %v1430 = vld [vmem:[%s71 + $0x60] sm:$0xff]
    %v1431 = vld [vmem:[%s71 + $0x68] sm:$0xff]
    %v1432 = vld [vmem:[%s71 + $0x70] sm:$0xff]
    %v1433 = vld [vmem:[%s71 + $0x78] sm:$0xff]
    %v1434 = vld [vmem:[%s71 + $0x80] sm:$0xff]
    %v1435 = vld [vmem:[%s71 + $0x88] sm:$0xff]
    %v1436 = vld [vmem:[%s71 + $0x90] sm:$0xff]
    %v1437 = vld [vmem:[%s71 + $0x98] sm:$0xff]
    %v1438 = vld [vmem:[%s71 + $0xa0] sm:$0xff]
    %v1439 = vld [vmem:[%s71 + $0xa8] sm:$0xff]
    %v1440 = vld [vmem:[%s71 + $0xb0] sm:$0xff]
    %v1441 = vld [vmem:[%s71 + $0xb8] sm:$0xff]
    %v1442 = vld [vmem:[%s71 + $0xc0] sm:$0xff]
    %v1443 = vld [vmem:[%s71 + $0xc8] sm:$0xff]
    %v1444 = vld [vmem:[%s71 + $0xd0] sm:$0xff]
    %v1445 = vld [vmem:[%s71 + $0xd8] sm:$0xff]
    %v1446 = vld [vmem:[%s71 + $0xe0] sm:$0xff]
    %v1447 = vld [vmem:[%s71 + $0xe8] sm:$0xff]
    %v1448 = vld [vmem:[%s71 + $0xf0] sm:$0xff]
    %v1449 = vld [vmem:[%s71 + $0xf8] sm:$0xff]
    %v1450 = vld [vmem:[%s71 + $0x100] sm:$0xff]
    %v1451 = vld [vmem:[%s71 + $0x108] sm:$0xff]
    %v1452 = vld [vmem:[%s71 + $0x110] sm:$0xff]
    %v1453 = vld [vmem:[%s71 + $0x118] sm:$0xff]
    %v1454 = vld [vmem:[%s71 + $0x120] sm:$0xff]
    %v1455 = vld [vmem:[%s71 + $0x128] sm:$0xff]
    %v1456 = vld [vmem:[%s71 + $0x130] sm:$0xff]
    %v1457 = vld [vmem:[%s71 + $0x138] sm:$0xff]
    %v1458 = vld [vmem:[%s71 + $0x140] sm:$0xff]
    %v1459 = vld [vmem:[%s71 + $0x148] sm:$0xff]
    %v1460 = vld [vmem:[%s71 + $0x150] sm:$0xff]
    %v1461 = vld [vmem:[%s71 + $0x158] sm:$0xff]
    %v1462 = vld [vmem:[%s71 + $0x160] sm:$0xff]
    %v1463 = vld [vmem:[%s71 + $0x168] sm:$0xff]
    %v1464 = vld [vmem:[%s71 + $0x170] sm:$0xff]
    %v1465 = vld [vmem:[%s71 + $0x178] sm:$0xff]
    %v1466 = vld [vmem:[%s71 + $0x180] sm:$0xff]
    %v1467 = vld [vmem:[%s71 + $0x188] sm:$0xff]
    %v1468 = vld [vmem:[%s71 + $0x190] sm:$0xff]
    %v1469 = vld [vmem:[%s71 + $0x198] sm:$0xff]
    %v1470 = vld [vmem:[%s71 + $0x1a0] sm:$0xff]
    %v1471 = vld [vmem:[%s71 + $0x1a8] sm:$0xff]
    %v1472 = vld [vmem:[%s71 + $0x1b0] sm:$0xff]
    %v1473 = vld [vmem:[%s71 + $0x1b8] sm:$0xff]
    %v1474 = vld [vmem:[%s71 + $0x1c0] sm:$0xff]
    %v1475 = vld [vmem:[%s71 + $0x1c8] sm:$0xff]
    %v1476 = vld [vmem:[%s71 + $0x1d0] sm:$0xff]
    %v1477 = vld [vmem:[%s71 + $0x1d8] sm:$0xff]
    %v1478 = vld [vmem:[%s71 + $0x1e0] sm:$0xff]
    %v1479 = vld [vmem:[%s71 + $0x1e8] sm:$0xff]
    %v1480 = vld [vmem:[%s71 + $0x1f0] sm:$0xff]
    %v1481 = vld [vmem:[%s71 + $0x1f8] sm:$0xff]
    %v1482 = vunpack.c.l.s8.bf16 %v1418
    %v1483 = vunpack.c.l.s8.bf16 %v1419
    %v1484 = vunpack.c.l.s8.bf16 %v1420
    %v1485 = vunpack.c.l.s8.bf16 %v1421
    %v1486 = vunpack.c.h.s8.bf16 %v1418
    %v1487 = vunpack.c.h.s8.bf16 %v1419
    %v1488 = vunpack.c.h.s8.bf16 %v1420
    %v1489 = vunpack.c.h.s8.bf16 %v1421
    %v1490 = vunpack.c.l.s8.bf16 %v1422
    %v1491 = vunpack.c.l.s8.bf16 %v1423
    %v1492 = vunpack.c.l.s8.bf16 %v1424
    %v1493 = vunpack.c.l.s8.bf16 %v1425
    %v1494 = vunpack.c.h.s8.bf16 %v1422
    %v1495 = vunpack.c.h.s8.bf16 %v1423
    %v1496 = vunpack.c.h.s8.bf16 %v1424
    %v1497 = vunpack.c.h.s8.bf16 %v1425
    %v1498 = vunpack.c.l.s8.bf16 %v1426
    %v1499 = vunpack.c.l.s8.bf16 %v1427
    %v1500 = vunpack.c.l.s8.bf16 %v1428
    %v1501 = vunpack.c.l.s8.bf16 %v1429
    %v1502 = vunpack.c.h.s8.bf16 %v1426
    %v1503 = vunpack.c.h.s8.bf16 %v1427
    %v1504 = vunpack.c.h.s8.bf16 %v1428
    %v1505 = vunpack.c.h.s8.bf16 %v1429
    %v1506 = vunpack.c.l.s8.bf16 %v1430
    %v1507 = vunpack.c.l.s8.bf16 %v1431
    %v1508 = vunpack.c.l.s8.bf16 %v1432
    %v1509 = vunpack.c.l.s8.bf16 %v1433
    %v1510 = vunpack.c.h.s8.bf16 %v1430
    %v1511 = vunpack.c.h.s8.bf16 %v1431
    %v1512 = vunpack.c.h.s8.bf16 %v1432
    %v1513 = vunpack.c.h.s8.bf16 %v1433
    %v1514 = vunpack.c.l.s8.bf16 %v1434
    %v1515 = vunpack.c.l.s8.bf16 %v1435
    %v1516 = vunpack.c.l.s8.bf16 %v1436
    %v1517 = vunpack.c.l.s8.bf16 %v1437
    %v1518 = vunpack.c.h.s8.bf16 %v1434
    %v1519 = vunpack.c.h.s8.bf16 %v1435
    %v1520 = vunpack.c.h.s8.bf16 %v1436
    %v1521 = vunpack.c.h.s8.bf16 %v1437
    %v1522 = vunpack.c.l.s8.bf16 %v1438
    %v1523 = vunpack.c.l.s8.bf16 %v1439
    %v1524 = vunpack.c.l.s8.bf16 %v1440
    %v1525 = vunpack.c.l.s8.bf16 %v1441
    %v1526 = vunpack.c.h.s8.bf16 %v1438
    %v1527 = vunpack.c.h.s8.bf16 %v1439
    %v1528 = vunpack.c.h.s8.bf16 %v1440
    %v1529 = vunpack.c.h.s8.bf16 %v1441
    %v1530 = vunpack.c.l.s8.bf16 %v1442
    %v1531 = vunpack.c.l.s8.bf16 %v1443
    %v1532 = vunpack.c.l.s8.bf16 %v1444
    %v1533 = vunpack.c.l.s8.bf16 %v1445
    %v1534 = vunpack.c.h.s8.bf16 %v1442
    %v1535 = vunpack.c.h.s8.bf16 %v1443
    %v1536 = vunpack.c.h.s8.bf16 %v1444
    %v1537 = vunpack.c.h.s8.bf16 %v1445
    %v1538 = vunpack.c.l.s8.bf16 %v1446
    %v1539 = vunpack.c.l.s8.bf16 %v1447
    %v1540 = vunpack.c.l.s8.bf16 %v1448
    %v1541 = vunpack.c.l.s8.bf16 %v1449
    %v1542 = vunpack.c.h.s8.bf16 %v1446
    %v1543 = vunpack.c.h.s8.bf16 %v1447
    %v1544 = vunpack.c.h.s8.bf16 %v1448
    %v1545 = vunpack.c.h.s8.bf16 %v1449
    %v1546 = vunpack.c.l.s8.bf16 %v1450
    %v1547 = vunpack.c.l.s8.bf16 %v1451
    %v1548 = vunpack.c.l.s8.bf16 %v1452
    %v1549 = vunpack.c.l.s8.bf16 %v1453
    %v1550 = vunpack.c.h.s8.bf16 %v1450
    %v1551 = vunpack.c.h.s8.bf16 %v1451
    %v1552 = vunpack.c.h.s8.bf16 %v1452
    %v1553 = vunpack.c.h.s8.bf16 %v1453
    %v1554 = vunpack.c.l.s8.bf16 %v1454
    %v1555 = vunpack.c.l.s8.bf16 %v1455
    %v1556 = vunpack.c.l.s8.bf16 %v1456
    %v1557 = vunpack.c.l.s8.bf16 %v1457
    %v1558 = vunpack.c.h.s8.bf16 %v1454
    %v1559 = vunpack.c.h.s8.bf16 %v1455
    %v1560 = vunpack.c.h.s8.bf16 %v1456
    %v1561 = vunpack.c.h.s8.bf16 %v1457
    %v1562 = vunpack.c.l.s8.bf16 %v1458
    %v1563 = vunpack.c.l.s8.bf16 %v1459
    %v1564 = vunpack.c.l.s8.bf16 %v1460
    %v1565 = vunpack.c.l.s8.bf16 %v1461
    %v1566 = vunpack.c.h.s8.bf16 %v1458
    %v1567 = vunpack.c.h.s8.bf16 %v1459
    %v1568 = vunpack.c.h.s8.bf16 %v1460
    %v1569 = vunpack.c.h.s8.bf16 %v1461
    %v1570 = vunpack.c.l.s8.bf16 %v1462
    %v1571 = vunpack.c.l.s8.bf16 %v1463
    %v1572 = vunpack.c.l.s8.bf16 %v1464
    %v1573 = vunpack.c.l.s8.bf16 %v1465
    %v1574 = vunpack.c.h.s8.bf16 %v1462
    %v1575 = vunpack.c.h.s8.bf16 %v1463
    %v1576 = vunpack.c.h.s8.bf16 %v1464
    %v1577 = vunpack.c.h.s8.bf16 %v1465
    %v1578 = vunpack.c.l.s8.bf16 %v1466
    %v1579 = vunpack.c.l.s8.bf16 %v1467
    %v1580 = vunpack.c.l.s8.bf16 %v1468
    %v1581 = vunpack.c.l.s8.bf16 %v1469
    %v1582 = vunpack.c.h.s8.bf16 %v1466
    %v1583 = vunpack.c.h.s8.bf16 %v1467
    %v1584 = vunpack.c.h.s8.bf16 %v1468
    %v1585 = vunpack.c.h.s8.bf16 %v1469
    %v1586 = vunpack.c.l.s8.bf16 %v1470
    %v1587 = vunpack.c.l.s8.bf16 %v1471
    %v1588 = vunpack.c.l.s8.bf16 %v1472
    %v1589 = vunpack.c.l.s8.bf16 %v1473
    %v1590 = vunpack.c.h.s8.bf16 %v1470
    %v1591 = vunpack.c.h.s8.bf16 %v1471
    %v1592 = vunpack.c.h.s8.bf16 %v1472
    %v1593 = vunpack.c.h.s8.bf16 %v1473
    %v1594 = vunpack.c.l.s8.bf16 %v1474
    %v1595 = vunpack.c.l.s8.bf16 %v1475
    %v1596 = vunpack.c.l.s8.bf16 %v1476
    %v1597 = vunpack.c.l.s8.bf16 %v1477
    %v1598 = vunpack.c.h.s8.bf16 %v1474
    %v1599 = vunpack.c.h.s8.bf16 %v1475
    %v1600 = vunpack.c.h.s8.bf16 %v1476
    %v1601 = vunpack.c.h.s8.bf16 %v1477
    %v1602 = vunpack.c.l.s8.bf16 %v1478
    %v1603 = vunpack.c.l.s8.bf16 %v1479
    %v1604 = vunpack.c.l.s8.bf16 %v1480
    %v1605 = vunpack.c.l.s8.bf16 %v1481
    %v1606 = vunpack.c.h.s8.bf16 %v1478
    %v1607 = vunpack.c.h.s8.bf16 %v1479
    %v1608 = vunpack.c.h.s8.bf16 %v1480
    %v1609 = vunpack.c.h.s8.bf16 %v1481
    %v1612 = vunpack.c.l.b16 %v1416
    %v1613 = vunpack.c.h.b16 %v1416
    %v1614 = vunpack.c.l.b16 %v1417
    %v1615 = vunpack.c.h.b16 %v1417
    %v1616 = vpack.c.b16 %v1612, %v1612
    %v1617 = vpack.c.b16 %v1613, %v1613
    %v1618 = vpack.c.b16 %v1614, %v1614
    %v1619 = vpack.c.b16 %v1615, %v1615
    %1624 = vmatprep.subr.bf16.mxu0 %v1483
    %1625 = vmatpush1.bf16.msra.mxu0 %v1482
    %1626 = vmatprep.subr.bf16.mxu0 %v1487
    %1627 = vmatpush1.bf16.msra.mxu0 %v1486
    %1628 = vmatprep.subr.bf16.mxu0 %v1491
    %1629 = vmatpush1.bf16.msra.mxu0 %v1490
    %1630 = vmatprep.subr.bf16.mxu0 %v1495
    %1631 = vmatpush1.bf16.msra.mxu0 %v1494
    %1632 = vmatprep.subr.bf16.mxu0 %v1499
    %1633 = vmatpush1.bf16.msra.mxu0 %v1498
    %1634 = vmatprep.subr.bf16.mxu0 %v1503
    %1635 = vmatpush1.bf16.msra.mxu0 %v1502
    %1636 = vmatprep.subr.bf16.mxu0 %v1507
    %1637 = vmatpush1.bf16.msra.mxu0 %v1506
    %1638 = vmatprep.subr.bf16.mxu0 %v1511
    %1639 = vmatpush1.bf16.msra.mxu0 %v1510
    %1640 = vmatprep.subr.bf16.mxu0 %v1515
    %1641 = vmatpush1.bf16.msra.mxu0 %v1514
    %1642 = vmatprep.subr.bf16.mxu0 %v1519
    %1643 = vmatpush1.bf16.msra.mxu0 %v1518
    %1644 = vmatprep.subr.bf16.mxu0 %v1523
    %1645 = vmatpush1.bf16.msra.mxu0 %v1522
    %1646 = vmatprep.subr.bf16.mxu0 %v1527
    %1647 = vmatpush1.bf16.msra.mxu0 %v1526
    %1648 = vmatprep.subr.bf16.mxu0 %v1531
    %1649 = vmatpush1.bf16.msra.mxu0 %v1530
    %1650 = vmatprep.subr.bf16.mxu0 %v1535
    %1651 = vmatpush1.bf16.msra.mxu0 %v1534
    %1652 = vmatprep.subr.bf16.mxu0 %v1539
    %1653 = vmatpush1.bf16.msra.mxu0 %v1538
    %1654 = vmatprep.subr.bf16.mxu0 %v1543
    %1655 = vmatpush1.bf16.msra.mxu0 %v1542
    %1656 = vmatprep.mubr.bf16.mxu0 %v1617
    %1657 = vmatmul.mubr.bf16.gmra.mrb[0].mxu0 %v1616
    %v1658 = vpop.f32.mrb[0].mxu0
    %v1659 = vadd.f32 0.0, %v1658
    %v1660 = vpop.f32.mrb[0].mxu0
    %v1661 = vadd.f32 0.0, %v1660
    %v1662 = vpop.f32.mrb[0].mxu0
    %v1663 = vpop.f32.mrb[0].mxu0
    %1664 = vdwg.mxu0
    %1665 = vmatprep.subr.bf16.mxu0 %v1547
    %1666 = vmatpush1.bf16.msra.mxu0 %v1546
    %1667 = vmatprep.subr.bf16.mxu0 %v1551
    %1668 = vmatpush1.bf16.msra.mxu0 %v1550
    %1669 = vmatprep.subr.bf16.mxu0 %v1555
    %1670 = vmatpush1.bf16.msra.mxu0 %v1554
    %1671 = vmatprep.subr.bf16.mxu0 %v1559
    %1672 = vmatpush1.bf16.msra.mxu0 %v1558
    %1673 = vmatprep.subr.bf16.mxu0 %v1563
    %1674 = vmatpush1.bf16.msra.mxu0 %v1562
    %1675 = vmatprep.subr.bf16.mxu0 %v1567
    %1676 = vmatpush1.bf16.msra.mxu0 %v1566
    %1677 = vmatprep.subr.bf16.mxu0 %v1571
    %1678 = vmatpush1.bf16.msra.mxu0 %v1570
    %1679 = vmatprep.subr.bf16.mxu0 %v1575
    %1680 = vmatpush1.bf16.msra.mxu0 %v1574
    %1681 = vmatprep.subr.bf16.mxu0 %v1579
    %1682 = vmatpush1.bf16.msra.mxu0 %v1578
    %1683 = vmatprep.subr.bf16.mxu0 %v1583
    %1684 = vmatpush1.bf16.msra.mxu0 %v1582
    %1685 = vmatprep.subr.bf16.mxu0 %v1587
    %1686 = vmatpush1.bf16.msra.mxu0 %v1586
    %1687 = vmatprep.subr.bf16.mxu0 %v1591
    %1688 = vmatpush1.bf16.msra.mxu0 %v1590
    %1689 = vmatprep.subr.bf16.mxu0 %v1595
    %1690 = vmatpush1.bf16.msra.mxu0 %v1594
    %1691 = vmatprep.subr.bf16.mxu0 %v1599
    %1692 = vmatpush1.bf16.msra.mxu0 %v1598
    %1693 = vmatprep.subr.bf16.mxu0 %v1603
    %1694 = vmatpush1.bf16.msra.mxu0 %v1602
    %1695 = vmatprep.subr.bf16.mxu0 %v1607
    %1696 = vmatpush1.bf16.msra.mxu0 %v1606
    %1697 = vmatprep.mubr.bf16.mxu0 %v1619
    %1698 = vmatmul.mubr.bf16.gmra.mrb[0].mxu0 %v1618
    %v1699 = vpop.f32.mrb[0].mxu0
    %v1700 = vadd.f32 %v1659, %v1699
    %v1701 = vpop.f32.mrb[0].mxu0
    %v1702 = vadd.f32 %v1661, %v1701
    %v1703 = vpop.f32.mrb[0].mxu0
    %v1704 = vpop.f32.mrb[0].mxu0
    %1705 = vdwg.mxu0
    %1706 = vmatprep.subr.bf16.mxu0 %v1485
    %1707 = vmatpush1.bf16.msra.mxu0 %v1484
    %1708 = vmatprep.subr.bf16.mxu0 %v1489
    %1709 = vmatpush1.bf16.msra.mxu0 %v1488
    %1710 = vmatprep.subr.bf16.mxu0 %v1493
    %1711 = vmatpush1.bf16.msra.mxu0 %v1492
    %1712 = vmatprep.subr.bf16.mxu0 %v1497
    %1713 = vmatpush1.bf16.msra.mxu0 %v1496
    %1714 = vmatprep.subr.bf16.mxu0 %v1501
    %1715 = vmatpush1.bf16.msra.mxu0 %v1500
    %1716 = vmatprep.subr.bf16.mxu0 %v1505
    %1717 = vmatpush1.bf16.msra.mxu0 %v1504
    %1718 = vmatprep.subr.bf16.mxu0 %v1509
    %1719 = vmatpush1.bf16.msra.mxu0 %v1508
    %1720 = vmatprep.subr.bf16.mxu0 %v1513
    %1721 = vmatpush1.bf16.msra.mxu0 %v1512
    %1722 = vmatprep.subr.bf16.mxu0 %v1517
    %1723 = vmatpush1.bf16.msra.mxu0 %v1516
    %1724 = vmatprep.subr.bf16.mxu0 %v1521
    %1725 = vmatpush1.bf16.msra.mxu0 %v1520
    %1726 = vmatprep.subr.bf16.mxu0 %v1525
    %1727 = vmatpush1.bf16.msra.mxu0 %v1524
    %1728 = vmatprep.subr.bf16.mxu0 %v1529
    %1729 = vmatpush1.bf16.msra.mxu0 %v1528
    %1730 = vmatprep.subr.bf16.mxu0 %v1533
    %1731 = vmatpush1.bf16.msra.mxu0 %v1532
    %1732 = vmatprep.subr.bf16.mxu0 %v1537
    %1733 = vmatpush1.bf16.msra.mxu0 %v1536
    %1734 = vmatprep.subr.bf16.mxu0 %v1541
    %1735 = vmatpush1.bf16.msra.mxu0 %v1540
    %1736 = vmatprep.subr.bf16.mxu0 %v1545
    %1737 = vmatpush1.bf16.msra.mxu0 %v1544
    %1738 = vmatprep.mubr.bf16.mxu0 %v1617
    %1739 = vmatmul.mubr.bf16.gmra.mrb[0].mxu0 %v1616
    %v1740 = vpop.f32.mrb[0].mxu0
    %v1741 = vadd.f32 0.0, %v1740
    %v1742 = vpop.f32.mrb[0].mxu0
    %v1743 = vadd.f32 0.0, %v1742
    %v1744 = vpop.f32.mrb[0].mxu0
    %v1745 = vpop.f32.mrb[0].mxu0
    %1746 = vdwg.mxu0
    %1747 = vmatprep.subr.bf16.mxu0 %v1549
    %1748 = vmatpush1.bf16.msra.mxu0 %v1548
    %1749 = vmatprep.subr.bf16.mxu0 %v1553
    %1750 = vmatpush1.bf16.msra.mxu0 %v1552
    %1751 = vmatprep.subr.bf16.mxu0 %v1557
    %1752 = vmatpush1.bf16.msra.mxu0 %v1556
    %1753 = vmatprep.subr.bf16.mxu0 %v1561
    %1754 = vmatpush1.bf16.msra.mxu0 %v1560
    %1755 = vmatprep.subr.bf16.mxu0 %v1565
    %1756 = vmatpush1.bf16.msra.mxu0 %v1564
    %1757 = vmatprep.subr.bf16.mxu0 %v1569
    %1758 = vmatpush1.bf16.msra.mxu0 %v1568
    %1759 = vmatprep.subr.bf16.mxu0 %v1573
    %1760 = vmatpush1.bf16.msra.mxu0 %v1572
    %1761 = vmatprep.subr.bf16.mxu0 %v1577
    %1762 = vmatpush1.bf16.msra.mxu0 %v1576
    %1763 = vmatprep.subr.bf16.mxu0 %v1581
    %1764 = vmatpush1.bf16.msra.mxu0 %v1580
    %1765 = vmatprep.subr.bf16.mxu0 %v1585
    %1766 = vmatpush1.bf16.msra.mxu0 %v1584
    %1767 = vmatprep.subr.bf16.mxu0 %v1589
    %1768 = vmatpush1.bf16.msra.mxu0 %v1588
    %1769 = vmatprep.subr.bf16.mxu0 %v1593
    %1770 = vmatpush1.bf16.msra.mxu0 %v1592
    %1771 = vmatprep.subr.bf16.mxu0 %v1597
    %1772 = vmatpush1.bf16.msra.mxu0 %v1596
    %1773 = vmatprep.subr.bf16.mxu0 %v1601
    %1774 = vmatpush1.bf16.msra.mxu0 %v1600
    %1775 = vmatprep.subr.bf16.mxu0 %v1605
    %1776 = vmatpush1.bf16.msra.mxu0 %v1604
    %1777 = vmatprep.subr.bf16.mxu0 %v1609
    %1778 = vmatpush1.bf16.msra.mxu0 %v1608
    %1779 = vmatprep.mubr.bf16.mxu0 %v1619
    %1780 = vmatmul.mubr.bf16.gmra.mrb[0].mxu0 %v1618
    %v1781 = vpop.f32.mrb[0].mxu0
    %v1782 = vadd.f32 %v1741, %v1781
    %v1783 = vpop.f32.mrb[0].mxu0
    %v1784 = vadd.f32 %v1743, %v1783
    %v1785 = vpop.f32.mrb[0].mxu0
    %v1786 = vpop.f32.mrb[0].mxu0
    %1787 = vdwg.mxu0
    %v1788 = vadd.f32 %v1410, %v1700
    %v1789 = vadd.f32 %v1411, %v1702
    %v1790 = vadd.f32 %v1412, %v1782
    %v1791 = vadd.f32 %v1413, %v1784
    %v1792 = vld [vmem:[%s1 + $0x2f] sm:$0xf]
    %v1794 = vlaneseq
    %v1795 = vshrl.u32 %v1794, 7
    %v1796 = vsub.s32 0, %v1795
    %v1797 = vrot.slane %v1792, %v1796
    %v1798 = vlaneseq
    %v1799 = vshrl.u32 %v1798, 7
    %v1800 = vsub.s32 1, %v1799
    %v1801 = vrot.slane %v1792, %v1800
    %v1802 = vlaneseq
    %v1803 = vshrl.u32 %v1802, 7
    %v1804 = vsub.s32 2, %v1803
    %v1805 = vrot.slane %v1792, %v1804
    %v1806 = vlaneseq
    %v1807 = vshrl.u32 %v1806, 7
    %v1808 = vsub.s32 3, %v1807
    %v1809 = vrot.slane %v1792, %v1808
    %v1814 = vmul.f32 %v1788, %v1797
    %v1815 = vmul.f32 %v1789, %v1801
    %v1816 = vmul.f32 %v1790, %v1805
    %v1817 = vmul.f32 %v1791, %v1809
    %v1818 = vld [vmem:[%s1] sm:$0xf]
    %v1820 = vlaneseq
    %v1821 = vshrl.u32 %v1820, 7
    %v1822 = vsub.s32 0, %v1821
    %v1823 = vrot.slane %v1818, %v1822
    %v1824 = vlaneseq
    %v1825 = vshrl.u32 %v1824, 7
    %v1826 = vsub.s32 1, %v1825
    %v1827 = vrot.slane %v1818, %v1826
    %v1828 = vlaneseq
    %v1829 = vshrl.u32 %v1828, 7
    %v1830 = vsub.s32 2, %v1829
    %v1831 = vrot.slane %v1818, %v1830
    %v1832 = vlaneseq
    %v1833 = vshrl.u32 %v1832, 7
    %v1834 = vsub.s32 3, %v1833
    %v1835 = vrot.slane %v1818, %v1834
    %v1840 = vadd.f32 %v1814, %v1823
    %v1841 = vadd.f32 %v1815, %v1827
    %v1842 = vadd.f32 %v1816, %v1831
    %v1843 = vadd.f32 %v1817, %v1835
    %v1844 = vld [vmem:[%s1 + $0x4] sm:$0xf]
    %v1845 = vld [vmem:[%s1 + $0x8] sm:$0xf]
    %v1846 = vrot.slane %v1840, 4
    %v1847 = vadd.f32 %v1840, %v1846
    %v1848 = vrot.slane %v1847, 2
    %v1849 = vadd.f32 %v1847, %v1848
    %v1850 = vrot.slane %v1849, 1
    %v1851 = vadd.f32 %v1849, %v1850
    %v1852 = vrot.slane %v1841, 4
    %v1853 = vadd.f32 %v1841, %v1852
    %v1854 = vrot.slane %v1853, 2
    %v1855 = vadd.f32 %v1853, %v1854
    %v1856 = vrot.slane %v1855, 1
    %v1857 = vadd.f32 %v1855, %v1856
    %v1858 = vrot.slane %v1842, 4
    %v1859 = vadd.f32 %v1842, %v1858
    %v1860 = vrot.slane %v1859, 2
    %v1861 = vadd.f32 %v1859, %v1860
    %v1862 = vrot.slane %v1861, 1
    %v1863 = vadd.f32 %v1861, %v1862
    %v1864 = vrot.slane %v1843, 4
    %v1865 = vadd.f32 %v1843, %v1864
    %v1866 = vrot.slane %v1865, 2
    %v1867 = vadd.f32 %v1865, %v1866
    %v1868 = vrot.slane %v1867, 1
    %v1869 = vadd.f32 %v1867, %v1868
    %v1870 = vrcp.pop 8.0
    %v1871 = vmul.f32 %v1851, %v1870
    %v1872 = vmul.f32 %v1857, %v1870
    %v1873 = vmul.f32 %v1863, %v1870
    %v1874 = vmul.f32 %v1869, %v1870
    %v1875 = vsub.f32 %v1840, %v1871
    %v1876 = vsub.f32 %v1841, %v1872
    %v1877 = vsub.f32 %v1842, %v1873
    %v1878 = vsub.f32 %v1843, %v1874
    %v1879 = vmul.f32 %v1875, %v1875
    %v1880 = vmul.f32 %v1876, %v1876
    %v1881 = vmul.f32 %v1877, %v1877
    %v1882 = vmul.f32 %v1878, %v1878
    %v1883 = vrot.slane %v1879, 4
    %v1884 = vadd.f32 %v1879, %v1883
    %v1885 = vrot.slane %v1884, 2
    %v1886 = vadd.f32 %v1884, %v1885
    %v1887 = vrot.slane %v1886, 1
    %v1888 = vadd.f32 %v1886, %v1887
    %v1889 = vrot.slane %v1880, 4
    %v1890 = vadd.f32 %v1880, %v1889
    %v1891 = vrot.slane %v1890, 2
    %v1892 = vadd.f32 %v1890, %v1891
    %v1893 = vrot.slane %v1892, 1
    %v1894 = vadd.f32 %v1892, %v1893
    %v1895 = vrot.slane %v1881, 4
    %v1896 = vadd.f32 %v1881, %v1895
    %v1897 = vrot.slane %v1896, 2
    %v1898 = vadd.f32 %v1896, %v1897
    %v1899 = vrot.slane %v1898, 1
    %v1900 = vadd.f32 %v1898, %v1899
    %v1901 = vrot.slane %v1882, 4
    %v1902 = vadd.f32 %v1882, %v1901
    %v1903 = vrot.slane %v1902, 2
    %v1904 = vadd.f32 %v1902, %v1903
    %v1905 = vrot.slane %v1904, 1
    %v1906 = vadd.f32 %v1904, %v1905
    %v1907 = vmul.f32 %v1888, %v1870
    %v1908 = vmul.f32 %v1894, %v1870
    %v1909 = vmul.f32 %v1900, %v1870
    %v1910 = vmul.f32 %v1906, %v1870
    %v1911 = vadd.f32 %v1907, 1e-05
    %v1912 = vadd.f32 %v1908, 1e-05
    %v1913 = vadd.f32 %v1909, 1e-05
    %v1914 = vadd.f32 %v1910, 1e-05
    %v1915 = vrsqrt.pop %v1911
    %v1916 = vrsqrt.pop %v1912
    %v1917 = vrsqrt.pop %v1913
    %v1918 = vrsqrt.pop %v1914
    %v1919 = vmul.f32 %v1875, %v1915
    %v1920 = vmul.f32 %v1876, %v1916
    %v1921 = vmul.f32 %v1877, %v1917
    %v1922 = vmul.f32 %v1878, %v1918
    %v1924 = vlaneseq
    %v1925 = vshrl.u32 %v1924, 7
    %v1926 = vsub.s32 0, %v1925
    %v1927 = vrot.slane %v1844, %v1926
    %v1928 = vlaneseq
    %v1929 = vshrl.u32 %v1928, 7
    %v1930 = vsub.s32 1, %v1929
    %v1931 = vrot.slane %v1844, %v1930
    %v1932 = vlaneseq
    %v1933 = vshrl.u32 %v1932, 7
    %v1934 = vsub.s32 2, %v1933
    %v1935 = vrot.slane %v1844, %v1934
    %v1936 = vlaneseq
    %v1937 = vshrl.u32 %v1936, 7
    %v1938 = vsub.s32 3, %v1937
    %v1939 = vrot.slane %v1844, %v1938
    %v1944 = vmul.f32 %v1919, %v1927
    %v1945 = vmul.f32 %v1920, %v1931
    %v1946 = vmul.f32 %v1921, %v1935
    %v1947 = vmul.f32 %v1922, %v1939
    %v1949 = vlaneseq
    %v1950 = vshrl.u32 %v1949, 7
    %v1951 = vsub.s32 0, %v1950
    %v1952 = vrot.slane %v1845, %v1951
    %v1953 = vlaneseq
    %v1954 = vshrl.u32 %v1953, 7
    %v1955 = vsub.s32 1, %v1954
    %v1956 = vrot.slane %v1845, %v1955
    %v1957 = vlaneseq
    %v1958 = vshrl.u32 %v1957, 7
    %v1959 = vsub.s32 2, %v1958
    %v1960 = vrot.slane %v1845, %v1959
    %v1961 = vlaneseq
    %v1962 = vshrl.u32 %v1961, 7
    %v1963 = vsub.s32 3, %v1962
    %v1964 = vrot.slane %v1845, %v1963
    %v1969 = vadd.f32 %v1944, %v1952
    %v1970 = vadd.f32 %v1945, %v1956
    %v1971 = vadd.f32 %v1946, %v1960
    %v1972 = vadd.f32 %v1947, %v1964
    %v1973 = vmax.f32 %v1969, 0.0
    %v1974 = vmax.f32 %v1970, 0.0
    %v1975 = vmax.f32 %v1971, 0.0
    %v1976 = vmax.f32 %v1972, 0.0
    %v1977 = vld [vmem:[%s1 + $0xc] sm:$0x1]
    %s1978 = smul.u32 4, 64
    %s1979 = smul.u32 %s1978, 1
    %s1980 = sshll.u32 %s1979, 4
    %1981 = dma.done [#allocation9], %s1980
    %v1982 = vpack.c.bf16 %v1973, %v1973
    %v1983 = vpack.c.bf16 %v1974, %v1974
    %v1984 = vpack.c.bf16 %v1975, %v1975
    %v1985 = vpack.c.bf16 %v1976, %v1976
    %v1986 = vld [vmem:[#allocation3] sm:$0xff]
    %v1987 = vld [vmem:[#allocation3 + $0x8] sm:$0xff]
    %v1988 = vld [vmem:[#allocation3 + $0x10] sm:$0xff]
    %v1989 = vld [vmem:[#allocation3 + $0x18] sm:$0xff]
    %v1990 = vld [vmem:[#allocation3 + $0x20] sm:$0xff]
    %v1991 = vld [vmem:[#allocation3 + $0x28] sm:$0xff]
    %v1992 = vld [vmem:[#allocation3 + $0x30] sm:$0xff]
    %v1993 = vld [vmem:[#allocation3 + $0x38] sm:$0xff]
    %v1994 = vld [vmem:[#allocation3 + $0x40] sm:$0xff]
    %v1995 = vld [vmem:[#allocation3 + $0x48] sm:$0xff]
    %v1996 = vld [vmem:[#allocation3 + $0x50] sm:$0xff]
    %v1997 = vld [vmem:[#allocation3 + $0x58] sm:$0xff]
    %v1998 = vld [vmem:[#allocation3 + $0x60] sm:$0xff]
    %v1999 = vld [vmem:[#allocation3 + $0x68] sm:$0xff]
    %v2000 = vld [vmem:[#allocation3 + $0x70] sm:$0xff]
    %v2001 = vld [vmem:[#allocation3 + $0x78] sm:$0xff]
    %v2002 = vld [vmem:[#allocation3 + $0x80] sm:$0xff]
    %v2003 = vld [vmem:[#allocation3 + $0x88] sm:$0xff]
    %v2004 = vld [vmem:[#allocation3 + $0x90] sm:$0xff]
    %v2005 = vld [vmem:[#allocation3 + $0x98] sm:$0xff]
    %v2006 = vld [vmem:[#allocation3 + $0xa0] sm:$0xff]
    %v2007 = vld [vmem:[#allocation3 + $0xa8] sm:$0xff]
    %v2008 = vld [vmem:[#allocation3 + $0xb0] sm:$0xff]
    %v2009 = vld [vmem:[#allocation3 + $0xb8] sm:$0xff]
    %v2010 = vld [vmem:[#allocation3 + $0xc0] sm:$0xff]
    %v2011 = vld [vmem:[#allocation3 + $0xc8] sm:$0xff]
    %v2012 = vld [vmem:[#allocation3 + $0xd0] sm:$0xff]
    %v2013 = vld [vmem:[#allocation3 + $0xd8] sm:$0xff]
    %v2014 = vld [vmem:[#allocation3 + $0xe0] sm:$0xff]
    %v2015 = vld [vmem:[#allocation3 + $0xe8] sm:$0xff]
    %v2016 = vld [vmem:[#allocation3 + $0xf0] sm:$0xff]
    %v2017 = vld [vmem:[#allocation3 + $0xf8] sm:$0xff]
    %v2019 = vlaneseq
    %v2020 = vshrl.u32 %v2019, 7
    %v2021 = vsub.s32 0, %v2020
    %v2022 = vrot.slane %v1977, %v2021
    %2024 = vmatprep.subr.bf16.mxu0 0
    %2025 = vmatpush1.bf16.msra.mxu0 %v1986
    %2026 = vmatprep.subr.bf16.mxu0 0
    %2027 = vmatpush1.bf16.msra.mxu0 %v1987
    %2028 = vmatprep.subr.bf16.mxu0 0
    %2029 = vmatpush1.bf16.msra.mxu0 %v1988
    %2030 = vmatprep.subr.bf16.mxu0 0
    %2031 = vmatpush1.bf16.msra.mxu0 %v1989
    %2032 = vmatprep.subr.bf16.mxu0 0
    %2033 = vmatpush1.bf16.msra.mxu0 %v1990
    %2034 = vmatprep.subr.bf16.mxu0 0
    %2035 = vmatpush1.bf16.msra.mxu0 %v1991
    %2036 = vmatprep.subr.bf16.mxu0 0
    %2037 = vmatpush1.bf16.msra.mxu0 %v1992
    %2038 = vmatprep.subr.bf16.mxu0 0
    %2039 = vmatpush1.bf16.msra.mxu0 %v1993
    %2040 = vmatprep.subr.bf16.mxu0 0
    %2041 = vmatpush1.bf16.msra.mxu0 %v1994
    %2042 = vmatprep.subr.bf16.mxu0 0
    %2043 = vmatpush1.bf16.msra.mxu0 %v1995
    %2044 = vmatprep.subr.bf16.mxu0 0
    %2045 = vmatpush1.bf16.msra.mxu0 %v1996
    %2046 = vmatprep.subr.bf16.mxu0 0
    %2047 = vmatpush1.bf16.msra.mxu0 %v1997
    %2048 = vmatprep.subr.bf16.mxu0 0
    %2049 = vmatpush1.bf16.msra.mxu0 %v1998
    %2050 = vmatprep.subr.bf16.mxu0 0
    %2051 = vmatpush1.bf16.msra.mxu0 %v1999
    %2052 = vmatprep.subr.bf16.mxu0 0
    %2053 = vmatpush1.bf16.msra.mxu0 %v2000
    %2054 = vmatprep.subr.bf16.mxu0 0
    %2055 = vmatpush1.bf16.msra.mxu0 %v2001
    %2056 = vmatprep.mubr.bf16.mxu0 %v1983
    %2057 = vmatmul.mubr.bf16.gmra.mrb[0].mxu0 %v1982
    %v2058 = vpop.f32.mrb[0].mxu0
    %v2059 = vadd.f32 %v2022, %v2058
    %v2060 = vpop.f32.mrb[0].mxu0
    %v2061 = vpop.f32.mrb[0].mxu0
    %v2062 = vpop.f32.mrb[0].mxu0
    %2063 = vdwg.mxu0
    %2064 = vmatprep.subr.bf16.mxu0 0
    %2065 = vmatpush1.bf16.msra.mxu0 %v2002
    %2066 = vmatprep.subr.bf16.mxu0 0
    %2067 = vmatpush1.bf16.msra.mxu0 %v2003
    %2068 = vmatprep.subr.bf16.mxu0 0
    %2069 = vmatpush1.bf16.msra.mxu0 %v2004
    %2070 = vmatprep.subr.bf16.mxu0 0
    %2071 = vmatpush1.bf16.msra.mxu0 %v2005
    %2072 = vmatprep.subr.bf16.mxu0 0
    %2073 = vmatpush1.bf16.msra.mxu0 %v2006
    %2074 = vmatprep.subr.bf16.mxu0 0
    %2075 = vmatpush1.bf16.msra.mxu0 %v2007
    %2076 = vmatprep.subr.bf16.mxu0 0
    %2077 = vmatpush1.bf16.msra.mxu0 %v2008
    %2078 = vmatprep.subr.bf16.mxu0 0
    %2079 = vmatpush1.bf16.msra.mxu0 %v2009
    %2080 = vmatprep.subr.bf16.mxu0 0
    %2081 = vmatpush1.bf16.msra.mxu0 %v2010
    %2082 = vmatprep.subr.bf16.mxu0 0
    %2083 = vmatpush1.bf16.msra.mxu0 %v2011
    %2084 = vmatprep.subr.bf16.mxu0 0
    %2085 = vmatpush1.bf16.msra.mxu0 %v2012
    %2086 = vmatprep.subr.bf16.mxu0 0
    %2087 = vmatpush1.bf16.msra.mxu0 %v2013
    %2088 = vmatprep.subr.bf16.mxu0 0
    %2089 = vmatpush1.bf16.msra.mxu0 %v2014
    %2090 = vmatprep.subr.bf16.mxu0 0
    %2091 = vmatpush1.bf16.msra.mxu0 %v2015
    %2092 = vmatprep.subr.bf16.mxu0 0
    %2093 = vmatpush1.bf16.msra.mxu0 %v2016
    %2094 = vmatprep.subr.bf16.mxu0 0
    %2095 = vmatpush1.bf16.msra.mxu0 %v2017
    %2096 = vmatprep.mubr.bf16.mxu0 %v1985
    %2097 = vmatmul.mubr.bf16.gmra.mrb[0].mxu0 %v1984
    %v2098 = vpop.f32.mrb[0].mxu0
    %v2099 = vadd.f32 %v2059, %v2098
    %v2100 = vpop.f32.mrb[0].mxu0
    %v2101 = vpop.f32.mrb[0].mxu0
    %v2102 = vpop.f32.mrb[0].mxu0
    %2103 = vdwg.mxu0
    %v2104 = vld [vmem:[%s1 + $0xd] sm:$0x1]
    %v2105 = vld [vmem:[%s1 + $0xe] sm:$0x1]
    %v2106 = vrot.slane %v2099, 4
    %v2107 = vadd.f32 %v2099, %v2106
    %v2108 = vrot.slane %v2107, 2
    %v2109 = vadd.f32 %v2107, %v2108
    %v2110 = vrot.slane %v2109, 1
    %v2111 = vadd.f32 %v2109, %v2110
    %v2112 = vmul.f32 %v2111, %v1870
    %v2113 = vsub.f32 %v2099, %v2112
    %v2114 = vmul.f32 %v2113, %v2113
    %v2115 = vrot.slane %v2114, 4
    %v2116 = vadd.f32 %v2114, %v2115
    %v2117 = vrot.slane %v2116, 2
    %v2118 = vadd.f32 %v2116, %v2117
    %v2119 = vrot.slane %v2118, 1
    %v2120 = vadd.f32 %v2118, %v2119
    %v2121 = vmul.f32 %v2120, %v1870
    %v2122 = vadd.f32 %v2121, 1e-05
    %v2123 = vrsqrt.pop %v2122
    %v2124 = vmul.f32 %v2113, %v2123
    %v2126 = vlaneseq
    %v2127 = vshrl.u32 %v2126, 7
    %v2128 = vsub.s32 0, %v2127
    %v2129 = vrot.slane %v2104, %v2128
    %v2131 = vmul.f32 %v2124, %v2129
    %v2133 = vlaneseq
    %v2134 = vshrl.u32 %v2133, 7
    %v2135 = vsub.s32 0, %v2134
    %v2136 = vrot.slane %v2105, %v2135
    %v2138 = vadd.f32 %v2131, %v2136
    %v2139 = vmax.f32 %v2138, 0.0
    %v2140 = vld [vmem:[%s1 + $0xf] sm:$0x1]
    %s2141 = smul.u32 4, 16
    %s2142 = smul.u32 %s2141, 1
    %s2143 = sshll.u32 %s2142, 4
    %2144 = dma.done %s95, %s2143
    %v2145 = vpack.c.bf16 %v2139, %v2139
    %v2146 = vld [vmem:[#allocation4] sm:$0xff]
    %v2147 = vld [vmem:[#allocation4 + $0x8] sm:$0xff]
    %v2148 = vld [vmem:[#allocation4 + $0x10] sm:$0xff]
    %v2149 = vld [vmem:[#allocation4 + $0x18] sm:$0xff]
    %v2150 = vld [vmem:[#allocation4 + $0x20] sm:$0xff]
    %v2151 = vld [vmem:[#allocation4 + $0x28] sm:$0xff]
    %v2152 = vld [vmem:[#allocation4 + $0x30] sm:$0xff]
    %v2153 = vld [vmem:[#allocation4 + $0x38] sm:$0xff]
    %v2155 = vlaneseq
    %v2156 = vshrl.u32 %v2155, 7
    %v2157 = vsub.s32 0, %v2156
    %v2158 = vrot.slane %v2140, %v2157
    %2160 = vmatprep.subr.bf16.mxu0 0
    %2161 = vmatpush1.bf16.msra.mxu0 %v2146
    %2162 = vmatprep.subr.bf16.mxu0 0
    %2163 = vmatpush1.bf16.msra.mxu0 %v2147
    %2164 = vmatprep.subr.bf16.mxu0 0
    %2165 = vmatpush1.bf16.msra.mxu0 %v2148
    %2166 = vmatprep.subr.bf16.mxu0 0
    %2167 = vmatpush1.bf16.msra.mxu0 %v2149
    %2168 = vmatprep.subr.bf16.mxu0 0
    %2169 = vmatpush1.bf16.msra.mxu0 %v2150
    %2170 = vmatprep.subr.bf16.mxu0 0
    %2171 = vmatpush1.bf16.msra.mxu0 %v2151
    %2172 = vmatprep.subr.bf16.mxu0 0
    %2173 = vmatpush1.bf16.msra.mxu0 %v2152
    %2174 = vmatprep.subr.bf16.mxu0 0
    %2175 = vmatpush1.bf16.msra.mxu0 %v2153
    %2176 = vmatprep.subr.bf16.mxu0 0
    %2177 = vmatpush1.bf16.msra.mxu0 0
    %2178 = vmatprep.subr.bf16.mxu0 0
    %2179 = vmatpush1.bf16.msra.mxu0 0
    %2180 = vmatprep.subr.bf16.mxu0 0
    %2181 = vmatpush1.bf16.msra.mxu0 0
    %2182 = vmatprep.subr.bf16.mxu0 0
    %2183 = vmatpush1.bf16.msra.mxu0 0
    %2184 = vmatprep.subr.bf16.mxu0 0
    %2185 = vmatpush1.bf16.msra.mxu0 0
    %2186 = vmatprep.subr.bf16.mxu0 0
    %2187 = vmatpush1.bf16.msra.mxu0 0
    %2188 = vmatprep.subr.bf16.mxu0 0
    %2189 = vmatpush1.bf16.msra.mxu0 0
    %2190 = vmatprep.subr.bf16.mxu0 0
    %2191 = vmatpush1.bf16.msra.mxu0 0
    %2192 = vmatprep.mubr.bf16.mxu0 0
    %2193 = vmatmul.mubr.bf16.gmra.mrb[0].mxu0 %v2145
    %v2194 = vpop.f32.mrb[0].mxu0
    %v2195 = vadd.f32 %v2158, %v2194
    %v2196 = vpop.f32.mrb[0].mxu0
    %v2197 = vpop.f32.mrb[0].mxu0
    %v2198 = vpop.f32.mrb[0].mxu0
    %2199 = vdwg.mxu0
    %v2200 = vld [vmem:[%s1 + $0x10] sm:$0x1]
    %s2201 = smul.u32 4, 4
    %s2202 = smul.u32 %s2201, 1
    %s2203 = sshll.u32 %s2202, 4
    %2204 = dma.done %s152, %s2203
    %v2205 = vpack.c.bf16 %v2195, %v2195
    %v2206 = vld [vmem:[#allocation5] sm:$0xff]
    %v2207 = vld [vmem:[#allocation5 + $0x8] sm:$0xff]
    %v2209 = vlaneseq
    %v2210 = vshrl.u32 %v2209, 7
    %v2211 = vsub.s32 0, %v2210
    %v2212 = vrot.slane %v2200, %v2211
    %vm2214 = vcmask 261120
    %v2216 = vsel %vm2214, %v2205, 0
    %2218 = vmatprep.subr.bf16.mxu0 0
    %2219 = vmatpush1.bf16.msra.mxu0 %v2206
    %2220 = vmatprep.subr.bf16.mxu0 0
    %2221 = vmatpush1.bf16.msra.mxu0 %v2207
    %2222 = vmatprep.subr.bf16.mxu0 0
    %2223 = vmatpush1.bf16.msra.mxu0 0
    %2224 = vmatprep.subr.bf16.mxu0 0
    %2225 = vmatpush1.bf16.msra.mxu0 0
    %2226 = vmatprep.subr.bf16.mxu0 0
    %2227 = vmatpush1.bf16.msra.mxu0 0
    %2228 = vmatprep.subr.bf16.mxu0 0
    %2229 = vmatpush1.bf16.msra.mxu0 0
    %2230 = vmatprep.subr.bf16.mxu0 0
    %2231 = vmatpush1.bf16.msra.mxu0 0
    %2232 = vmatprep.subr.bf16.mxu0 0
    %2233 = vmatpush1.bf16.msra.mxu0 0
    %2234 = vmatprep.subr.bf16.mxu0 0
    %2235 = vmatpush1.bf16.msra.mxu0 0
    %2236 = vmatprep.subr.bf16.mxu0 0
    %2237 = vmatpush1.bf16.msra.mxu0 0
    %2238 = vmatprep.subr.bf16.mxu0 0
    %2239 = vmatpush1.bf16.msra.mxu0 0
    %2240 = vmatprep.subr.bf16.mxu0 0
    %2241 = vmatpush1.bf16.msra.mxu0 0
    %2242 = vmatprep.subr.bf16.mxu0 0
    %2243 = vmatpush1.bf16.msra.mxu0 0
    %2244 = vmatprep.subr.bf16.mxu0 0
    %2245 = vmatpush1.bf16.msra.mxu0 0
    %2246 = vmatprep.subr.bf16.mxu0 0
    %2247 = vmatpush1.bf16.msra.mxu0 0
    %2248 = vmatprep.subr.bf16.mxu0 0
    %2249 = vmatpush1.bf16.msra.mxu0 0
    %2250 = vmatprep.mubr.bf16.mxu0 0
    %2251 = vmatmul.mubr.bf16.gmra.mrb[0].mxu0 %v2216
    %v2252 = vpop.f32.mrb[0].mxu0
    %v2253 = vadd.f32 %v2212, %v2252
    %v2254 = vpop.f32.mrb[0].mxu0
    %v2255 = vpop.f32.mrb[0].mxu0
    %v2256 = vpop.f32.mrb[0].mxu0
    %2257 = vdwg.mxu0
    %v2258 = vld [vmem:[%s1 + $0x11] sm:$0x1]
    %v2259 = vld [vmem:[%s1 + $0x12] sm:$0x1]
    %v2260 = vrot.slane %v2253, 4
    %v2261 = vadd.f32 %v2253, %v2260
    %v2262 = vrot.slane %v2261, 2
    %v2263 = vadd.f32 %v2261, %v2262
    %v2264 = vrot.slane %v2263, 1
    %v2265 = vadd.f32 %v2263, %v2264
    %v2266 = vmul.f32 %v2265, %v1870
    %v2267 = vsub.f32 %v2253, %v2266
    %v2268 = vmul.f32 %v2267, %v2267
    %v2269 = vrot.slane %v2268, 4
    %v2270 = vadd.f32 %v2268, %v2269
    %v2271 = vrot.slane %v2270, 2
    %v2272 = vadd.f32 %v2270, %v2271
    %v2273 = vrot.slane %v2272, 1
    %v2274 = vadd.f32 %v2272, %v2273
    %v2275 = vmul.f32 %v2274, %v1870
    %v2276 = vadd.f32 %v2275, 1e-05
    %v2277 = vrsqrt.pop %v2276
    %v2278 = vmul.f32 %v2267, %v2277
    %v2280 = vlaneseq
    %v2281 = vshrl.u32 %v2280, 7
    %v2282 = vsub.s32 0, %v2281
    %v2283 = vrot.slane %v2258, %v2282
    %v2285 = vmul.f32 %v2278, %v2283
    %v2287 = vlaneseq
    %v2288 = vshrl.u32 %v2287, 7
    %v2289 = vsub.s32 0, %v2288
    %v2290 = vrot.slane %v2259, %v2289
    %v2292 = vadd.f32 %v2285, %v2290
    %v2293 = vmax.f32 %v2292, 0.0
    %v2294 = vld [vmem:[%s1 + $0x13] sm:$0xf]
    %s2295 = smul.u32 %s2141, 4
    %s2296 = sshll.u32 %s2295, 4
    %2297 = dma.done %s197, %s2296
    %v2298 = vpack.c.bf16 %v2293, %v2293
    %v2299 = vld [vmem:[#allocation6] sm:$0xff]
    %v2300 = vld [vmem:[#allocation6 + $0x8] sm:$0xff]
    %v2301 = vld [vmem:[#allocation6 + $0x10] sm:$0xff]
    %v2302 = vld [vmem:[#allocation6 + $0x18] sm:$0xff]
    %v2303 = vld [vmem:[#allocation6 + $0x20] sm:$0xff]
    %v2304 = vld [vmem:[#allocation6 + $0x28] sm:$0xff]
    %v2305 = vld [vmem:[#allocation6 + $0x30] sm:$0xff]
    %v2306 = vld [vmem:[#allocation6 + $0x38] sm:$0xff]
    %v2307 = vld [vmem:[#allocation6 + $0x40] sm:$0xff]
    %v2308 = vld [vmem:[#allocation6 + $0x48] sm:$0xff]
    %v2309 = vld [vmem:[#allocation6 + $0x50] sm:$0xff]
    %v2310 = vld [vmem:[#allocation6 + $0x58] sm:$0xff]
    %v2311 = vld [vmem:[#allocation6 + $0x60] sm:$0xff]
    %v2312 = vld [vmem:[#allocation6 + $0x68] sm:$0xff]
    %v2313 = vld [vmem:[#allocation6 + $0x70] sm:$0xff]
    %v2314 = vld [vmem:[#allocation6 + $0x78] sm:$0xff]
    %v2315 = vld [vmem:[#allocation6 + $0x80] sm:$0xff]
    %v2316 = vld [vmem:[#allocation6 + $0x88] sm:$0xff]
    %v2317 = vld [vmem:[#allocation6 + $0x90] sm:$0xff]
    %v2318 = vld [vmem:[#allocation6 + $0x98] sm:$0xff]
    %v2319 = vld [vmem:[#allocation6 + $0xa0] sm:$0xff]
    %v2320 = vld [vmem:[#allocation6 + $0xa8] sm:$0xff]
    %v2321 = vld [vmem:[#allocation6 + $0xb0] sm:$0xff]
    %v2322 = vld [vmem:[#allocation6 + $0xb8] sm:$0xff]
    %v2323 = vld [vmem:[#allocation6 + $0xc0] sm:$0xff]
    %v2324 = vld [vmem:[#allocation6 + $0xc8] sm:$0xff]
    %v2325 = vld [vmem:[#allocation6 + $0xd0] sm:$0xff]
    %v2326 = vld [vmem:[#allocation6 + $0xd8] sm:$0xff]
    %v2327 = vld [vmem:[#allocation6 + $0xe0] sm:$0xff]
    %v2328 = vld [vmem:[#allocation6 + $0xe8] sm:$0xff]
    %v2329 = vld [vmem:[#allocation6 + $0xf0] sm:$0xff]
    %v2330 = vld [vmem:[#allocation6 + $0xf8] sm:$0xff]
    %v2332 = vlaneseq
    %v2333 = vshrl.u32 %v2332, 7
    %v2334 = vsub.s32 0, %v2333
    %v2335 = vrot.slane %v2294, %v2334
    %v2336 = vlaneseq
    %v2337 = vshrl.u32 %v2336, 7
    %v2338 = vsub.s32 1, %v2337
    %v2339 = vrot.slane %v2294, %v2338
    %v2340 = vlaneseq
    %v2341 = vshrl.u32 %v2340, 7
    %v2342 = vsub.s32 2, %v2341
    %v2343 = vrot.slane %v2294, %v2342
    %v2344 = vlaneseq
    %v2345 = vshrl.u32 %v2344, 7
    %v2346 = vsub.s32 3, %v2345
    %v2347 = vrot.slane %v2294, %v2346
    %2352 = vmatprep.subr.bf16.mxu0 %v2300
    %2353 = vmatpush1.bf16.msra.mxu0 %v2299
    %2354 = vmatprep.subr.bf16.mxu0 %v2304
    %2355 = vmatpush1.bf16.msra.mxu0 %v2303
    %2356 = vmatprep.subr.bf16.mxu0 %v2308
    %2357 = vmatpush1.bf16.msra.mxu0 %v2307
    %2358 = vmatprep.subr.bf16.mxu0 %v2312
    %2359 = vmatpush1.bf16.msra.mxu0 %v2311
    %2360 = vmatprep.subr.bf16.mxu0 %v2316
    %2361 = vmatpush1.bf16.msra.mxu0 %v2315
    %2362 = vmatprep.subr.bf16.mxu0 %v2320
    %2363 = vmatpush1.bf16.msra.mxu0 %v2319
    %2364 = vmatprep.subr.bf16.mxu0 %v2324
    %2365 = vmatpush1.bf16.msra.mxu0 %v2323
    %2366 = vmatprep.subr.bf16.mxu0 %v2328
    %2367 = vmatpush1.bf16.msra.mxu0 %v2327
    %2368 = vmatprep.subr.bf16.mxu0 0
    %2369 = vmatpush1.bf16.msra.mxu0 0
    %2370 = vmatprep.subr.bf16.mxu0 0
    %2371 = vmatpush1.bf16.msra.mxu0 0
    %2372 = vmatprep.subr.bf16.mxu0 0
    %2373 = vmatpush1.bf16.msra.mxu0 0
    %2374 = vmatprep.subr.bf16.mxu0 0
    %2375 = vmatpush1.bf16.msra.mxu0 0
    %2376 = vmatprep.subr.bf16.mxu0 0
    %2377 = vmatpush1.bf16.msra.mxu0 0
    %2378 = vmatprep.subr.bf16.mxu0 0
    %2379 = vmatpush1.bf16.msra.mxu0 0
    %2380 = vmatprep.subr.bf16.mxu0 0
    %2381 = vmatpush1.bf16.msra.mxu0 0
    %2382 = vmatprep.subr.bf16.mxu0 0
    %2383 = vmatpush1.bf16.msra.mxu0 0
    %2384 = vmatprep.mubr.bf16.mxu0 0
    %2385 = vmatmul.mubr.bf16.gmra.mrb[0].mxu0 %v2298
    %v2386 = vpop.f32.mrb[0].mxu0
    %v2387 = vadd.f32 %v2335, %v2386
    %v2388 = vpop.f32.mrb[0].mxu0
    %v2389 = vadd.f32 %v2339, %v2388
    %v2390 = vpop.f32.mrb[0].mxu0
    %v2391 = vpop.f32.mrb[0].mxu0
    %2392 = vdwg.mxu0
    %2393 = vmatprep.subr.bf16.mxu0 %v2302
    %2394 = vmatpush1.bf16.msra.mxu0 %v2301
    %2395 = vmatprep.subr.bf16.mxu0 %v2306
    %2396 = vmatpush1.bf16.msra.mxu0 %v2305
    %2397 = vmatprep.subr.bf16.mxu0 %v2310
    %2398 = vmatpush1.bf16.msra.mxu0 %v2309
    %2399 = vmatprep.subr.bf16.mxu0 %v2314
    %2400 = vmatpush1.bf16.msra.mxu0 %v2313
    %2401 = vmatprep.subr.bf16.mxu0 %v2318
    %2402 = vmatpush1.bf16.msra.mxu0 %v2317
    %2403 = vmatprep.subr.bf16.mxu0 %v2322
    %2404 = vmatpush1.bf16.msra.mxu0 %v2321
    %2405 = vmatprep.subr.bf16.mxu0 %v2326
    %2406 = vmatpush1.bf16.msra.mxu0 %v2325
    %2407 = vmatprep.subr.bf16.mxu0 %v2330
    %2408 = vmatpush1.bf16.msra.mxu0 %v2329
    %2409 = vmatprep.subr.bf16.mxu0 0
    %2410 = vmatpush1.bf16.msra.mxu0 0
    %2411 = vmatprep.subr.bf16.mxu0 0
    %2412 = vmatpush1.bf16.msra.mxu0 0
    %2413 = vmatprep.subr.bf16.mxu0 0
    %2414 = vmatpush1.bf16.msra.mxu0 0
    %2415 = vmatprep.subr.bf16.mxu0 0
    %2416 = vmatpush1.bf16.msra.mxu0 0
    %2417 = vmatprep.subr.bf16.mxu0 0
    %2418 = vmatpush1.bf16.msra.mxu0 0
    %2419 = vmatprep.subr.bf16.mxu0 0
    %2420 = vmatpush1.bf16.msra.mxu0 0
    %2421 = vmatprep.subr.bf16.mxu0 0
    %2422 = vmatpush1.bf16.msra.mxu0 0
    %2423 = vmatprep.subr.bf16.mxu0 0
    %2424 = vmatpush1.bf16.msra.mxu0 0
    %2425 = vmatprep.mubr.bf16.mxu0 0
    %2426 = vmatmul.mubr.bf16.gmra.mrb[0].mxu0 %v2298
    %v2427 = vpop.f32.mrb[0].mxu0
    %v2428 = vadd.f32 %v2343, %v2427
    %v2429 = vpop.f32.mrb[0].mxu0
    %v2430 = vadd.f32 %v2347, %v2429
    %v2431 = vpop.f32.mrb[0].mxu0
    %v2432 = vpop.f32.mrb[0].mxu0
    %2433 = vdwg.mxu0
    %v2434 = vld [vmem:[%s1 + $0x17] sm:$0xf]
    %v2435 = vld [vmem:[%s1 + $0x1b] sm:$0xf]
    %v2436 = vrot.slane %v2387, 4
    %v2437 = vadd.f32 %v2387, %v2436
    %v2438 = vrot.slane %v2437, 2
    %v2439 = vadd.f32 %v2437, %v2438
    %v2440 = vrot.slane %v2439, 1
    %v2441 = vadd.f32 %v2439, %v2440
    %v2442 = vrot.slane %v2389, 4
    %v2443 = vadd.f32 %v2389, %v2442
    %v2444 = vrot.slane %v2443, 2
    %v2445 = vadd.f32 %v2443, %v2444
    %v2446 = vrot.slane %v2445, 1
    %v2447 = vadd.f32 %v2445, %v2446
    %v2448 = vrot.slane %v2428, 4
    %v2449 = vadd.f32 %v2428, %v2448
    %v2450 = vrot.slane %v2449, 2
    %v2451 = vadd.f32 %v2449, %v2450
    %v2452 = vrot.slane %v2451, 1
    %v2453 = vadd.f32 %v2451, %v2452
    %v2454 = vrot.slane %v2430, 4
    %v2455 = vadd.f32 %v2430, %v2454
    %v2456 = vrot.slane %v2455, 2
    %v2457 = vadd.f32 %v2455, %v2456
    %v2458 = vrot.slane %v2457, 1
    %v2459 = vadd.f32 %v2457, %v2458
    %v2460 = vmul.f32 %v2441, %v1870
    %v2461 = vmul.f32 %v2447, %v1870
    %v2462 = vmul.f32 %v2453, %v1870
    %v2463 = vmul.f32 %v2459, %v1870
    %v2464 = vsub.f32 %v2387, %v2460
    %v2465 = vsub.f32 %v2389, %v2461
    %v2466 = vsub.f32 %v2428, %v2462
    %v2467 = vsub.f32 %v2430, %v2463
    %v2468 = vmul.f32 %v2464, %v2464
    %v2469 = vmul.f32 %v2465, %v2465
    %v2470 = vmul.f32 %v2466, %v2466
    %v2471 = vmul.f32 %v2467, %v2467
    %v2472 = vrot.slane %v2468, 4
    %v2473 = vadd.f32 %v2468, %v2472
    %v2474 = vrot.slane %v2473, 2
    %v2475 = vadd.f32 %v2473, %v2474
    %v2476 = vrot.slane %v2475, 1
    %v2477 = vadd.f32 %v2475, %v2476
    %v2478 = vrot.slane %v2469, 4
    %v2479 = vadd.f32 %v2469, %v2478
    %v2480 = vrot.slane %v2479, 2
    %v2481 = vadd.f32 %v2479, %v2480
    %v2482 = vrot.slane %v2481, 1
    %v2483 = vadd.f32 %v2481, %v2482
    %v2484 = vrot.slane %v2470, 4
    %v2485 = vadd.f32 %v2470, %v2484
    %v2486 = vrot.slane %v2485, 2
    %v2487 = vadd.f32 %v2485, %v2486
    %v2488 = vrot.slane %v2487, 1
    %v2489 = vadd.f32 %v2487, %v2488
    %v2490 = vrot.slane %v2471, 4
    %v2491 = vadd.f32 %v2471, %v2490
    %v2492 = vrot.slane %v2491, 2
    %v2493 = vadd.f32 %v2491, %v2492
    %v2494 = vrot.slane %v2493, 1
    %v2495 = vadd.f32 %v2493, %v2494
    %v2496 = vmul.f32 %v2477, %v1870
    %v2497 = vmul.f32 %v2483, %v1870
    %v2498 = vmul.f32 %v2489, %v1870
    %v2499 = vmul.f32 %v2495, %v1870
    %v2500 = vadd.f32 %v2496, 1e-05
    %v2501 = vadd.f32 %v2497, 1e-05
    %v2502 = vadd.f32 %v2498, 1e-05
    %v2503 = vadd.f32 %v2499, 1e-05
    %v2504 = vrsqrt.pop %v2500
    %v2505 = vrsqrt.pop %v2501
    %v2506 = vrsqrt.pop %v2502
    %v2507 = vrsqrt.pop %v2503
    %v2508 = vmul.f32 %v2464, %v2504
    %v2509 = vmul.f32 %v2465, %v2505
    %v2510 = vmul.f32 %v2466, %v2506
    %v2511 = vmul.f32 %v2467, %v2507
    %v2513 = vlaneseq
    %v2514 = vshrl.u32 %v2513, 7
    %v2515 = vsub.s32 0, %v2514
    %v2516 = vrot.slane %v2434, %v2515
    %v2517 = vlaneseq
    %v2518 = vshrl.u32 %v2517, 7
    %v2519 = vsub.s32 1, %v2518
    %v2520 = vrot.slane %v2434, %v2519
    %v2521 = vlaneseq
    %v2522 = vshrl.u32 %v2521, 7
    %v2523 = vsub.s32 2, %v2522
    %v2524 = vrot.slane %v2434, %v2523
    %v2525 = vlaneseq
    %v2526 = vshrl.u32 %v2525, 7
    %v2527 = vsub.s32 3, %v2526
    %v2528 = vrot.slane %v2434, %v2527
    %v2533 = vmul.f32 %v2508, %v2516
    %v2534 = vmul.f32 %v2509, %v2520
    %v2535 = vmul.f32 %v2510, %v2524
    %v2536 = vmul.f32 %v2511, %v2528
    %v2538 = vlaneseq
    %v2539 = vshrl.u32 %v2538, 7
    %v2540 = vsub.s32 0, %v2539
    %v2541 = vrot.slane %v2435, %v2540
    %v2542 = vlaneseq
    %v2543 = vshrl.u32 %v2542, 7
    %v2544 = vsub.s32 1, %v2543
    %v2545 = vrot.slane %v2435, %v2544
    %v2546 = vlaneseq
    %v2547 = vshrl.u32 %v2546, 7
    %v2548 = vsub.s32 2, %v2547
    %v2549 = vrot.slane %v2435, %v2548
    %v2550 = vlaneseq
    %v2551 = vshrl.u32 %v2550, 7
    %v2552 = vsub.s32 3, %v2551
    %v2553 = vrot.slane %v2435, %v2552
    %v2558 = vadd.f32 %v2533, %v2541
    %v2559 = vadd.f32 %v2534, %v2545
    %v2560 = vadd.f32 %v2535, %v2549
    %v2561 = vadd.f32 %v2536, %v2553
    %v2562 = vmax.f32 %v2558, 0.0
    %v2563 = vmax.f32 %v2559, 0.0
    %v2564 = vmax.f32 %v2560, 0.0
    %v2565 = vmax.f32 %v2561, 0.0
    %v2566 = vpack.c.bf16 %v2562, %v2562
    %v2567 = vpack.c.bf16 %v2563, %v2563
    %v2568 = vpack.c.bf16 %v2564, %v2564
    %v2569 = vpack.c.bf16 %v2565, %v2565
    %s2570 = sshll.u32 %s287, 4
    %2571 = dma.done [#allocation10], %s2570
    %v2572 = vld [vmem:[#allocation7] sm:$0xff]
    %v2573 = vld [vmem:[#allocation7 + $0x8] sm:$0xff]
    %v2574 = vld [vmem:[#allocation7 + $0x10] sm:$0xff]
    %v2575 = vld [vmem:[#allocation7 + $0x18] sm:$0xff]
    %v2576 = vld [vmem:[#allocation7 + $0x20] sm:$0xff]
    %v2577 = vld [vmem:[#allocation7 + $0x28] sm:$0xff]
    %v2578 = vld [vmem:[#allocation7 + $0x30] sm:$0xff]
    %v2579 = vld [vmem:[#allocation7 + $0x38] sm:$0xff]
    %v2580 = vld [vmem:[#allocation7 + $0x40] sm:$0xff]
    %v2581 = vld [vmem:[#allocation7 + $0x48] sm:$0xff]
    %v2582 = vld [vmem:[#allocation7 + $0x50] sm:$0xff]
    %v2583 = vld [vmem:[#allocation7 + $0x58] sm:$0xff]
    %v2584 = vld [vmem:[#allocation7 + $0x60] sm:$0xff]
    %v2585 = vld [vmem:[#allocation7 + $0x68] sm:$0xff]
    %v2586 = vld [vmem:[#allocation7 + $0x70] sm:$0xff]
    %v2587 = vld [vmem:[#allocation7 + $0x78] sm:$0xff]
    %v2588 = vld [vmem:[#allocation7 + $0x80] sm:$0xff]
    %v2589 = vld [vmem:[#allocation7 + $0x88] sm:$0xff]
    %v2590 = vld [vmem:[#allocation7 + $0x90] sm:$0xff]
    %v2591 = vld [vmem:[#allocation7 + $0x98] sm:$0xff]
    %v2592 = vld [vmem:[#allocation7 + $0xa0] sm:$0xff]
    %v2593 = vld [vmem:[#allocation7 + $0xa8] sm:$0xff]
    %v2594 = vld [vmem:[#allocation7 + $0xb0] sm:$0xff]
    %v2595 = vld [vmem:[#allocation7 + $0xb8] sm:$0xff]
    %v2596 = vld [vmem:[#allocation7 + $0xc0] sm:$0xff]
    %v2597 = vld [vmem:[#allocation7 + $0xc8] sm:$0xff]
    %v2598 = vld [vmem:[#allocation7 + $0xd0] sm:$0xff]
    %v2599 = vld [vmem:[#allocation7 + $0xd8] sm:$0xff]
    %v2600 = vld [vmem:[#allocation7 + $0xe0] sm:$0xff]
    %v2601 = vld [vmem:[#allocation7 + $0xe8] sm:$0xff]
    %v2602 = vld [vmem:[#allocation7 + $0xf0] sm:$0xff]
    %v2603 = vld [vmem:[#allocation7 + $0xf8] sm:$0xff]
    %v2604 = vld [vmem:[#allocation7 + $0x100] sm:$0xff]
    %v2605 = vld [vmem:[#allocation7 + $0x108] sm:$0xff]
    %v2606 = vld [vmem:[#allocation7 + $0x110] sm:$0xff]
    %v2607 = vld [vmem:[#allocation7 + $0x118] sm:$0xff]
    %v2608 = vld [vmem:[#allocation7 + $0x120] sm:$0xff]
    %v2609 = vld [vmem:[#allocation7 + $0x128] sm:$0xff]
    %v2610 = vld [vmem:[#allocation7 + $0x130] sm:$0xff]
    %v2611 = vld [vmem:[#allocation7 + $0x138] sm:$0xff]
    %v2612 = vld [vmem:[#allocation7 + $0x140] sm:$0xff]
    %v2613 = vld [vmem:[#allocation7 + $0x148] sm:$0xff]
    %v2614 = vld [vmem:[#allocation7 + $0x150] sm:$0xff]
    %v2615 = vld [vmem:[#allocation7 + $0x158] sm:$0xff]
    %v2616 = vld [vmem:[#allocation7 + $0x160] sm:$0xff]
    %v2617 = vld [vmem:[#allocation7 + $0x168] sm:$0xff]
    %v2618 = vld [vmem:[#allocation7 + $0x170] sm:$0xff]
    %v2619 = vld [vmem:[#allocation7 + $0x178] sm:$0xff]
    %v2620 = vld [vmem:[#allocation7 + $0x180] sm:$0xff]
    %v2621 = vld [vmem:[#allocation7 + $0x188] sm:$0xff]
    %v2622 = vld [vmem:[#allocation7 + $0x190] sm:$0xff]
    %v2623 = vld [vmem:[#allocation7 + $0x198] sm:$0xff]
    %v2624 = vld [vmem:[#allocation7 + $0x1a0] sm:$0xff]
    %v2625 = vld [vmem:[#allocation7 + $0x1a8] sm:$0xff]
    %v2626 = vld [vmem:[#allocation7 + $0x1b0] sm:$0xff]
    %v2627 = vld [vmem:[#allocation7 + $0x1b8] sm:$0xff]
    %v2628 = vld [vmem:[#allocation7 + $0x1c0] sm:$0xff]
    %v2629 = vld [vmem:[#allocation7 + $0x1c8] sm:$0xff]
    %v2630 = vld [vmem:[#allocation7 + $0x1d0] sm:$0xff]
    %v2631 = vld [vmem:[#allocation7 + $0x1d8] sm:$0xff]
    %v2632 = vld [vmem:[#allocation7 + $0x1e0] sm:$0xff]
    %v2633 = vld [vmem:[#allocation7 + $0x1e8] sm:$0xff]
    %v2634 = vld [vmem:[#allocation7 + $0x1f0] sm:$0xff]
    %v2635 = vld [vmem:[#allocation7 + $0x1f8] sm:$0xff]
    %v2636 = vunpack.c.l.s8.bf16 %v2572
    %v2637 = vunpack.c.l.s8.bf16 %v2573
    %v2638 = vunpack.c.l.s8.bf16 %v2574
    %v2639 = vunpack.c.l.s8.bf16 %v2575
    %v2640 = vunpack.c.h.s8.bf16 %v2572
    %v2641 = vunpack.c.h.s8.bf16 %v2573
    %v2642 = vunpack.c.h.s8.bf16 %v2574
    %v2643 = vunpack.c.h.s8.bf16 %v2575
    %v2644 = vunpack.c.l.s8.bf16 %v2576
    %v2645 = vunpack.c.l.s8.bf16 %v2577
    %v2646 = vunpack.c.l.s8.bf16 %v2578
    %v2647 = vunpack.c.l.s8.bf16 %v2579
    %v2648 = vunpack.c.h.s8.bf16 %v2576
    %v2649 = vunpack.c.h.s8.bf16 %v2577
    %v2650 = vunpack.c.h.s8.bf16 %v2578
    %v2651 = vunpack.c.h.s8.bf16 %v2579
    %v2652 = vunpack.c.l.s8.bf16 %v2580
    %v2653 = vunpack.c.l.s8.bf16 %v2581
    %v2654 = vunpack.c.l.s8.bf16 %v2582
    %v2655 = vunpack.c.l.s8.bf16 %v2583
    %v2656 = vunpack.c.h.s8.bf16 %v2580
    %v2657 = vunpack.c.h.s8.bf16 %v2581
    %v2658 = vunpack.c.h.s8.bf16 %v2582
    %v2659 = vunpack.c.h.s8.bf16 %v2583
    %v2660 = vunpack.c.l.s8.bf16 %v2584
    %v2661 = vunpack.c.l.s8.bf16 %v2585
    %v2662 = vunpack.c.l.s8.bf16 %v2586
    %v2663 = vunpack.c.l.s8.bf16 %v2587
    %v2664 = vunpack.c.h.s8.bf16 %v2584
    %v2665 = vunpack.c.h.s8.bf16 %v2585
    %v2666 = vunpack.c.h.s8.bf16 %v2586
    %v2667 = vunpack.c.h.s8.bf16 %v2587
    %v2668 = vunpack.c.l.s8.bf16 %v2588
    %v2669 = vunpack.c.l.s8.bf16 %v2589
    %v2670 = vunpack.c.l.s8.bf16 %v2590
    %v2671 = vunpack.c.l.s8.bf16 %v2591
    %v2672 = vunpack.c.h.s8.bf16 %v2588
    %v2673 = vunpack.c.h.s8.bf16 %v2589
    %v2674 = vunpack.c.h.s8.bf16 %v2590
    %v2675 = vunpack.c.h.s8.bf16 %v2591
    %v2676 = vunpack.c.l.s8.bf16 %v2592
    %v2677 = vunpack.c.l.s8.bf16 %v2593
    %v2678 = vunpack.c.l.s8.bf16 %v2594
    %v2679 = vunpack.c.l.s8.bf16 %v2595
    %v2680 = vunpack.c.h.s8.bf16 %v2592
    %v2681 = vunpack.c.h.s8.bf16 %v2593
    %v2682 = vunpack.c.h.s8.bf16 %v2594
    %v2683 = vunpack.c.h.s8.bf16 %v2595
    %v2684 = vunpack.c.l.s8.bf16 %v2596
    %v2685 = vunpack.c.l.s8.bf16 %v2597
    %v2686 = vunpack.c.l.s8.bf16 %v2598
    %v2687 = vunpack.c.l.s8.bf16 %v2599
    %v2688 = vunpack.c.h.s8.bf16 %v2596
    %v2689 = vunpack.c.h.s8.bf16 %v2597
    %v2690 = vunpack.c.h.s8.bf16 %v2598
    %v2691 = vunpack.c.h.s8.bf16 %v2599
    %v2692 = vunpack.c.l.s8.bf16 %v2600
    %v2693 = vunpack.c.l.s8.bf16 %v2601
    %v2694 = vunpack.c.l.s8.bf16 %v2602
    %v2695 = vunpack.c.l.s8.bf16 %v2603
    %v2696 = vunpack.c.h.s8.bf16 %v2600
    %v2697 = vunpack.c.h.s8.bf16 %v2601
    %v2698 = vunpack.c.h.s8.bf16 %v2602
    %v2699 = vunpack.c.h.s8.bf16 %v2603
    %v2700 = vunpack.c.l.s8.bf16 %v2604
    %v2701 = vunpack.c.l.s8.bf16 %v2605
    %v2702 = vunpack.c.l.s8.bf16 %v2606
    %v2703 = vunpack.c.l.s8.bf16 %v2607
    %v2704 = vunpack.c.h.s8.bf16 %v2604
    %v2705 = vunpack.c.h.s8.bf16 %v2605
    %v2706 = vunpack.c.h.s8.bf16 %v2606
    %v2707 = vunpack.c.h.s8.bf16 %v2607
    %v2708 = vunpack.c.l.s8.bf16 %v2608
    %v2709 = vunpack.c.l.s8.bf16 %v2609
    %v2710 = vunpack.c.l.s8.bf16 %v2610
    %v2711 = vunpack.c.l.s8.bf16 %v2611
    %v2712 = vunpack.c.h.s8.bf16 %v2608
    %v2713 = vunpack.c.h.s8.bf16 %v2609
    %v2714 = vunpack.c.h.s8.bf16 %v2610
    %v2715 = vunpack.c.h.s8.bf16 %v2611
    %v2716 = vunpack.c.l.s8.bf16 %v2612
    %v2717 = vunpack.c.l.s8.bf16 %v2613
    %v2718 = vunpack.c.l.s8.bf16 %v2614
    %v2719 = vunpack.c.l.s8.bf16 %v2615
    %v2720 = vunpack.c.h.s8.bf16 %v2612
    %v2721 = vunpack.c.h.s8.bf16 %v2613
    %v2722 = vunpack.c.h.s8.bf16 %v2614
    %v2723 = vunpack.c.h.s8.bf16 %v2615
    %v2724 = vunpack.c.l.s8.bf16 %v2616
    %v2725 = vunpack.c.l.s8.bf16 %v2617
    %v2726 = vunpack.c.l.s8.bf16 %v2618
    %v2727 = vunpack.c.l.s8.bf16 %v2619
    %v2728 = vunpack.c.h.s8.bf16 %v2616
    %v2729 = vunpack.c.h.s8.bf16 %v2617
    %v2730 = vunpack.c.h.s8.bf16 %v2618
    %v2731 = vunpack.c.h.s8.bf16 %v2619
    %v2732 = vunpack.c.l.s8.bf16 %v2620
    %v2733 = vunpack.c.l.s8.bf16 %v2621
    %v2734 = vunpack.c.l.s8.bf16 %v2622
    %v2735 = vunpack.c.l.s8.bf16 %v2623
    %v2736 = vunpack.c.h.s8.bf16 %v2620
    %v2737 = vunpack.c.h.s8.bf16 %v2621
    %v2738 = vunpack.c.h.s8.bf16 %v2622
    %v2739 = vunpack.c.h.s8.bf16 %v2623
    %v2740 = vunpack.c.l.s8.bf16 %v2624
    %v2741 = vunpack.c.l.s8.bf16 %v2625
    %v2742 = vunpack.c.l.s8.bf16 %v2626
    %v2743 = vunpack.c.l.s8.bf16 %v2627
    %v2744 = vunpack.c.h.s8.bf16 %v2624
    %v2745 = vunpack.c.h.s8.bf16 %v2625
    %v2746 = vunpack.c.h.s8.bf16 %v2626
    %v2747 = vunpack.c.h.s8.bf16 %v2627
    %v2748 = vunpack.c.l.s8.bf16 %v2628
    %v2749 = vunpack.c.l.s8.bf16 %v2629
    %v2750 = vunpack.c.l.s8.bf16 %v2630
    %v2751 = vunpack.c.l.s8.bf16 %v2631
    %v2752 = vunpack.c.h.s8.bf16 %v2628
    %v2753 = vunpack.c.h.s8.bf16 %v2629
    %v2754 = vunpack.c.h.s8.bf16 %v2630
    %v2755 = vunpack.c.h.s8.bf16 %v2631
    %v2756 = vunpack.c.l.s8.bf16 %v2632
    %v2757 = vunpack.c.l.s8.bf16 %v2633
    %v2758 = vunpack.c.l.s8.bf16 %v2634
    %v2759 = vunpack.c.l.s8.bf16 %v2635
    %v2760 = vunpack.c.h.s8.bf16 %v2632
    %v2761 = vunpack.c.h.s8.bf16 %v2633
    %v2762 = vunpack.c.h.s8.bf16 %v2634
    %v2763 = vunpack.c.h.s8.bf16 %v2635
    %2764 = vmatprep.subr.bf16.mxu0 %v2637
    %2765 = vmatpush1.bf16.msra.mxu0 %v2636
    %2766 = vmatprep.subr.bf16.mxu0 %v2641
    %2767 = vmatpush1.bf16.msra.mxu0 %v2640
    %2768 = vmatprep.subr.bf16.mxu0 %v2645
    %2769 = vmatpush1.bf16.msra.mxu0 %v2644
    %2770 = vmatprep.subr.bf16.mxu0 %v2649
    %2771 = vmatpush1.bf16.msra.mxu0 %v2648
    %2772 = vmatprep.subr.bf16.mxu0 %v2653
    %2773 = vmatpush1.bf16.msra.mxu0 %v2652
    %2774 = vmatprep.subr.bf16.mxu0 %v2657
    %2775 = vmatpush1.bf16.msra.mxu0 %v2656
    %2776 = vmatprep.subr.bf16.mxu0 %v2661
    %2777 = vmatpush1.bf16.msra.mxu0 %v2660
    %2778 = vmatprep.subr.bf16.mxu0 %v2665
    %2779 = vmatpush1.bf16.msra.mxu0 %v2664
    %2780 = vmatprep.subr.bf16.mxu0 %v2669
    %2781 = vmatpush1.bf16.msra.mxu0 %v2668
    %2782 = vmatprep.subr.bf16.mxu0 %v2673
    %2783 = vmatpush1.bf16.msra.mxu0 %v2672
    %2784 = vmatprep.subr.bf16.mxu0 %v2677
    %2785 = vmatpush1.bf16.msra.mxu0 %v2676
    %2786 = vmatprep.subr.bf16.mxu0 %v2681
    %2787 = vmatpush1.bf16.msra.mxu0 %v2680
    %2788 = vmatprep.subr.bf16.mxu0 %v2685
    %2789 = vmatpush1.bf16.msra.mxu0 %v2684
    %2790 = vmatprep.subr.bf16.mxu0 %v2689
    %2791 = vmatpush1.bf16.msra.mxu0 %v2688
    %2792 = vmatprep.subr.bf16.mxu0 %v2693
    %2793 = vmatpush1.bf16.msra.mxu0 %v2692
    %2794 = vmatprep.subr.bf16.mxu0 %v2697
    %2795 = vmatpush1.bf16.msra.mxu0 %v2696
    %2796 = vmatprep.mubr.bf16.mxu0 %v2567
    %2797 = vmatmul.mubr.bf16.gmra.mrb[0].mxu0 %v2566
    %v2798 = vpop.f32.mrb[0].mxu0
    %v2799 = vadd.f32 0.0, %v2798
    %v2800 = vpop.f32.mrb[0].mxu0
    %v2801 = vadd.f32 0.0, %v2800
    %v2802 = vpop.f32.mrb[0].mxu0
    %v2803 = vpop.f32.mrb[0].mxu0
    %2804 = vdwg.mxu0
    %2805 = vmatprep.subr.bf16.mxu0 %v2701
    %2806 = vmatpush1.bf16.msra.mxu0 %v2700
    %2807 = vmatprep.subr.bf16.mxu0 %v2705
    %2808 = vmatpush1.bf16.msra.mxu0 %v2704
    %2809 = vmatprep.subr.bf16.mxu0 %v2709
    %2810 = vmatpush1.bf16.msra.mxu0 %v2708
    %2811 = vmatprep.subr.bf16.mxu0 %v2713
    %2812 = vmatpush1.bf16.msra.mxu0 %v2712
    %2813 = vmatprep.subr.bf16.mxu0 %v2717
    %2814 = vmatpush1.bf16.msra.mxu0 %v2716
    %2815 = vmatprep.subr.bf16.mxu0 %v2721
    %2816 = vmatpush1.bf16.msra.mxu0 %v2720
    %2817 = vmatprep.subr.bf16.mxu0 %v2725
    %2818 = vmatpush1.bf16.msra.mxu0 %v2724
    %2819 = vmatprep.subr.bf16.mxu0 %v2729
    %2820 = vmatpush1.bf16.msra.mxu0 %v2728
    %2821 = vmatprep.subr.bf16.mxu0 %v2733
    %2822 = vmatpush1.bf16.msra.mxu0 %v2732
    %2823 = vmatprep.subr.bf16.mxu0 %v2737
    %2824 = vmatpush1.bf16.msra.mxu0 %v2736
    %2825 = vmatprep.subr.bf16.mxu0 %v2741
    %2826 = vmatpush1.bf16.msra.mxu0 %v2740
    %2827 = vmatprep.subr.bf16.mxu0 %v2745
    %2828 = vmatpush1.bf16.msra.mxu0 %v2744
    %2829 = vmatprep.subr.bf16.mxu0 %v2749
    %2830 = vmatpush1.bf16.msra.mxu0 %v2748
    %2831 = vmatprep.subr.bf16.mxu0 %v2753
    %2832 = vmatpush1.bf16.msra.mxu0 %v2752
    %2833 = vmatprep.subr.bf16.mxu0 %v2757
    %2834 = vmatpush1.bf16.msra.mxu0 %v2756
    %2835 = vmatprep.subr.bf16.mxu0 %v2761
    %2836 = vmatpush1.bf16.msra.mxu0 %v2760
    %2837 = vmatprep.mubr.bf16.mxu0 %v2569
    %2838 = vmatmul.mubr.bf16.gmra.mrb[0].mxu0 %v2568
    %v2839 = vpop.f32.mrb[0].mxu0
    %v2840 = vadd.f32 %v2799, %v2839
    %v2841 = vpop.f32.mrb[0].mxu0
    %v2842 = vadd.f32 %v2801, %v2841
    %v2843 = vpop.f32.mrb[0].mxu0
    %v2844 = vpop.f32.mrb[0].mxu0
    %2845 = vdwg.mxu0
    %2846 = vmatprep.subr.bf16.mxu0 %v2639
    %2847 = vmatpush1.bf16.msra.mxu0 %v2638
    %2848 = vmatprep.subr.bf16.mxu0 %v2643
    %2849 = vmatpush1.bf16.msra.mxu0 %v2642
    %2850 = vmatprep.subr.bf16.mxu0 %v2647
    %2851 = vmatpush1.bf16.msra.mxu0 %v2646
    %2852 = vmatprep.subr.bf16.mxu0 %v2651
    %2853 = vmatpush1.bf16.msra.mxu0 %v2650
    %2854 = vmatprep.subr.bf16.mxu0 %v2655
    %2855 = vmatpush1.bf16.msra.mxu0 %v2654
    %2856 = vmatprep.subr.bf16.mxu0 %v2659
    %2857 = vmatpush1.bf16.msra.mxu0 %v2658
    %2858 = vmatprep.subr.bf16.mxu0 %v2663
    %2859 = vmatpush1.bf16.msra.mxu0 %v2662
    %2860 = vmatprep.subr.bf16.mxu0 %v2667
    %2861 = vmatpush1.bf16.msra.mxu0 %v2666
    %2862 = vmatprep.subr.bf16.mxu0 %v2671
    %2863 = vmatpush1.bf16.msra.mxu0 %v2670
    %2864 = vmatprep.subr.bf16.mxu0 %v2675
    %2865 = vmatpush1.bf16.msra.mxu0 %v2674
    %2866 = vmatprep.subr.bf16.mxu0 %v2679
    %2867 = vmatpush1.bf16.msra.mxu0 %v2678
    %2868 = vmatprep.subr.bf16.mxu0 %v2683
    %2869 = vmatpush1.bf16.msra.mxu0 %v2682
    %2870 = vmatprep.subr.bf16.mxu0 %v2687
    %2871 = vmatpush1.bf16.msra.mxu0 %v2686
    %2872 = vmatprep.subr.bf16.mxu0 %v2691
    %2873 = vmatpush1.bf16.msra.mxu0 %v2690
    %2874 = vmatprep.subr.bf16.mxu0 %v2695
    %2875 = vmatpush1.bf16.msra.mxu0 %v2694
    %2876 = vmatprep.subr.bf16.mxu0 %v2699
    %2877 = vmatpush1.bf16.msra.mxu0 %v2698
    %2878 = vmatprep.mubr.bf16.mxu0 %v2567
    %2879 = vmatmul.mubr.bf16.gmra.mrb[0].mxu0 %v2566
    %v2880 = vpop.f32.mrb[0].mxu0
    %v2881 = vadd.f32 0.0, %v2880
    %v2882 = vpop.f32.mrb[0].mxu0
    %v2883 = vadd.f32 0.0, %v2882
    %v2884 = vpop.f32.mrb[0].mxu0
    %v2885 = vpop.f32.mrb[0].mxu0
    %2886 = vdwg.mxu0
    %2887 = vmatprep.subr.bf16.mxu0 %v2703
    %2888 = vmatpush1.bf16.msra.mxu0 %v2702
    %2889 = vmatprep.subr.bf16.mxu0 %v2707
    %2890 = vmatpush1.bf16.msra.mxu0 %v2706
    %2891 = vmatprep.subr.bf16.mxu0 %v2711
    %2892 = vmatpush1.bf16.msra.mxu0 %v2710
    %2893 = vmatprep.subr.bf16.mxu0 %v2715
    %2894 = vmatpush1.bf16.msra.mxu0 %v2714
    %2895 = vmatprep.subr.bf16.mxu0 %v2719
    %2896 = vmatpush1.bf16.msra.mxu0 %v2718
    %2897 = vmatprep.subr.bf16.mxu0 %v2723
    %2898 = vmatpush1.bf16.msra.mxu0 %v2722
    %2899 = vmatprep.subr.bf16.mxu0 %v2727
    %2900 = vmatpush1.bf16.msra.mxu0 %v2726
    %2901 = vmatprep.subr.bf16.mxu0 %v2731
    %2902 = vmatpush1.bf16.msra.mxu0 %v2730
    %2903 = vmatprep.subr.bf16.mxu0 %v2735
    %2904 = vmatpush1.bf16.msra.mxu0 %v2734
    %2905 = vmatprep.subr.bf16.mxu0 %v2739
    %2906 = vmatpush1.bf16.msra.mxu0 %v2738
    %2907 = vmatprep.subr.bf16.mxu0 %v2743
    %2908 = vmatpush1.bf16.msra.mxu0 %v2742
    %2909 = vmatprep.subr.bf16.mxu0 %v2747
    %2910 = vmatpush1.bf16.msra.mxu0 %v2746
    %2911 = vmatprep.subr.bf16.mxu0 %v2751
    %2912 = vmatpush1.bf16.msra.mxu0 %v2750
    %2913 = vmatprep.subr.bf16.mxu0 %v2755
    %2914 = vmatpush1.bf16.msra.mxu0 %v2754
    %2915 = vmatprep.subr.bf16.mxu0 %v2759
    %2916 = vmatpush1.bf16.msra.mxu0 %v2758
    %2917 = vmatprep.subr.bf16.mxu0 %v2763
    %2918 = vmatpush1.bf16.msra.mxu0 %v2762
    %2919 = vmatprep.mubr.bf16.mxu0 %v2569
    %2920 = vmatmul.mubr.bf16.gmra.mrb[0].mxu0 %v2568
    %v2921 = vpop.f32.mrb[0].mxu0
    %v2922 = vadd.f32 %v2881, %v2921
    %v2923 = vpop.f32.mrb[0].mxu0
    %v2924 = vadd.f32 %v2883, %v2923
    %v2925 = vpop.f32.mrb[0].mxu0
    %v2926 = vpop.f32.mrb[0].mxu0
    %2927 = vdwg.mxu0
    %v2928 = vld [vmem:[%s1 + $0x33] sm:$0xf]
    %v2930 = vlaneseq
    %v2931 = vshrl.u32 %v2930, 7
    %v2932 = vsub.s32 0, %v2931
    %v2933 = vrot.slane %v2928, %v2932
    %v2934 = vlaneseq
    %v2935 = vshrl.u32 %v2934, 7
    %v2936 = vsub.s32 1, %v2935
    %v2937 = vrot.slane %v2928, %v2936
    %v2938 = vlaneseq
    %v2939 = vshrl.u32 %v2938, 7
    %v2940 = vsub.s32 2, %v2939
    %v2941 = vrot.slane %v2928, %v2940
    %v2942 = vlaneseq
    %v2943 = vshrl.u32 %v2942, 7
    %v2944 = vsub.s32 3, %v2943
    %v2945 = vrot.slane %v2928, %v2944
    %v2950 = vmul.f32 %v2840, %v2933
    %v2951 = vmul.f32 %v2842, %v2937
    %v2952 = vmul.f32 %v2922, %v2941
    %v2953 = vmul.f32 %v2924, %v2945
    %v2954 = vld [vmem:[%s1 + $0x1f] sm:$0xf]
    %v2956 = vlaneseq
    %v2957 = vshrl.u32 %v2956, 7
    %v2958 = vsub.s32 0, %v2957
    %v2959 = vrot.slane %v2954, %v2958
    %v2960 = vlaneseq
    %v2961 = vshrl.u32 %v2960, 7
    %v2962 = vsub.s32 1, %v2961
    %v2963 = vrot.slane %v2954, %v2962
    %v2964 = vlaneseq
    %v2965 = vshrl.u32 %v2964, 7
    %v2966 = vsub.s32 2, %v2965
    %v2967 = vrot.slane %v2954, %v2966
    %v2968 = vlaneseq
    %v2969 = vshrl.u32 %v2968, 7
    %v2970 = vsub.s32 3, %v2969
    %v2971 = vrot.slane %v2954, %v2970
    %v2976 = vadd.f32 %v2950, %v2959
    %v2977 = vadd.f32 %v2951, %v2963
    %v2978 = vadd.f32 %v2952, %v2967
    %v2979 = vadd.f32 %v2953, %v2971
    %v2980 = vtanh.pop %v2976
    %v2981 = vtanh.pop %v2977
    %v2982 = vtanh.pop %v2978
    %v2983 = vtanh.pop %v2979
    %2984 = vst [vmem:[#allocation14] sm:$0xff] %v2980
    %2985 = vst [vmem:[#allocation14 + $0x8] sm:$0xff] %v2981
    %2986 = vst [vmem:[#allocation14 + $0x10] sm:$0xff] %v2982
    %2987 = vst [vmem:[#allocation14 + $0x18] sm:$0xff] %v2983
    %s2988 = sshll.u32 %s287, 4
    %2989 = dma.done %s246, %s2988
    %v2990 = vld [vmem:[%s245] sm:$0xff]
    %v2991 = vld [vmem:[%s245 + $0x8] sm:$0xff]
    %v2992 = vld [vmem:[%s245 + $0x10] sm:$0xff]
    %v2993 = vld [vmem:[%s245 + $0x18] sm:$0xff]
    %v2994 = vld [vmem:[%s245 + $0x20] sm:$0xff]
    %v2995 = vld [vmem:[%s245 + $0x28] sm:$0xff]
    %v2996 = vld [vmem:[%s245 + $0x30] sm:$0xff]
    %v2997 = vld [vmem:[%s245 + $0x38] sm:$0xff]
    %v2998 = vld [vmem:[%s245 + $0x40] sm:$0xff]
    %v2999 = vld [vmem:[%s245 + $0x48] sm:$0xff]
    %v3000 = vld [vmem:[%s245 + $0x50] sm:$0xff]
    %v3001 = vld [vmem:[%s245 + $0x58] sm:$0xff]
    %v3002 = vld [vmem:[%s245 + $0x60] sm:$0xff]
    %v3003 = vld [vmem:[%s245 + $0x68] sm:$0xff]
    %v3004 = vld [vmem:[%s245 + $0x70] sm:$0xff]
    %v3005 = vld [vmem:[%s245 + $0x78] sm:$0xff]
    %v3006 = vld [vmem:[%s245 + $0x80] sm:$0xff]
    %v3007 = vld [vmem:[%s245 + $0x88] sm:$0xff]
    %v3008 = vld [vmem:[%s245 + $0x90] sm:$0xff]
    %v3009 = vld [vmem:[%s245 + $0x98] sm:$0xff]
    %v3010 = vld [vmem:[%s245 + $0xa0] sm:$0xff]
    %v3011 = vld [vmem:[%s245 + $0xa8] sm:$0xff]
    %v3012 = vld [vmem:[%s245 + $0xb0] sm:$0xff]
    %v3013 = vld [vmem:[%s245 + $0xb8] sm:$0xff]
    %v3014 = vld [vmem:[%s245 + $0xc0] sm:$0xff]
    %v3015 = vld [vmem:[%s245 + $0xc8] sm:$0xff]
    %v3016 = vld [vmem:[%s245 + $0xd0] sm:$0xff]
    %v3017 = vld [vmem:[%s245 + $0xd8] sm:$0xff]
    %v3018 = vld [vmem:[%s245 + $0xe0] sm:$0xff]
    %v3019 = vld [vmem:[%s245 + $0xe8] sm:$0xff]
    %v3020 = vld [vmem:[%s245 + $0xf0] sm:$0xff]
    %v3021 = vld [vmem:[%s245 + $0xf8] sm:$0xff]
    %v3022 = vld [vmem:[%s245 + $0x100] sm:$0xff]
    %v3023 = vld [vmem:[%s245 + $0x108] sm:$0xff]
    %v3024 = vld [vmem:[%s245 + $0x110] sm:$0xff]
    %v3025 = vld [vmem:[%s245 + $0x118] sm:$0xff]
    %v3026 = vld [vmem:[%s245 + $0x120] sm:$0xff]
    %v3027 = vld [vmem:[%s245 + $0x128] sm:$0xff]
    %v3028 = vld [vmem:[%s245 + $0x130] sm:$0xff]
    %v3029 = vld [vmem:[%s245 + $0x138] sm:$0xff]
    %v3030 = vld [vmem:[%s245 + $0x140] sm:$0xff]
    %v3031 = vld [vmem:[%s245 + $0x148] sm:$0xff]
    %v3032 = vld [vmem:[%s245 + $0x150] sm:$0xff]
    %v3033 = vld [vmem:[%s245 + $0x158] sm:$0xff]
    %v3034 = vld [vmem:[%s245 + $0x160] sm:$0xff]
    %v3035 = vld [vmem:[%s245 + $0x168] sm:$0xff]
    %v3036 = vld [vmem:[%s245 + $0x170] sm:$0xff]
    %v3037 = vld [vmem:[%s245 + $0x178] sm:$0xff]
    %v3038 = vld [vmem:[%s245 + $0x180] sm:$0xff]
    %v3039 = vld [vmem:[%s245 + $0x188] sm:$0xff]
    %v3040 = vld [vmem:[%s245 + $0x190] sm:$0xff]
    %v3041 = vld [vmem:[%s245 + $0x198] sm:$0xff]
    %v3042 = vld [vmem:[%s245 + $0x1a0] sm:$0xff]
    %v3043 = vld [vmem:[%s245 + $0x1a8] sm:$0xff]
    %v3044 = vld [vmem:[%s245 + $0x1b0] sm:$0xff]
    %v3045 = vld [vmem:[%s245 + $0x1b8] sm:$0xff]
    %v3046 = vld [vmem:[%s245 + $0x1c0] sm:$0xff]
    %v3047 = vld [vmem:[%s245 + $0x1c8] sm:$0xff]
    %v3048 = vld [vmem:[%s245 + $0x1d0] sm:$0xff]
    %v3049 = vld [vmem:[%s245 + $0x1d8] sm:$0xff]
    %v3050 = vld [vmem:[%s245 + $0x1e0] sm:$0xff]
    %v3051 = vld [vmem:[%s245 + $0x1e8] sm:$0xff]
    %v3052 = vld [vmem:[%s245 + $0x1f0] sm:$0xff]
    %v3053 = vld [vmem:[%s245 + $0x1f8] sm:$0xff]
    %v3054 = vunpack.c.l.s8.bf16 %v2990
    %v3055 = vunpack.c.l.s8.bf16 %v2991
    %v3056 = vunpack.c.l.s8.bf16 %v2992
    %v3057 = vunpack.c.l.s8.bf16 %v2993
    %v3058 = vunpack.c.h.s8.bf16 %v2990
    %v3059 = vunpack.c.h.s8.bf16 %v2991
    %v3060 = vunpack.c.h.s8.bf16 %v2992
    %v3061 = vunpack.c.h.s8.bf16 %v2993
    %v3062 = vunpack.c.l.s8.bf16 %v2994
    %v3063 = vunpack.c.l.s8.bf16 %v2995
    %v3064 = vunpack.c.l.s8.bf16 %v2996
    %v3065 = vunpack.c.l.s8.bf16 %v2997
    %v3066 = vunpack.c.h.s8.bf16 %v2994
    %v3067 = vunpack.c.h.s8.bf16 %v2995
    %v3068 = vunpack.c.h.s8.bf16 %v2996
    %v3069 = vunpack.c.h.s8.bf16 %v2997
    %v3070 = vunpack.c.l.s8.bf16 %v2998
    %v3071 = vunpack.c.l.s8.bf16 %v2999
    %v3072 = vunpack.c.l.s8.bf16 %v3000
    %v3073 = vunpack.c.l.s8.bf16 %v3001
    %v3074 = vunpack.c.h.s8.bf16 %v2998
    %v3075 = vunpack.c.h.s8.bf16 %v2999
    %v3076 = vunpack.c.h.s8.bf16 %v3000
    %v3077 = vunpack.c.h.s8.bf16 %v3001
    %v3078 = vunpack.c.l.s8.bf16 %v3002
    %v3079 = vunpack.c.l.s8.bf16 %v3003
    %v3080 = vunpack.c.l.s8.bf16 %v3004
    %v3081 = vunpack.c.l.s8.bf16 %v3005
    %v3082 = vunpack.c.h.s8.bf16 %v3002
    %v3083 = vunpack.c.h.s8.bf16 %v3003
    %v3084 = vunpack.c.h.s8.bf16 %v3004
    %v3085 = vunpack.c.h.s8.bf16 %v3005
    %v3086 = vunpack.c.l.s8.bf16 %v3006
    %v3087 = vunpack.c.l.s8.bf16 %v3007
    %v3088 = vunpack.c.l.s8.bf16 %v3008
    %v3089 = vunpack.c.l.s8.bf16 %v3009
    %v3090 = vunpack.c.h.s8.bf16 %v3006
    %v3091 = vunpack.c.h.s8.bf16 %v3007
    %v3092 = vunpack.c.h.s8.bf16 %v3008
    %v3093 = vunpack.c.h.s8.bf16 %v3009
    %v3094 = vunpack.c.l.s8.bf16 %v3010
    %v3095 = vunpack.c.l.s8.bf16 %v3011
    %v3096 = vunpack.c.l.s8.bf16 %v3012
    %v3097 = vunpack.c.l.s8.bf16 %v3013
    %v3098 = vunpack.c.h.s8.bf16 %v3010
    %v3099 = vunpack.c.h.s8.bf16 %v3011
    %v3100 = vunpack.c.h.s8.bf16 %v3012
    %v3101 = vunpack.c.h.s8.bf16 %v3013
    %v3102 = vunpack.c.l.s8.bf16 %v3014
    %v3103 = vunpack.c.l.s8.bf16 %v3015
    %v3104 = vunpack.c.l.s8.bf16 %v3016
    %v3105 = vunpack.c.l.s8.bf16 %v3017
    %v3106 = vunpack.c.h.s8.bf16 %v3014
    %v3107 = vunpack.c.h.s8.bf16 %v3015
    %v3108 = vunpack.c.h.s8.bf16 %v3016
    %v3109 = vunpack.c.h.s8.bf16 %v3017
    %v3110 = vunpack.c.l.s8.bf16 %v3018
    %v3111 = vunpack.c.l.s8.bf16 %v3019
    %v3112 = vunpack.c.l.s8.bf16 %v3020
    %v3113 = vunpack.c.l.s8.bf16 %v3021
    %v3114 = vunpack.c.h.s8.bf16 %v3018
    %v3115 = vunpack.c.h.s8.bf16 %v3019
    %v3116 = vunpack.c.h.s8.bf16 %v3020
    %v3117 = vunpack.c.h.s8.bf16 %v3021
    %v3118 = vunpack.c.l.s8.bf16 %v3022
    %v3119 = vunpack.c.l.s8.bf16 %v3023
    %v3120 = vunpack.c.l.s8.bf16 %v3024
    %v3121 = vunpack.c.l.s8.bf16 %v3025
    %v3122 = vunpack.c.h.s8.bf16 %v3022
    %v3123 = vunpack.c.h.s8.bf16 %v3023
    %v3124 = vunpack.c.h.s8.bf16 %v3024
    %v3125 = vunpack.c.h.s8.bf16 %v3025
    %v3126 = vunpack.c.l.s8.bf16 %v3026
    %v3127 = vunpack.c.l.s8.bf16 %v3027
    %v3128 = vunpack.c.l.s8.bf16 %v3028
    %v3129 = vunpack.c.l.s8.bf16 %v3029
    %v3130 = vunpack.c.h.s8.bf16 %v3026
    %v3131 = vunpack.c.h.s8.bf16 %v3027
    %v3132 = vunpack.c.h.s8.bf16 %v3028
    %v3133 = vunpack.c.h.s8.bf16 %v3029
    %v3134 = vunpack.c.l.s8.bf16 %v3030
    %v3135 = vunpack.c.l.s8.bf16 %v3031
    %v3136 = vunpack.c.l.s8.bf16 %v3032
    %v3137 = vunpack.c.l.s8.bf16 %v3033
    %v3138 = vunpack.c.h.s8.bf16 %v3030
    %v3139 = vunpack.c.h.s8.bf16 %v3031
    %v3140 = vunpack.c.h.s8.bf16 %v3032
    %v3141 = vunpack.c.h.s8.bf16 %v3033
    %v3142 = vunpack.c.l.s8.bf16 %v3034
    %v3143 = vunpack.c.l.s8.bf16 %v3035
    %v3144 = vunpack.c.l.s8.bf16 %v3036
    %v3145 = vunpack.c.l.s8.bf16 %v3037
    %v3146 = vunpack.c.h.s8.bf16 %v3034
    %v3147 = vunpack.c.h.s8.bf16 %v3035
    %v3148 = vunpack.c.h.s8.bf16 %v3036
    %v3149 = vunpack.c.h.s8.bf16 %v3037
    %v3150 = vunpack.c.l.s8.bf16 %v3038
    %v3151 = vunpack.c.l.s8.bf16 %v3039
    %v3152 = vunpack.c.l.s8.bf16 %v3040
    %v3153 = vunpack.c.l.s8.bf16 %v3041
    %v3154 = vunpack.c.h.s8.bf16 %v3038
    %v3155 = vunpack.c.h.s8.bf16 %v3039
    %v3156 = vunpack.c.h.s8.bf16 %v3040
    %v3157 = vunpack.c.h.s8.bf16 %v3041
    %v3158 = vunpack.c.l.s8.bf16 %v3042
    %v3159 = vunpack.c.l.s8.bf16 %v3043
    %v3160 = vunpack.c.l.s8.bf16 %v3044
    %v3161 = vunpack.c.l.s8.bf16 %v3045
    %v3162 = vunpack.c.h.s8.bf16 %v3042
    %v3163 = vunpack.c.h.s8.bf16 %v3043
    %v3164 = vunpack.c.h.s8.bf16 %v3044
    %v3165 = vunpack.c.h.s8.bf16 %v3045
    %v3166 = vunpack.c.l.s8.bf16 %v3046
    %v3167 = vunpack.c.l.s8.bf16 %v3047
    %v3168 = vunpack.c.l.s8.bf16 %v3048
    %v3169 = vunpack.c.l.s8.bf16 %v3049
    %v3170 = vunpack.c.h.s8.bf16 %v3046
    %v3171 = vunpack.c.h.s8.bf16 %v3047
    %v3172 = vunpack.c.h.s8.bf16 %v3048
    %v3173 = vunpack.c.h.s8.bf16 %v3049
    %v3174 = vunpack.c.l.s8.bf16 %v3050
    %v3175 = vunpack.c.l.s8.bf16 %v3051
    %v3176 = vunpack.c.l.s8.bf16 %v3052
    %v3177 = vunpack.c.l.s8.bf16 %v3053
    %v3178 = vunpack.c.h.s8.bf16 %v3050
    %v3179 = vunpack.c.h.s8.bf16 %v3051
    %v3180 = vunpack.c.h.s8.bf16 %v3052
    %v3181 = vunpack.c.h.s8.bf16 %v3053
    %3182 = vmatprep.subr.bf16.mxu0 %v3055
    %3183 = vmatpush1.bf16.msra.mxu0 %v3054
    %3184 = vmatprep.subr.bf16.mxu0 %v3059
    %3185 = vmatpush1.bf16.msra.mxu0 %v3058
    %3186 = vmatprep.subr.bf16.mxu0 %v3063
    %3187 = vmatpush1.bf16.msra.mxu0 %v3062
    %3188 = vmatprep.subr.bf16.mxu0 %v3067
    %3189 = vmatpush1.bf16.msra.mxu0 %v3066
    %3190 = vmatprep.subr.bf16.mxu0 %v3071
    %3191 = vmatpush1.bf16.msra.mxu0 %v3070
    %3192 = vmatprep.subr.bf16.mxu0 %v3075
    %3193 = vmatpush1.bf16.msra.mxu0 %v3074
    %3194 = vmatprep.subr.bf16.mxu0 %v3079
    %3195 = vmatpush1.bf16.msra.mxu0 %v3078
    %3196 = vmatprep.subr.bf16.mxu0 %v3083
    %3197 = vmatpush1.bf16.msra.mxu0 %v3082
    %3198 = vmatprep.subr.bf16.mxu0 %v3087
    %3199 = vmatpush1.bf16.msra.mxu0 %v3086
    %3200 = vmatprep.subr.bf16.mxu0 %v3091
    %3201 = vmatpush1.bf16.msra.mxu0 %v3090
    %3202 = vmatprep.subr.bf16.mxu0 %v3095
    %3203 = vmatpush1.bf16.msra.mxu0 %v3094
    %3204 = vmatprep.subr.bf16.mxu0 %v3099
    %3205 = vmatpush1.bf16.msra.mxu0 %v3098
    %3206 = vmatprep.subr.bf16.mxu0 %v3103
    %3207 = vmatpush1.bf16.msra.mxu0 %v3102
    %3208 = vmatprep.subr.bf16.mxu0 %v3107
    %3209 = vmatpush1.bf16.msra.mxu0 %v3106
    %3210 = vmatprep.subr.bf16.mxu0 %v3111
    %3211 = vmatpush1.bf16.msra.mxu0 %v3110
    %3212 = vmatprep.subr.bf16.mxu0 %v3115
    %3213 = vmatpush1.bf16.msra.mxu0 %v3114
    %3214 = vmatprep.mubr.bf16.mxu0 %v2567
    %3215 = vmatmul.mubr.bf16.gmra.mrb[0].mxu0 %v2566
    %v3216 = vpop.f32.mrb[0].mxu0
    %v3217 = vadd.f32 0.0, %v3216
    %v3218 = vpop.f32.mrb[0].mxu0
    %v3219 = vadd.f32 0.0, %v3218
    %v3220 = vpop.f32.mrb[0].mxu0
    %v3221 = vpop.f32.mrb[0].mxu0
    %3222 = vdwg.mxu0
    %3223 = vmatprep.subr.bf16.mxu0 %v3119
    %3224 = vmatpush1.bf16.msra.mxu0 %v3118
    %3225 = vmatprep.subr.bf16.mxu0 %v3123
    %3226 = vmatpush1.bf16.msra.mxu0 %v3122
    %3227 = vmatprep.subr.bf16.mxu0 %v3127
    %3228 = vmatpush1.bf16.msra.mxu0 %v3126
    %3229 = vmatprep.subr.bf16.mxu0 %v3131
    %3230 = vmatpush1.bf16.msra.mxu0 %v3130
    %3231 = vmatprep.subr.bf16.mxu0 %v3135
    %3232 = vmatpush1.bf16.msra.mxu0 %v3134
    %3233 = vmatprep.subr.bf16.mxu0 %v3139
    %3234 = vmatpush1.bf16.msra.mxu0 %v3138
    %3235 = vmatprep.subr.bf16.mxu0 %v3143
    %3236 = vmatpush1.bf16.msra.mxu0 %v3142
    %3237 = vmatprep.subr.bf16.mxu0 %v3147
    %3238 = vmatpush1.bf16.msra.mxu0 %v3146
    %3239 = vmatprep.subr.bf16.mxu0 %v3151
    %3240 = vmatpush1.bf16.msra.mxu0 %v3150
    %3241 = vmatprep.subr.bf16.mxu0 %v3155
    %3242 = vmatpush1.bf16.msra.mxu0 %v3154
    %3243 = vmatprep.subr.bf16.mxu0 %v3159
    %3244 = vmatpush1.bf16.msra.mxu0 %v3158
    %3245 = vmatprep.subr.bf16.mxu0 %v3163
    %3246 = vmatpush1.bf16.msra.mxu0 %v3162
    %3247 = vmatprep.subr.bf16.mxu0 %v3167
    %3248 = vmatpush1.bf16.msra.mxu0 %v3166
    %3249 = vmatprep.subr.bf16.mxu0 %v3171
    %3250 = vmatpush1.bf16.msra.mxu0 %v3170
    %3251 = vmatprep.subr.bf16.mxu0 %v3175
    %3252 = vmatpush1.bf16.msra.mxu0 %v3174
    %3253 = vmatprep.subr.bf16.mxu0 %v3179
    %3254 = vmatpush1.bf16.msra.mxu0 %v3178
    %3255 = vmatprep.mubr.bf16.mxu0 %v2569
    %3256 = vmatmul.mubr.bf16.gmra.mrb[0].mxu0 %v2568
    %v3257 = vpop.f32.mrb[0].mxu0
    %v3258 = vadd.f32 %v3217, %v3257
    %v3259 = vpop.f32.mrb[0].mxu0
    %v3260 = vadd.f32 %v3219, %v3259
    %v3261 = vpop.f32.mrb[0].mxu0
    %v3262 = vpop.f32.mrb[0].mxu0
    %3263 = vdwg.mxu0
    %3264 = vmatprep.subr.bf16.mxu0 %v3057
    %3265 = vmatpush1.bf16.msra.mxu0 %v3056
    %3266 = vmatprep.subr.bf16.mxu0 %v3061
    %3267 = vmatpush1.bf16.msra.mxu0 %v3060
    %3268 = vmatprep.subr.bf16.mxu0 %v3065
    %3269 = vmatpush1.bf16.msra.mxu0 %v3064
    %3270 = vmatprep.subr.bf16.mxu0 %v3069
    %3271 = vmatpush1.bf16.msra.mxu0 %v3068
    %3272 = vmatprep.subr.bf16.mxu0 %v3073
    %3273 = vmatpush1.bf16.msra.mxu0 %v3072
    %3274 = vmatprep.subr.bf16.mxu0 %v3077
    %3275 = vmatpush1.bf16.msra.mxu0 %v3076
    %3276 = vmatprep.subr.bf16.mxu0 %v3081
    %3277 = vmatpush1.bf16.msra.mxu0 %v3080
    %3278 = vmatprep.subr.bf16.mxu0 %v3085
    %3279 = vmatpush1.bf16.msra.mxu0 %v3084
    %3280 = vmatprep.subr.bf16.mxu0 %v3089
    %3281 = vmatpush1.bf16.msra.mxu0 %v3088
    %3282 = vmatprep.subr.bf16.mxu0 %v3093
    %3283 = vmatpush1.bf16.msra.mxu0 %v3092
    %3284 = vmatprep.subr.bf16.mxu0 %v3097
    %3285 = vmatpush1.bf16.msra.mxu0 %v3096
    %3286 = vmatprep.subr.bf16.mxu0 %v3101
    %3287 = vmatpush1.bf16.msra.mxu0 %v3100
    %3288 = vmatprep.subr.bf16.mxu0 %v3105
    %3289 = vmatpush1.bf16.msra.mxu0 %v3104
    %3290 = vmatprep.subr.bf16.mxu0 %v3109
    %3291 = vmatpush1.bf16.msra.mxu0 %v3108
    %3292 = vmatprep.subr.bf16.mxu0 %v3113
    %3293 = vmatpush1.bf16.msra.mxu0 %v3112
    %3294 = vmatprep.subr.bf16.mxu0 %v3117
    %3295 = vmatpush1.bf16.msra.mxu0 %v3116
    %3296 = vmatprep.mubr.bf16.mxu0 %v2567
    %3297 = vmatmul.mubr.bf16.gmra.mrb[0].mxu0 %v2566
    %v3298 = vpop.f32.mrb[0].mxu0
    %v3299 = vadd.f32 0.0, %v3298
    %v3300 = vpop.f32.mrb[0].mxu0
    %v3301 = vadd.f32 0.0, %v3300
    %v3302 = vpop.f32.mrb[0].mxu0
    %v3303 = vpop.f32.mrb[0].mxu0
    %3304 = vdwg.mxu0
    %3305 = vmatprep.subr.bf16.mxu0 %v3121
    %3306 = vmatpush1.bf16.msra.mxu0 %v3120
    %3307 = vmatprep.subr.bf16.mxu0 %v3125
    %3308 = vmatpush1.bf16.msra.mxu0 %v3124
    %3309 = vmatprep.subr.bf16.mxu0 %v3129
    %3310 = vmatpush1.bf16.msra.mxu0 %v3128
    %3311 = vmatprep.subr.bf16.mxu0 %v3133
    %3312 = vmatpush1.bf16.msra.mxu0 %v3132
    %3313 = vmatprep.subr.bf16.mxu0 %v3137
    %3314 = vmatpush1.bf16.msra.mxu0 %v3136
    %3315 = vmatprep.subr.bf16.mxu0 %v3141
    %3316 = vmatpush1.bf16.msra.mxu0 %v3140
    %3317 = vmatprep.subr.bf16.mxu0 %v3145
    %3318 = vmatpush1.bf16.msra.mxu0 %v3144
    %3319 = vmatprep.subr.bf16.mxu0 %v3149
    %3320 = vmatpush1.bf16.msra.mxu0 %v3148
    %3321 = vmatprep.subr.bf16.mxu0 %v3153
    %3322 = vmatpush1.bf16.msra.mxu0 %v3152
    %3323 = vmatprep.subr.bf16.mxu0 %v3157
    %3324 = vmatpush1.bf16.msra.mxu0 %v3156
    %3325 = vmatprep.subr.bf16.mxu0 %v3161
    %3326 = vmatpush1.bf16.msra.mxu0 %v3160
    %3327 = vmatprep.subr.bf16.mxu0 %v3165
    %3328 = vmatpush1.bf16.msra.mxu0 %v3164
    %3329 = vmatprep.subr.bf16.mxu0 %v3169
    %3330 = vmatpush1.bf16.msra.mxu0 %v3168
    %3331 = vmatprep.subr.bf16.mxu0 %v3173
    %3332 = vmatpush1.bf16.msra.mxu0 %v3172
    %3333 = vmatprep.subr.bf16.mxu0 %v3177
    %3334 = vmatpush1.bf16.msra.mxu0 %v3176
    %3335 = vmatprep.subr.bf16.mxu0 %v3181
    %3336 = vmatpush1.bf16.msra.mxu0 %v3180
    %3337 = vmatprep.mubr.bf16.mxu0 %v2569
    %3338 = vmatmul.mubr.bf16.gmra.mrb[0].mxu0 %v2568
    %v3339 = vpop.f32.mrb[0].mxu0
    %v3340 = vadd.f32 %v3299, %v3339
    %v3341 = vpop.f32.mrb[0].mxu0
    %v3342 = vadd.f32 %v3301, %v3341
    %v3343 = vpop.f32.mrb[0].mxu0
    %v3344 = vpop.f32.mrb[0].mxu0
    %3345 = vdwg.mxu0
    %v3346 = vld [vmem:[%s1 + $0x37] sm:$0xf]
    %v3348 = vlaneseq
    %v3349 = vshrl.u32 %v3348, 7
    %v3350 = vsub.s32 0, %v3349
    %v3351 = vrot.slane %v3346, %v3350
    %v3352 = vlaneseq
    %v3353 = vshrl.u32 %v3352, 7
    %v3354 = vsub.s32 1, %v3353
    %v3355 = vrot.slane %v3346, %v3354
    %v3356 = vlaneseq
    %v3357 = vshrl.u32 %v3356, 7
    %v3358 = vsub.s32 2, %v3357
    %v3359 = vrot.slane %v3346, %v3358
    %v3360 = vlaneseq
    %v3361 = vshrl.u32 %v3360, 7
    %v3362 = vsub.s32 3, %v3361
    %v3363 = vrot.slane %v3346, %v3362
    %v3368 = vmul.f32 %v3258, %v3351
    %v3369 = vmul.f32 %v3260, %v3355
    %v3370 = vmul.f32 %v3340, %v3359
    %v3371 = vmul.f32 %v3342, %v3363
    %v3372 = vld [vmem:[%s1 + $0x23] sm:$0xf]
    %v3374 = vlaneseq
    %v3375 = vshrl.u32 %v3374, 7
    %v3376 = vsub.s32 0, %v3375
    %v3377 = vrot.slane %v3372, %v3376
    %v3378 = vlaneseq
    %v3379 = vshrl.u32 %v3378, 7
    %v3380 = vsub.s32 1, %v3379
    %v3381 = vrot.slane %v3372, %v3380
    %v3382 = vlaneseq
    %v3383 = vshrl.u32 %v3382, 7
    %v3384 = vsub.s32 2, %v3383
    %v3385 = vrot.slane %v3372, %v3384
    %v3386 = vlaneseq
    %v3387 = vshrl.u32 %v3386, 7
    %v3388 = vsub.s32 3, %v3387
    %v3389 = vrot.slane %v3372, %v3388
    %v3394 = vadd.f32 %v3368, %v3377
    %v3395 = vadd.f32 %v3369, %v3381
    %v3396 = vadd.f32 %v3370, %v3385
    %v3397 = vadd.f32 %v3371, %v3389
    %v3398 = vtanh.pop %v3394
    %v3399 = vtanh.pop %v3395
    %v3400 = vtanh.pop %v3396
    %v3401 = vtanh.pop %v3397
    %3402 = vst [vmem:[#allocation14 + $0x20] sm:$0xff] %v3398
    %3403 = vst [vmem:[#allocation14 + $0x28] sm:$0xff] %v3399
    %3404 = vst [vmem:[#allocation14 + $0x30] sm:$0xff] %v3400
    %3405 = vst [vmem:[#allocation14 + $0x38] sm:$0xff] %v3401
    %s3406 = sshll.u32 %s287, 4
    %3407 = dma.done %s260, %s3406
    %v3408 = vld [vmem:[%s259] sm:$0xff]
    %v3409 = vld [vmem:[%s259 + $0x8] sm:$0xff]
    %v3410 = vld [vmem:[%s259 + $0x10] sm:$0xff]
    %v3411 = vld [vmem:[%s259 + $0x18] sm:$0xff]
    %v3412 = vld [vmem:[%s259 + $0x20] sm:$0xff]
    %v3413 = vld [vmem:[%s259 + $0x28] sm:$0xff]
    %v3414 = vld [vmem:[%s259 + $0x30] sm:$0xff]
    %v3415 = vld [vmem:[%s259 + $0x38] sm:$0xff]
    %v3416 = vld [vmem:[%s259 + $0x40] sm:$0xff]
    %v3417 = vld [vmem:[%s259 + $0x48] sm:$0xff]
    %v3418 = vld [vmem:[%s259 + $0x50] sm:$0xff]
    %v3419 = vld [vmem:[%s259 + $0x58] sm:$0xff]
    %v3420 = vld [vmem:[%s259 + $0x60] sm:$0xff]
    %v3421 = vld [vmem:[%s259 + $0x68] sm:$0xff]
    %v3422 = vld [vmem:[%s259 + $0x70] sm:$0xff]
    %v3423 = vld [vmem:[%s259 + $0x78] sm:$0xff]
    %v3424 = vld [vmem:[%s259 + $0x80] sm:$0xff]
    %v3425 = vld [vmem:[%s259 + $0x88] sm:$0xff]
    %v3426 = vld [vmem:[%s259 + $0x90] sm:$0xff]
    %v3427 = vld [vmem:[%s259 + $0x98] sm:$0xff]
    %v3428 = vld [vmem:[%s259 + $0xa0] sm:$0xff]
    %v3429 = vld [vmem:[%s259 + $0xa8] sm:$0xff]
    %v3430 = vld [vmem:[%s259 + $0xb0] sm:$0xff]
    %v3431 = vld [vmem:[%s259 + $0xb8] sm:$0xff]
    %v3432 = vld [vmem:[%s259 + $0xc0] sm:$0xff]
    %v3433 = vld [vmem:[%s259 + $0xc8] sm:$0xff]
    %v3434 = vld [vmem:[%s259 + $0xd0] sm:$0xff]
    %v3435 = vld [vmem:[%s259 + $0xd8] sm:$0xff]
    %v3436 = vld [vmem:[%s259 + $0xe0] sm:$0xff]
    %v3437 = vld [vmem:[%s259 + $0xe8] sm:$0xff]
    %v3438 = vld [vmem:[%s259 + $0xf0] sm:$0xff]
    %v3439 = vld [vmem:[%s259 + $0xf8] sm:$0xff]
    %v3440 = vld [vmem:[%s259 + $0x100] sm:$0xff]
    %v3441 = vld [vmem:[%s259 + $0x108] sm:$0xff]
    %v3442 = vld [vmem:[%s259 + $0x110] sm:$0xff]
    %v3443 = vld [vmem:[%s259 + $0x118] sm:$0xff]
    %v3444 = vld [vmem:[%s259 + $0x120] sm:$0xff]
    %v3445 = vld [vmem:[%s259 + $0x128] sm:$0xff]
    %v3446 = vld [vmem:[%s259 + $0x130] sm:$0xff]
    %v3447 = vld [vmem:[%s259 + $0x138] sm:$0xff]
    %v3448 = vld [vmem:[%s259 + $0x140] sm:$0xff]
    %v3449 = vld [vmem:[%s259 + $0x148] sm:$0xff]
    %v3450 = vld [vmem:[%s259 + $0x150] sm:$0xff]
    %v3451 = vld [vmem:[%s259 + $0x158] sm:$0xff]
    %v3452 = vld [vmem:[%s259 + $0x160] sm:$0xff]
    %v3453 = vld [vmem:[%s259 + $0x168] sm:$0xff]
    %v3454 = vld [vmem:[%s259 + $0x170] sm:$0xff]
    %v3455 = vld [vmem:[%s259 + $0x178] sm:$0xff]
    %v3456 = vld [vmem:[%s259 + $0x180] sm:$0xff]
    %v3457 = vld [vmem:[%s259 + $0x188] sm:$0xff]
    %v3458 = vld [vmem:[%s259 + $0x190] sm:$0xff]
    %v3459 = vld [vmem:[%s259 + $0x198] sm:$0xff]
    %v3460 = vld [vmem:[%s259 + $0x1a0] sm:$0xff]
    %v3461 = vld [vmem:[%s259 + $0x1a8] sm:$0xff]
    %v3462 = vld [vmem:[%s259 + $0x1b0] sm:$0xff]
    %v3463 = vld [vmem:[%s259 + $0x1b8] sm:$0xff]
    %v3464 = vld [vmem:[%s259 + $0x1c0] sm:$0xff]
    %v3465 = vld [vmem:[%s259 + $0x1c8] sm:$0xff]
    %v3466 = vld [vmem:[%s259 + $0x1d0] sm:$0xff]
    %v3467 = vld [vmem:[%s259 + $0x1d8] sm:$0xff]
    %v3468 = vld [vmem:[%s259 + $0x1e0] sm:$0xff]
    %v3469 = vld [vmem:[%s259 + $0x1e8] sm:$0xff]
    %v3470 = vld [vmem:[%s259 + $0x1f0] sm:$0xff]
    %v3471 = vld [vmem:[%s259 + $0x1f8] sm:$0xff]
    %v3472 = vunpack.c.l.s8.bf16 %v3408
    %v3473 = vunpack.c.l.s8.bf16 %v3409
    %v3474 = vunpack.c.l.s8.bf16 %v3410
    %v3475 = vunpack.c.l.s8.bf16 %v3411
    %v3476 = vunpack.c.h.s8.bf16 %v3408
    %v3477 = vunpack.c.h.s8.bf16 %v3409
    %v3478 = vunpack.c.h.s8.bf16 %v3410
    %v3479 = vunpack.c.h.s8.bf16 %v3411
    %v3480 = vunpack.c.l.s8.bf16 %v3412
    %v3481 = vunpack.c.l.s8.bf16 %v3413
    %v3482 = vunpack.c.l.s8.bf16 %v3414
    %v3483 = vunpack.c.l.s8.bf16 %v3415
    %v3484 = vunpack.c.h.s8.bf16 %v3412
    %v3485 = vunpack.c.h.s8.bf16 %v3413
    %v3486 = vunpack.c.h.s8.bf16 %v3414
    %v3487 = vunpack.c.h.s8.bf16 %v3415
    %v3488 = vunpack.c.l.s8.bf16 %v3416
    %v3489 = vunpack.c.l.s8.bf16 %v3417
    %v3490 = vunpack.c.l.s8.bf16 %v3418
    %v3491 = vunpack.c.l.s8.bf16 %v3419
    %v3492 = vunpack.c.h.s8.bf16 %v3416
    %v3493 = vunpack.c.h.s8.bf16 %v3417
    %v3494 = vunpack.c.h.s8.bf16 %v3418
    %v3495 = vunpack.c.h.s8.bf16 %v3419
    %v3496 = vunpack.c.l.s8.bf16 %v3420
    %v3497 = vunpack.c.l.s8.bf16 %v3421
    %v3498 = vunpack.c.l.s8.bf16 %v3422
    %v3499 = vunpack.c.l.s8.bf16 %v3423
    %v3500 = vunpack.c.h.s8.bf16 %v3420
    %v3501 = vunpack.c.h.s8.bf16 %v3421
    %v3502 = vunpack.c.h.s8.bf16 %v3422
    %v3503 = vunpack.c.h.s8.bf16 %v3423
    %v3504 = vunpack.c.l.s8.bf16 %v3424
    %v3505 = vunpack.c.l.s8.bf16 %v3425
    %v3506 = vunpack.c.l.s8.bf16 %v3426
    %v3507 = vunpack.c.l.s8.bf16 %v3427
    %v3508 = vunpack.c.h.s8.bf16 %v3424
    %v3509 = vunpack.c.h.s8.bf16 %v3425
    %v3510 = vunpack.c.h.s8.bf16 %v3426
    %v3511 = vunpack.c.h.s8.bf16 %v3427
    %v3512 = vunpack.c.l.s8.bf16 %v3428
    %v3513 = vunpack.c.l.s8.bf16 %v3429
    %v3514 = vunpack.c.l.s8.bf16 %v3430
    %v3515 = vunpack.c.l.s8.bf16 %v3431
    %v3516 = vunpack.c.h.s8.bf16 %v3428
    %v3517 = vunpack.c.h.s8.bf16 %v3429
    %v3518 = vunpack.c.h.s8.bf16 %v3430
    %v3519 = vunpack.c.h.s8.bf16 %v3431
    %v3520 = vunpack.c.l.s8.bf16 %v3432
    %v3521 = vunpack.c.l.s8.bf16 %v3433
    %v3522 = vunpack.c.l.s8.bf16 %v3434
    %v3523 = vunpack.c.l.s8.bf16 %v3435
    %v3524 = vunpack.c.h.s8.bf16 %v3432
    %v3525 = vunpack.c.h.s8.bf16 %v3433
    %v3526 = vunpack.c.h.s8.bf16 %v3434
    %v3527 = vunpack.c.h.s8.bf16 %v3435
    %v3528 = vunpack.c.l.s8.bf16 %v3436
    %v3529 = vunpack.c.l.s8.bf16 %v3437
    %v3530 = vunpack.c.l.s8.bf16 %v3438
    %v3531 = vunpack.c.l.s8.bf16 %v3439
    %v3532 = vunpack.c.h.s8.bf16 %v3436
    %v3533 = vunpack.c.h.s8.bf16 %v3437
    %v3534 = vunpack.c.h.s8.bf16 %v3438
    %v3535 = vunpack.c.h.s8.bf16 %v3439
    %v3536 = vunpack.c.l.s8.bf16 %v3440
    %v3537 = vunpack.c.l.s8.bf16 %v3441
    %v3538 = vunpack.c.l.s8.bf16 %v3442
    %v3539 = vunpack.c.l.s8.bf16 %v3443
    %v3540 = vunpack.c.h.s8.bf16 %v3440
    %v3541 = vunpack.c.h.s8.bf16 %v3441
    %v3542 = vunpack.c.h.s8.bf16 %v3442
    %v3543 = vunpack.c.h.s8.bf16 %v3443
    %v3544 = vunpack.c.l.s8.bf16 %v3444
    %v3545 = vunpack.c.l.s8.bf16 %v3445
    %v3546 = vunpack.c.l.s8.bf16 %v3446
    %v3547 = vunpack.c.l.s8.bf16 %v3447
    %v3548 = vunpack.c.h.s8.bf16 %v3444
    %v3549 = vunpack.c.h.s8.bf16 %v3445
    %v3550 = vunpack.c.h.s8.bf16 %v3446
    %v3551 = vunpack.c.h.s8.bf16 %v3447
    %v3552 = vunpack.c.l.s8.bf16 %v3448
    %v3553 = vunpack.c.l.s8.bf16 %v3449
    %v3554 = vunpack.c.l.s8.bf16 %v3450
    %v3555 = vunpack.c.l.s8.bf16 %v3451
    %v3556 = vunpack.c.h.s8.bf16 %v3448
    %v3557 = vunpack.c.h.s8.bf16 %v3449
    %v3558 = vunpack.c.h.s8.bf16 %v3450
    %v3559 = vunpack.c.h.s8.bf16 %v3451
    %v3560 = vunpack.c.l.s8.bf16 %v3452
    %v3561 = vunpack.c.l.s8.bf16 %v3453
    %v3562 = vunpack.c.l.s8.bf16 %v3454
    %v3563 = vunpack.c.l.s8.bf16 %v3455
    %v3564 = vunpack.c.h.s8.bf16 %v3452
    %v3565 = vunpack.c.h.s8.bf16 %v3453
    %v3566 = vunpack.c.h.s8.bf16 %v3454
    %v3567 = vunpack.c.h.s8.bf16 %v3455
    %v3568 = vunpack.c.l.s8.bf16 %v3456
    %v3569 = vunpack.c.l.s8.bf16 %v3457
    %v3570 = vunpack.c.l.s8.bf16 %v3458
    %v3571 = vunpack.c.l.s8.bf16 %v3459
    %v3572 = vunpack.c.h.s8.bf16 %v3456
    %v3573 = vunpack.c.h.s8.bf16 %v3457
    %v3574 = vunpack.c.h.s8.bf16 %v3458
    %v3575 = vunpack.c.h.s8.bf16 %v3459
    %v3576 = vunpack.c.l.s8.bf16 %v3460
    %v3577 = vunpack.c.l.s8.bf16 %v3461
    %v3578 = vunpack.c.l.s8.bf16 %v3462
    %v3579 = vunpack.c.l.s8.bf16 %v3463
    %v3580 = vunpack.c.h.s8.bf16 %v3460
    %v3581 = vunpack.c.h.s8.bf16 %v3461
    %v3582 = vunpack.c.h.s8.bf16 %v3462
    %v3583 = vunpack.c.h.s8.bf16 %v3463
    %v3584 = vunpack.c.l.s8.bf16 %v3464
    %v3585 = vunpack.c.l.s8.bf16 %v3465
    %v3586 = vunpack.c.l.s8.bf16 %v3466
    %v3587 = vunpack.c.l.s8.bf16 %v3467
    %v3588 = vunpack.c.h.s8.bf16 %v3464
    %v3589 = vunpack.c.h.s8.bf16 %v3465
    %v3590 = vunpack.c.h.s8.bf16 %v3466
    %v3591 = vunpack.c.h.s8.bf16 %v3467
    %v3592 = vunpack.c.l.s8.bf16 %v3468
    %v3593 = vunpack.c.l.s8.bf16 %v3469
    %v3594 = vunpack.c.l.s8.bf16 %v3470
    %v3595 = vunpack.c.l.s8.bf16 %v3471
    %v3596 = vunpack.c.h.s8.bf16 %v3468
    %v3597 = vunpack.c.h.s8.bf16 %v3469
    %v3598 = vunpack.c.h.s8.bf16 %v3470
    %v3599 = vunpack.c.h.s8.bf16 %v3471
    %3600 = vmatprep.subr.bf16.mxu0 %v3473
    %3601 = vmatpush1.bf16.msra.mxu0 %v3472
    %3602 = vmatprep.subr.bf16.mxu0 %v3477
    %3603 = vmatpush1.bf16.msra.mxu0 %v3476
    %3604 = vmatprep.subr.bf16.mxu0 %v3481
    %3605 = vmatpush1.bf16.msra.mxu0 %v3480
    %3606 = vmatprep.subr.bf16.mxu0 %v3485
    %3607 = vmatpush1.bf16.msra.mxu0 %v3484
    %3608 = vmatprep.subr.bf16.mxu0 %v3489
    %3609 = vmatpush1.bf16.msra.mxu0 %v3488
    %3610 = vmatprep.subr.bf16.mxu0 %v3493
    %3611 = vmatpush1.bf16.msra.mxu0 %v3492
    %3612 = vmatprep.subr.bf16.mxu0 %v3497
    %3613 = vmatpush1.bf16.msra.mxu0 %v3496
    %3614 = vmatprep.subr.bf16.mxu0 %v3501
    %3615 = vmatpush1.bf16.msra.mxu0 %v3500
    %3616 = vmatprep.subr.bf16.mxu0 %v3505
    %3617 = vmatpush1.bf16.msra.mxu0 %v3504
    %3618 = vmatprep.subr.bf16.mxu0 %v3509
    %3619 = vmatpush1.bf16.msra.mxu0 %v3508
    %3620 = vmatprep.subr.bf16.mxu0 %v3513
    %3621 = vmatpush1.bf16.msra.mxu0 %v3512
    %3622 = vmatprep.subr.bf16.mxu0 %v3517
    %3623 = vmatpush1.bf16.msra.mxu0 %v3516
    %3624 = vmatprep.subr.bf16.mxu0 %v3521
    %3625 = vmatpush1.bf16.msra.mxu0 %v3520
    %3626 = vmatprep.subr.bf16.mxu0 %v3525
    %3627 = vmatpush1.bf16.msra.mxu0 %v3524
    %3628 = vmatprep.subr.bf16.mxu0 %v3529
    %3629 = vmatpush1.bf16.msra.mxu0 %v3528
    %3630 = vmatprep.subr.bf16.mxu0 %v3533
    %3631 = vmatpush1.bf16.msra.mxu0 %v3532
    %3632 = vmatprep.mubr.bf16.mxu0 %v2567
    %3633 = vmatmul.mubr.bf16.gmra.mrb[0].mxu0 %v2566
    %v3634 = vpop.f32.mrb[0].mxu0
    %v3635 = vadd.f32 0.0, %v3634
    %v3636 = vpop.f32.mrb[0].mxu0
    %v3637 = vadd.f32 0.0, %v3636
    %v3638 = vpop.f32.mrb[0].mxu0
    %v3639 = vpop.f32.mrb[0].mxu0
    %3640 = vdwg.mxu0
    %3641 = vmatprep.subr.bf16.mxu0 %v3537
    %3642 = vmatpush1.bf16.msra.mxu0 %v3536
    %3643 = vmatprep.subr.bf16.mxu0 %v3541
    %3644 = vmatpush1.bf16.msra.mxu0 %v3540
    %3645 = vmatprep.subr.bf16.mxu0 %v3545
    %3646 = vmatpush1.bf16.msra.mxu0 %v3544
    %3647 = vmatprep.subr.bf16.mxu0 %v3549
    %3648 = vmatpush1.bf16.msra.mxu0 %v3548
    %3649 = vmatprep.subr.bf16.mxu0 %v3553
    %3650 = vmatpush1.bf16.msra.mxu0 %v3552
    %3651 = vmatprep.subr.bf16.mxu0 %v3557
    %3652 = vmatpush1.bf16.msra.mxu0 %v3556
    %3653 = vmatprep.subr.bf16.mxu0 %v3561
    %3654 = vmatpush1.bf16.msra.mxu0 %v3560
    %3655 = vmatprep.subr.bf16.mxu0 %v3565
    %3656 = vmatpush1.bf16.msra.mxu0 %v3564
    %3657 = vmatprep.subr.bf16.mxu0 %v3569
    %3658 = vmatpush1.bf16.msra.mxu0 %v3568
    %3659 = vmatprep.subr.bf16.mxu0 %v3573
    %3660 = vmatpush1.bf16.msra.mxu0 %v3572
    %3661 = vmatprep.subr.bf16.mxu0 %v3577
    %3662 = vmatpush1.bf16.msra.mxu0 %v3576
    %3663 = vmatprep.subr.bf16.mxu0 %v3581
    %3664 = vmatpush1.bf16.msra.mxu0 %v3580
    %3665 = vmatprep.subr.bf16.mxu0 %v3585
    %3666 = vmatpush1.bf16.msra.mxu0 %v3584
    %3667 = vmatprep.subr.bf16.mxu0 %v3589
    %3668 = vmatpush1.bf16.msra.mxu0 %v3588
    %3669 = vmatprep.subr.bf16.mxu0 %v3593
    %3670 = vmatpush1.bf16.msra.mxu0 %v3592
    %3671 = vmatprep.subr.bf16.mxu0 %v3597
    %3672 = vmatpush1.bf16.msra.mxu0 %v3596
    %3673 = vmatprep.mubr.bf16.mxu0 %v2569
    %3674 = vmatmul.mubr.bf16.gmra.mrb[0].mxu0 %v2568
    %v3675 = vpop.f32.mrb[0].mxu0
    %v3676 = vadd.f32 %v3635, %v3675
    %v3677 = vpop.f32.mrb[0].mxu0
    %v3678 = vadd.f32 %v3637, %v3677
    %v3679 = vpop.f32.mrb[0].mxu0
    %v3680 = vpop.f32.mrb[0].mxu0
    %3681 = vdwg.mxu0
    %3682 = vmatprep.subr.bf16.mxu0 %v3475
    %3683 = vmatpush1.bf16.msra.mxu0 %v3474
    %3684 = vmatprep.subr.bf16.mxu0 %v3479
    %3685 = vmatpush1.bf16.msra.mxu0 %v3478
    %3686 = vmatprep.subr.bf16.mxu0 %v3483
    %3687 = vmatpush1.bf16.msra.mxu0 %v3482
    %3688 = vmatprep.subr.bf16.mxu0 %v3487
    %3689 = vmatpush1.bf16.msra.mxu0 %v3486
    %3690 = vmatprep.subr.bf16.mxu0 %v3491
    %3691 = vmatpush1.bf16.msra.mxu0 %v3490
    %3692 = vmatprep.subr.bf16.mxu0 %v3495
    %3693 = vmatpush1.bf16.msra.mxu0 %v3494
    %3694 = vmatprep.subr.bf16.mxu0 %v3499
    %3695 = vmatpush1.bf16.msra.mxu0 %v3498
    %3696 = vmatprep.subr.bf16.mxu0 %v3503
    %3697 = vmatpush1.bf16.msra.mxu0 %v3502
    %3698 = vmatprep.subr.bf16.mxu0 %v3507
    %3699 = vmatpush1.bf16.msra.mxu0 %v3506
    %3700 = vmatprep.subr.bf16.mxu0 %v3511
    %3701 = vmatpush1.bf16.msra.mxu0 %v3510
    %3702 = vmatprep.subr.bf16.mxu0 %v3515
    %3703 = vmatpush1.bf16.msra.mxu0 %v3514
    %3704 = vmatprep.subr.bf16.mxu0 %v3519
    %3705 = vmatpush1.bf16.msra.mxu0 %v3518
    %3706 = vmatprep.subr.bf16.mxu0 %v3523
    %3707 = vmatpush1.bf16.msra.mxu0 %v3522
    %3708 = vmatprep.subr.bf16.mxu0 %v3527
    %3709 = vmatpush1.bf16.msra.mxu0 %v3526
    %3710 = vmatprep.subr.bf16.mxu0 %v3531
    %3711 = vmatpush1.bf16.msra.mxu0 %v3530
    %3712 = vmatprep.subr.bf16.mxu0 %v3535
    %3713 = vmatpush1.bf16.msra.mxu0 %v3534
    %3714 = vmatprep.mubr.bf16.mxu0 %v2567
    %3715 = vmatmul.mubr.bf16.gmra.mrb[0].mxu0 %v2566
    %v3716 = vpop.f32.mrb[0].mxu0
    %v3717 = vadd.f32 0.0, %v3716
    %v3718 = vpop.f32.mrb[0].mxu0
    %v3719 = vadd.f32 0.0, %v3718
    %v3720 = vpop.f32.mrb[0].mxu0
    %v3721 = vpop.f32.mrb[0].mxu0
    %3722 = vdwg.mxu0
    %3723 = vmatprep.subr.bf16.mxu0 %v3539
    %3724 = vmatpush1.bf16.msra.mxu0 %v3538
    %3725 = vmatprep.subr.bf16.mxu0 %v3543
    %3726 = vmatpush1.bf16.msra.mxu0 %v3542
    %3727 = vmatprep.subr.bf16.mxu0 %v3547
    %3728 = vmatpush1.bf16.msra.mxu0 %v3546
    %3729 = vmatprep.subr.bf16.mxu0 %v3551
    %3730 = vmatpush1.bf16.msra.mxu0 %v3550
    %3731 = vmatprep.subr.bf16.mxu0 %v3555
    %3732 = vmatpush1.bf16.msra.mxu0 %v3554
    %3733 = vmatprep.subr.bf16.mxu0 %v3559
    %3734 = vmatpush1.bf16.msra.mxu0 %v3558
    %3735 = vmatprep.subr.bf16.mxu0 %v3563
    %3736 = vmatpush1.bf16.msra.mxu0 %v3562
    %3737 = vmatprep.subr.bf16.mxu0 %v3567
    %3738 = vmatpush1.bf16.msra.mxu0 %v3566
    %3739 = vmatprep.subr.bf16.mxu0 %v3571
    %3740 = vmatpush1.bf16.msra.mxu0 %v3570
    %3741 = vmatprep.subr.bf16.mxu0 %v3575
    %3742 = vmatpush1.bf16.msra.mxu0 %v3574
    %3743 = vmatprep.subr.bf16.mxu0 %v3579
    %3744 = vmatpush1.bf16.msra.mxu0 %v3578
    %3745 = vmatprep.subr.bf16.mxu0 %v3583
    %3746 = vmatpush1.bf16.msra.mxu0 %v3582
    %3747 = vmatprep.subr.bf16.mxu0 %v3587
    %3748 = vmatpush1.bf16.msra.mxu0 %v3586
    %3749 = vmatprep.subr.bf16.mxu0 %v3591
    %3750 = vmatpush1.bf16.msra.mxu0 %v3590
    %3751 = vmatprep.subr.bf16.mxu0 %v3595
    %3752 = vmatpush1.bf16.msra.mxu0 %v3594
    %3753 = vmatprep.subr.bf16.mxu0 %v3599
    %3754 = vmatpush1.bf16.msra.mxu0 %v3598
    %3755 = vmatprep.mubr.bf16.mxu0 %v2569
    %3756 = vmatmul.mubr.bf16.gmra.mrb[0].mxu0 %v2568
    %v3757 = vpop.f32.mrb[0].mxu0
    %v3758 = vadd.f32 %v3717, %v3757
    %v3759 = vpop.f32.mrb[0].mxu0
    %v3760 = vadd.f32 %v3719, %v3759
    %v3761 = vpop.f32.mrb[0].mxu0
    %v3762 = vpop.f32.mrb[0].mxu0
    %3763 = vdwg.mxu0
    %v3764 = vld [vmem:[%s1 + $0x3b] sm:$0xf]
    %v3766 = vlaneseq
    %v3767 = vshrl.u32 %v3766, 7
    %v3768 = vsub.s32 0, %v3767
    %v3769 = vrot.slane %v3764, %v3768
    %v3770 = vlaneseq
    %v3771 = vshrl.u32 %v3770, 7
    %v3772 = vsub.s32 1, %v3771
    %v3773 = vrot.slane %v3764, %v3772
    %v3774 = vlaneseq
    %v3775 = vshrl.u32 %v3774, 7
    %v3776 = vsub.s32 2, %v3775
    %v3777 = vrot.slane %v3764, %v3776
    %v3778 = vlaneseq
    %v3779 = vshrl.u32 %v3778, 7
    %v3780 = vsub.s32 3, %v3779
    %v3781 = vrot.slane %v3764, %v3780
    %v3786 = vmul.f32 %v3676, %v3769
    %v3787 = vmul.f32 %v3678, %v3773
    %v3788 = vmul.f32 %v3758, %v3777
    %v3789 = vmul.f32 %v3760, %v3781
    %v3790 = vld [vmem:[%s1 + $0x27] sm:$0xf]
    %v3792 = vlaneseq
    %v3793 = vshrl.u32 %v3792, 7
    %v3794 = vsub.s32 0, %v3793
    %v3795 = vrot.slane %v3790, %v3794
    %v3796 = vlaneseq
    %v3797 = vshrl.u32 %v3796, 7
    %v3798 = vsub.s32 1, %v3797
    %v3799 = vrot.slane %v3790, %v3798
    %v3800 = vlaneseq
    %v3801 = vshrl.u32 %v3800, 7
    %v3802 = vsub.s32 2, %v3801
    %v3803 = vrot.slane %v3790, %v3802
    %v3804 = vlaneseq
    %v3805 = vshrl.u32 %v3804, 7
    %v3806 = vsub.s32 3, %v3805
    %v3807 = vrot.slane %v3790, %v3806
    %v3812 = vadd.f32 %v3786, %v3795
    %v3813 = vadd.f32 %v3787, %v3799
    %v3814 = vadd.f32 %v3788, %v3803
    %v3815 = vadd.f32 %v3789, %v3807
    %v3816 = vtanh.pop %v3812
    %v3817 = vtanh.pop %v3813
    %v3818 = vtanh.pop %v3814
    %v3819 = vtanh.pop %v3815
    %3820 = vst [vmem:[#allocation14 + $0x40] sm:$0xff] %v3816
    %3821 = vst [vmem:[#allocation14 + $0x48] sm:$0xff] %v3817
    %3822 = vst [vmem:[#allocation14 + $0x50] sm:$0xff] %v3818
    %3823 = vst [vmem:[#allocation14 + $0x58] sm:$0xff] %v3819
    %s3824 = sshll.u32 %s287, 4
    %3825 = dma.done %s274, %s3824
    %v3826 = vld [vmem:[%s273] sm:$0xff]
    %v3827 = vld [vmem:[%s273 + $0x8] sm:$0xff]
    %v3828 = vld [vmem:[%s273 + $0x10] sm:$0xff]
    %v3829 = vld [vmem:[%s273 + $0x18] sm:$0xff]
    %v3830 = vld [vmem:[%s273 + $0x20] sm:$0xff]
    %v3831 = vld [vmem:[%s273 + $0x28] sm:$0xff]
    %v3832 = vld [vmem:[%s273 + $0x30] sm:$0xff]
    %v3833 = vld [vmem:[%s273 + $0x38] sm:$0xff]
    %v3834 = vld [vmem:[%s273 + $0x40] sm:$0xff]
    %v3835 = vld [vmem:[%s273 + $0x48] sm:$0xff]
    %v3836 = vld [vmem:[%s273 + $0x50] sm:$0xff]
    %v3837 = vld [vmem:[%s273 + $0x58] sm:$0xff]
    %v3838 = vld [vmem:[%s273 + $0x60] sm:$0xff]
    %v3839 = vld [vmem:[%s273 + $0x68] sm:$0xff]
    %v3840 = vld [vmem:[%s273 + $0x70] sm:$0xff]
    %v3841 = vld [vmem:[%s273 + $0x78] sm:$0xff]
    %v3842 = vld [vmem:[%s273 + $0x80] sm:$0xff]
    %v3843 = vld [vmem:[%s273 + $0x88] sm:$0xff]
    %v3844 = vld [vmem:[%s273 + $0x90] sm:$0xff]
    %v3845 = vld [vmem:[%s273 + $0x98] sm:$0xff]
    %v3846 = vld [vmem:[%s273 + $0xa0] sm:$0xff]
    %v3847 = vld [vmem:[%s273 + $0xa8] sm:$0xff]
    %v3848 = vld [vmem:[%s273 + $0xb0] sm:$0xff]
    %v3849 = vld [vmem:[%s273 + $0xb8] sm:$0xff]
    %v3850 = vld [vmem:[%s273 + $0xc0] sm:$0xff]
    %v3851 = vld [vmem:[%s273 + $0xc8] sm:$0xff]
    %v3852 = vld [vmem:[%s273 + $0xd0] sm:$0xff]
    %v3853 = vld [vmem:[%s273 + $0xd8] sm:$0xff]
    %v3854 = vld [vmem:[%s273 + $0xe0] sm:$0xff]
    %v3855 = vld [vmem:[%s273 + $0xe8] sm:$0xff]
    %v3856 = vld [vmem:[%s273 + $0xf0] sm:$0xff]
    %v3857 = vld [vmem:[%s273 + $0xf8] sm:$0xff]
    %v3858 = vld [vmem:[%s273 + $0x100] sm:$0xff]
    %v3859 = vld [vmem:[%s273 + $0x108] sm:$0xff]
    %v3860 = vld [vmem:[%s273 + $0x110] sm:$0xff]
    %v3861 = vld [vmem:[%s273 + $0x118] sm:$0xff]
    %v3862 = vld [vmem:[%s273 + $0x120] sm:$0xff]
    %v3863 = vld [vmem:[%s273 + $0x128] sm:$0xff]
    %v3864 = vld [vmem:[%s273 + $0x130] sm:$0xff]
    %v3865 = vld [vmem:[%s273 + $0x138] sm:$0xff]
    %v3866 = vld [vmem:[%s273 + $0x140] sm:$0xff]
    %v3867 = vld [vmem:[%s273 + $0x148] sm:$0xff]
    %v3868 = vld [vmem:[%s273 + $0x150] sm:$0xff]
    %v3869 = vld [vmem:[%s273 + $0x158] sm:$0xff]
    %v3870 = vld [vmem:[%s273 + $0x160] sm:$0xff]
    %v3871 = vld [vmem:[%s273 + $0x168] sm:$0xff]
    %v3872 = vld [vmem:[%s273 + $0x170] sm:$0xff]
    %v3873 = vld [vmem:[%s273 + $0x178] sm:$0xff]
    %v3874 = vld [vmem:[%s273 + $0x180] sm:$0xff]
    %v3875 = vld [vmem:[%s273 + $0x188] sm:$0xff]
    %v3876 = vld [vmem:[%s273 + $0x190] sm:$0xff]
    %v3877 = vld [vmem:[%s273 + $0x198] sm:$0xff]
    %v3878 = vld [vmem:[%s273 + $0x1a0] sm:$0xff]
    %v3879 = vld [vmem:[%s273 + $0x1a8] sm:$0xff]
    %v3880 = vld [vmem:[%s273 + $0x1b0] sm:$0xff]
    %v3881 = vld [vmem:[%s273 + $0x1b8] sm:$0xff]
    %v3882 = vld [vmem:[%s273 + $0x1c0] sm:$0xff]
    %v3883 = vld [vmem:[%s273 + $0x1c8] sm:$0xff]
    %v3884 = vld [vmem:[%s273 + $0x1d0] sm:$0xff]
    %v3885 = vld [vmem:[%s273 + $0x1d8] sm:$0xff]
    %v3886 = vld [vmem:[%s273 + $0x1e0] sm:$0xff]
    %v3887 = vld [vmem:[%s273 + $0x1e8] sm:$0xff]
    %v3888 = vld [vmem:[%s273 + $0x1f0] sm:$0xff]
    %v3889 = vld [vmem:[%s273 + $0x1f8] sm:$0xff]
    %v3890 = vunpack.c.l.s8.bf16 %v3826
    %v3891 = vunpack.c.l.s8.bf16 %v3827
    %v3892 = vunpack.c.l.s8.bf16 %v3828
    %v3893 = vunpack.c.l.s8.bf16 %v3829
    %v3894 = vunpack.c.h.s8.bf16 %v3826
    %v3895 = vunpack.c.h.s8.bf16 %v3827
    %v3896 = vunpack.c.h.s8.bf16 %v3828
    %v3897 = vunpack.c.h.s8.bf16 %v3829
    %v3898 = vunpack.c.l.s8.bf16 %v3830
    %v3899 = vunpack.c.l.s8.bf16 %v3831
    %v3900 = vunpack.c.l.s8.bf16 %v3832
    %v3901 = vunpack.c.l.s8.bf16 %v3833
    %v3902 = vunpack.c.h.s8.bf16 %v3830
    %v3903 = vunpack.c.h.s8.bf16 %v3831
    %v3904 = vunpack.c.h.s8.bf16 %v3832
    %v3905 = vunpack.c.h.s8.bf16 %v3833
    %v3906 = vunpack.c.l.s8.bf16 %v3834
    %v3907 = vunpack.c.l.s8.bf16 %v3835
    %v3908 = vunpack.c.l.s8.bf16 %v3836
    %v3909 = vunpack.c.l.s8.bf16 %v3837
    %v3910 = vunpack.c.h.s8.bf16 %v3834
    %v3911 = vunpack.c.h.s8.bf16 %v3835
    %v3912 = vunpack.c.h.s8.bf16 %v3836
    %v3913 = vunpack.c.h.s8.bf16 %v3837
    %v3914 = vunpack.c.l.s8.bf16 %v3838
    %v3915 = vunpack.c.l.s8.bf16 %v3839
    %v3916 = vunpack.c.l.s8.bf16 %v3840
    %v3917 = vunpack.c.l.s8.bf16 %v3841
    %v3918 = vunpack.c.h.s8.bf16 %v3838
    %v3919 = vunpack.c.h.s8.bf16 %v3839
    %v3920 = vunpack.c.h.s8.bf16 %v3840
    %v3921 = vunpack.c.h.s8.bf16 %v3841
    %v3922 = vunpack.c.l.s8.bf16 %v3842
    %v3923 = vunpack.c.l.s8.bf16 %v3843
    %v3924 = vunpack.c.l.s8.bf16 %v3844
    %v3925 = vunpack.c.l.s8.bf16 %v3845
    %v3926 = vunpack.c.h.s8.bf16 %v3842
    %v3927 = vunpack.c.h.s8.bf16 %v3843
    %v3928 = vunpack.c.h.s8.bf16 %v3844
    %v3929 = vunpack.c.h.s8.bf16 %v3845
    %v3930 = vunpack.c.l.s8.bf16 %v3846
    %v3931 = vunpack.c.l.s8.bf16 %v3847
    %v3932 = vunpack.c.l.s8.bf16 %v3848
    %v3933 = vunpack.c.l.s8.bf16 %v3849
    %v3934 = vunpack.c.h.s8.bf16 %v3846
    %v3935 = vunpack.c.h.s8.bf16 %v3847
    %v3936 = vunpack.c.h.s8.bf16 %v3848
    %v3937 = vunpack.c.h.s8.bf16 %v3849
    %v3938 = vunpack.c.l.s8.bf16 %v3850
    %v3939 = vunpack.c.l.s8.bf16 %v3851
    %v3940 = vunpack.c.l.s8.bf16 %v3852
    %v3941 = vunpack.c.l.s8.bf16 %v3853
    %v3942 = vunpack.c.h.s8.bf16 %v3850
    %v3943 = vunpack.c.h.s8.bf16 %v3851
    %v3944 = vunpack.c.h.s8.bf16 %v3852
    %v3945 = vunpack.c.h.s8.bf16 %v3853
    %v3946 = vunpack.c.l.s8.bf16 %v3854
    %v3947 = vunpack.c.l.s8.bf16 %v3855
    %v3948 = vunpack.c.l.s8.bf16 %v3856
    %v3949 = vunpack.c.l.s8.bf16 %v3857
    %v3950 = vunpack.c.h.s8.bf16 %v3854
    %v3951 = vunpack.c.h.s8.bf16 %v3855
    %v3952 = vunpack.c.h.s8.bf16 %v3856
    %v3953 = vunpack.c.h.s8.bf16 %v3857
    %v3954 = vunpack.c.l.s8.bf16 %v3858
    %v3955 = vunpack.c.l.s8.bf16 %v3859
    %v3956 = vunpack.c.l.s8.bf16 %v3860
    %v3957 = vunpack.c.l.s8.bf16 %v3861
    %v3958 = vunpack.c.h.s8.bf16 %v3858
    %v3959 = vunpack.c.h.s8.bf16 %v3859
    %v3960 = vunpack.c.h.s8.bf16 %v3860
    %v3961 = vunpack.c.h.s8.bf16 %v3861
    %v3962 = vunpack.c.l.s8.bf16 %v3862
    %v3963 = vunpack.c.l.s8.bf16 %v3863
    %v3964 = vunpack.c.l.s8.bf16 %v3864
    %v3965 = vunpack.c.l.s8.bf16 %v3865
    %v3966 = vunpack.c.h.s8.bf16 %v3862
    %v3967 = vunpack.c.h.s8.bf16 %v3863
    %v3968 = vunpack.c.h.s8.bf16 %v3864
    %v3969 = vunpack.c.h.s8.bf16 %v3865
    %v3970 = vunpack.c.l.s8.bf16 %v3866
    %v3971 = vunpack.c.l.s8.bf16 %v3867
    %v3972 = vunpack.c.l.s8.bf16 %v3868
    %v3973 = vunpack.c.l.s8.bf16 %v3869
    %v3974 = vunpack.c.h.s8.bf16 %v3866
    %v3975 = vunpack.c.h.s8.bf16 %v3867
    %v3976 = vunpack.c.h.s8.bf16 %v3868
    %v3977 = vunpack.c.h.s8.bf16 %v3869
    %v3978 = vunpack.c.l.s8.bf16 %v3870
    %v3979 = vunpack.c.l.s8.bf16 %v3871
    %v3980 = vunpack.c.l.s8.bf16 %v3872
    %v3981 = vunpack.c.l.s8.bf16 %v3873
    %v3982 = vunpack.c.h.s8.bf16 %v3870
    %v3983 = vunpack.c.h.s8.bf16 %v3871
    %v3984 = vunpack.c.h.s8.bf16 %v3872
    %v3985 = vunpack.c.h.s8.bf16 %v3873
    %v3986 = vunpack.c.l.s8.bf16 %v3874
    %v3987 = vunpack.c.l.s8.bf16 %v3875
    %v3988 = vunpack.c.l.s8.bf16 %v3876
    %v3989 = vunpack.c.l.s8.bf16 %v3877
    %v3990 = vunpack.c.h.s8.bf16 %v3874
    %v3991 = vunpack.c.h.s8.bf16 %v3875
    %v3992 = vunpack.c.h.s8.bf16 %v3876
    %v3993 = vunpack.c.h.s8.bf16 %v3877
    %v3994 = vunpack.c.l.s8.bf16 %v3878
    %v3995 = vunpack.c.l.s8.bf16 %v3879
    %v3996 = vunpack.c.l.s8.bf16 %v3880
    %v3997 = vunpack.c.l.s8.bf16 %v3881
    %v3998 = vunpack.c.h.s8.bf16 %v3878
    %v3999 = vunpack.c.h.s8.bf16 %v3879
    %v4000 = vunpack.c.h.s8.bf16 %v3880
    %v4001 = vunpack.c.h.s8.bf16 %v3881
    %v4002 = vunpack.c.l.s8.bf16 %v3882
    %v4003 = vunpack.c.l.s8.bf16 %v3883
    %v4004 = vunpack.c.l.s8.bf16 %v3884
    %v4005 = vunpack.c.l.s8.bf16 %v3885
    %v4006 = vunpack.c.h.s8.bf16 %v3882
    %v4007 = vunpack.c.h.s8.bf16 %v3883
    %v4008 = vunpack.c.h.s8.bf16 %v3884
    %v4009 = vunpack.c.h.s8.bf16 %v3885
    %v4010 = vunpack.c.l.s8.bf16 %v3886
    %v4011 = vunpack.c.l.s8.bf16 %v3887
    %v4012 = vunpack.c.l.s8.bf16 %v3888
    %v4013 = vunpack.c.l.s8.bf16 %v3889
    %v4014 = vunpack.c.h.s8.bf16 %v3886
    %v4015 = vunpack.c.h.s8.bf16 %v3887
    %v4016 = vunpack.c.h.s8.bf16 %v3888
    %v4017 = vunpack.c.h.s8.bf16 %v3889
    %4018 = vmatprep.subr.bf16.mxu0 %v3891
    %4019 = vmatpush1.bf16.msra.mxu0 %v3890
    %4020 = vmatprep.subr.bf16.mxu0 %v3895
    %4021 = vmatpush1.bf16.msra.mxu0 %v3894
    %4022 = vmatprep.subr.bf16.mxu0 %v3899
    %4023 = vmatpush1.bf16.msra.mxu0 %v3898
    %4024 = vmatprep.subr.bf16.mxu0 %v3903
    %4025 = vmatpush1.bf16.msra.mxu0 %v3902
    %4026 = vmatprep.subr.bf16.mxu0 %v3907
    %4027 = vmatpush1.bf16.msra.mxu0 %v3906
    %4028 = vmatprep.subr.bf16.mxu0 %v3911
    %4029 = vmatpush1.bf16.msra.mxu0 %v3910
    %4030 = vmatprep.subr.bf16.mxu0 %v3915
    %4031 = vmatpush1.bf16.msra.mxu0 %v3914
    %4032 = vmatprep.subr.bf16.mxu0 %v3919
    %4033 = vmatpush1.bf16.msra.mxu0 %v3918
    %4034 = vmatprep.subr.bf16.mxu0 %v3923
    %4035 = vmatpush1.bf16.msra.mxu0 %v3922
    %4036 = vmatprep.subr.bf16.mxu0 %v3927
    %4037 = vmatpush1.bf16.msra.mxu0 %v3926
    %4038 = vmatprep.subr.bf16.mxu0 %v3931
    %4039 = vmatpush1.bf16.msra.mxu0 %v3930
    %4040 = vmatprep.subr.bf16.mxu0 %v3935
    %4041 = vmatpush1.bf16.msra.mxu0 %v3934
    %4042 = vmatprep.subr.bf16.mxu0 %v3939
    %4043 = vmatpush1.bf16.msra.mxu0 %v3938
    %4044 = vmatprep.subr.bf16.mxu0 %v3943
    %4045 = vmatpush1.bf16.msra.mxu0 %v3942
    %4046 = vmatprep.subr.bf16.mxu0 %v3947
    %4047 = vmatpush1.bf16.msra.mxu0 %v3946
    %4048 = vmatprep.subr.bf16.mxu0 %v3951
    %4049 = vmatpush1.bf16.msra.mxu0 %v3950
    %4050 = vmatprep.mubr.bf16.mxu0 %v2567
    %4051 = vmatmul.mubr.bf16.gmra.mrb[0].mxu0 %v2566
    %v4052 = vpop.f32.mrb[0].mxu0
    %v4053 = vadd.f32 0.0, %v4052
    %v4054 = vpop.f32.mrb[0].mxu0
    %v4055 = vadd.f32 0.0, %v4054
    %v4056 = vpop.f32.mrb[0].mxu0
    %v4057 = vpop.f32.mrb[0].mxu0
    %4058 = vdwg.mxu0
    %4059 = vmatprep.subr.bf16.mxu0 %v3955
    %4060 = vmatpush1.bf16.msra.mxu0 %v3954
    %4061 = vmatprep.subr.bf16.mxu0 %v3959
    %4062 = vmatpush1.bf16.msra.mxu0 %v3958
    %4063 = vmatprep.subr.bf16.mxu0 %v3963
    %4064 = vmatpush1.bf16.msra.mxu0 %v3962
    %4065 = vmatprep.subr.bf16.mxu0 %v3967
    %4066 = vmatpush1.bf16.msra.mxu0 %v3966
    %4067 = vmatprep.subr.bf16.mxu0 %v3971
    %4068 = vmatpush1.bf16.msra.mxu0 %v3970
    %4069 = vmatprep.subr.bf16.mxu0 %v3975
    %4070 = vmatpush1.bf16.msra.mxu0 %v3974
    %4071 = vmatprep.subr.bf16.mxu0 %v3979
    %4072 = vmatpush1.bf16.msra.mxu0 %v3978
    %4073 = vmatprep.subr.bf16.mxu0 %v3983
    %4074 = vmatpush1.bf16.msra.mxu0 %v3982
    %4075 = vmatprep.subr.bf16.mxu0 %v3987
    %4076 = vmatpush1.bf16.msra.mxu0 %v3986
    %4077 = vmatprep.subr.bf16.mxu0 %v3991
    %4078 = vmatpush1.bf16.msra.mxu0 %v3990
    %4079 = vmatprep.subr.bf16.mxu0 %v3995
    %4080 = vmatpush1.bf16.msra.mxu0 %v3994
    %4081 = vmatprep.subr.bf16.mxu0 %v3999
    %4082 = vmatpush1.bf16.msra.mxu0 %v3998
    %4083 = vmatprep.subr.bf16.mxu0 %v4003
    %4084 = vmatpush1.bf16.msra.mxu0 %v4002
    %4085 = vmatprep.subr.bf16.mxu0 %v4007
    %4086 = vmatpush1.bf16.msra.mxu0 %v4006
    %4087 = vmatprep.subr.bf16.mxu0 %v4011
    %4088 = vmatpush1.bf16.msra.mxu0 %v4010
    %4089 = vmatprep.subr.bf16.mxu0 %v4015
    %4090 = vmatpush1.bf16.msra.mxu0 %v4014
    %4091 = vmatprep.mubr.bf16.mxu0 %v2569
    %4092 = vmatmul.mubr.bf16.gmra.mrb[0].mxu0 %v2568
    %v4093 = vpop.f32.mrb[0].mxu0
    %v4094 = vadd.f32 %v4053, %v4093
    %v4095 = vpop.f32.mrb[0].mxu0
    %v4096 = vadd.f32 %v4055, %v4095
    %v4097 = vpop.f32.mrb[0].mxu0
    %v4098 = vpop.f32.mrb[0].mxu0
    %4099 = vdwg.mxu0
    %4100 = vmatprep.subr.bf16.mxu0 %v3893
    %4101 = vmatpush1.bf16.msra.mxu0 %v3892
    %4102 = vmatprep.subr.bf16.mxu0 %v3897
    %4103 = vmatpush1.bf16.msra.mxu0 %v3896
    %4104 = vmatprep.subr.bf16.mxu0 %v3901
    %4105 = vmatpush1.bf16.msra.mxu0 %v3900
    %4106 = vmatprep.subr.bf16.mxu0 %v3905
    %4107 = vmatpush1.bf16.msra.mxu0 %v3904
    %4108 = vmatprep.subr.bf16.mxu0 %v3909
    %4109 = vmatpush1.bf16.msra.mxu0 %v3908
    %4110 = vmatprep.subr.bf16.mxu0 %v3913
    %4111 = vmatpush1.bf16.msra.mxu0 %v3912
    %4112 = vmatprep.subr.bf16.mxu0 %v3917
    %4113 = vmatpush1.bf16.msra.mxu0 %v3916
    %4114 = vmatprep.subr.bf16.mxu0 %v3921
    %4115 = vmatpush1.bf16.msra.mxu0 %v3920
    %4116 = vmatprep.subr.bf16.mxu0 %v3925
    %4117 = vmatpush1.bf16.msra.mxu0 %v3924
    %4118 = vmatprep.subr.bf16.mxu0 %v3929
    %4119 = vmatpush1.bf16.msra.mxu0 %v3928
    %4120 = vmatprep.subr.bf16.mxu0 %v3933
    %4121 = vmatpush1.bf16.msra.mxu0 %v3932
    %4122 = vmatprep.subr.bf16.mxu0 %v3937
    %4123 = vmatpush1.bf16.msra.mxu0 %v3936
    %4124 = vmatprep.subr.bf16.mxu0 %v3941
    %4125 = vmatpush1.bf16.msra.mxu0 %v3940
    %4126 = vmatprep.subr.bf16.mxu0 %v3945
    %4127 = vmatpush1.bf16.msra.mxu0 %v3944
    %4128 = vmatprep.subr.bf16.mxu0 %v3949
    %4129 = vmatpush1.bf16.msra.mxu0 %v3948
    %4130 = vmatprep.subr.bf16.mxu0 %v3953
    %4131 = vmatpush1.bf16.msra.mxu0 %v3952
    %4132 = vmatprep.mubr.bf16.mxu0 %v2567
    %4133 = vmatmul.mubr.bf16.gmra.mrb[0].mxu0 %v2566
    %v4134 = vpop.f32.mrb[0].mxu0
    %v4135 = vadd.f32 0.0, %v4134
    %v4136 = vpop.f32.mrb[0].mxu0
    %v4137 = vadd.f32 0.0, %v4136
    %v4138 = vpop.f32.mrb[0].mxu0
    %v4139 = vpop.f32.mrb[0].mxu0
    %4140 = vdwg.mxu0
    %4141 = vmatprep.subr.bf16.mxu0 %v3957
    %4142 = vmatpush1.bf16.msra.mxu0 %v3956
    %4143 = vmatprep.subr.bf16.mxu0 %v3961
    %4144 = vmatpush1.bf16.msra.mxu0 %v3960
    %4145 = vmatprep.subr.bf16.mxu0 %v3965
    %4146 = vmatpush1.bf16.msra.mxu0 %v3964
    %4147 = vmatprep.subr.bf16.mxu0 %v3969
    %4148 = vmatpush1.bf16.msra.mxu0 %v3968
    %4149 = vmatprep.subr.bf16.mxu0 %v3973
    %4150 = vmatpush1.bf16.msra.mxu0 %v3972
    %4151 = vmatprep.subr.bf16.mxu0 %v3977
    %4152 = vmatpush1.bf16.msra.mxu0 %v3976
    %4153 = vmatprep.subr.bf16.mxu0 %v3981
    %4154 = vmatpush1.bf16.msra.mxu0 %v3980
    %4155 = vmatprep.subr.bf16.mxu0 %v3985
    %4156 = vmatpush1.bf16.msra.mxu0 %v3984
    %4157 = vmatprep.subr.bf16.mxu0 %v3989
    %4158 = vmatpush1.bf16.msra.mxu0 %v3988
    %4159 = vmatprep.subr.bf16.mxu0 %v3993
    %4160 = vmatpush1.bf16.msra.mxu0 %v3992
    %4161 = vmatprep.subr.bf16.mxu0 %v3997
    %4162 = vmatpush1.bf16.msra.mxu0 %v3996
    %4163 = vmatprep.subr.bf16.mxu0 %v4001
    %4164 = vmatpush1.bf16.msra.mxu0 %v4000
    %4165 = vmatprep.subr.bf16.mxu0 %v4005
    %4166 = vmatpush1.bf16.msra.mxu0 %v4004
    %4167 = vmatprep.subr.bf16.mxu0 %v4009
    %4168 = vmatpush1.bf16.msra.mxu0 %v4008
    %4169 = vmatprep.subr.bf16.mxu0 %v4013
    %4170 = vmatpush1.bf16.msra.mxu0 %v4012
    %4171 = vmatprep.subr.bf16.mxu0 %v4017
    %4172 = vmatpush1.bf16.msra.mxu0 %v4016
    %4173 = vmatprep.mubr.bf16.mxu0 %v2569
    %4174 = vmatmul.mubr.bf16.gmra.mrb[0].mxu0 %v2568
    %v4175 = vpop.f32.mrb[0].mxu0
    %v4176 = vadd.f32 %v4135, %v4175
    %v4177 = vpop.f32.mrb[0].mxu0
    %v4178 = vadd.f32 %v4137, %v4177
    %v4179 = vpop.f32.mrb[0].mxu0
    %v4180 = vpop.f32.mrb[0].mxu0
    %4181 = vdwg.mxu0
    %v4182 = vld [vmem:[%s1 + $0x3f] sm:$0xf]
    %v4184 = vlaneseq
    %v4185 = vshrl.u32 %v4184, 7
    %v4186 = vsub.s32 0, %v4185
    %v4187 = vrot.slane %v4182, %v4186
    %v4188 = vlaneseq
    %v4189 = vshrl.u32 %v4188, 7
    %v4190 = vsub.s32 1, %v4189
    %v4191 = vrot.slane %v4182, %v4190
    %v4192 = vlaneseq
    %v4193 = vshrl.u32 %v4192, 7
    %v4194 = vsub.s32 2, %v4193
    %v4195 = vrot.slane %v4182, %v4194
    %v4196 = vlaneseq
    %v4197 = vshrl.u32 %v4196, 7
    %v4198 = vsub.s32 3, %v4197
    %v4199 = vrot.slane %v4182, %v4198
    %v4204 = vmul.f32 %v4094, %v4187
    %v4205 = vmul.f32 %v4096, %v4191
    %v4206 = vmul.f32 %v4176, %v4195
    %v4207 = vmul.f32 %v4178, %v4199
    %v4208 = vld [vmem:[%s1 + $0x2b] sm:$0xf]
    %v4210 = vlaneseq
    %v4211 = vshrl.u32 %v4210, 7
    %v4212 = vsub.s32 0, %v4211
    %v4213 = vrot.slane %v4208, %v4212
    %v4214 = vlaneseq
    %v4215 = vshrl.u32 %v4214, 7
    %v4216 = vsub.s32 1, %v4215
    %v4217 = vrot.slane %v4208, %v4216
    %v4218 = vlaneseq
    %v4219 = vshrl.u32 %v4218, 7
    %v4220 = vsub.s32 2, %v4219
    %v4221 = vrot.slane %v4208, %v4220
    %v4222 = vlaneseq
    %v4223 = vshrl.u32 %v4222, 7
    %v4224 = vsub.s32 3, %v4223
    %v4225 = vrot.slane %v4208, %v4224
    %v4230 = vadd.f32 %v4204, %v4213
    %v4231 = vadd.f32 %v4205, %v4217
    %v4232 = vadd.f32 %v4206, %v4221
    %v4233 = vadd.f32 %v4207, %v4225
    %v4234 = vtanh.pop %v4230
    %v4235 = vtanh.pop %v4231
    %v4236 = vtanh.pop %v4232
    %v4237 = vtanh.pop %v4233
    %4238 = vst [vmem:[#allocation14 + $0x60] sm:$0xff] %v4234
    %4239 = vst [vmem:[#allocation14 + $0x68] sm:$0xff] %v4235
    %4240 = vst [vmem:[#allocation14 + $0x70] sm:$0xff] %v4236
    %4241 = vst [vmem:[#allocation14 + $0x78] sm:$0xff] %v4237
    // Predicated region
    $region118: #{tpu_custom_call.1} parent=1 // pred_check
      _
    $region119: #{tpu_custom_call.1} parent=1 // pred_check_branch
      %4243 = sbr.rel (0) target = $region121
    $region120: #{tpu_custom_call.1} parent=1 // pred_region
      %s4245 = ssub.s32 2048, 2048
      %4246 = vsyncadd [#allocation13], %s4245
      %s4248 = sshll.u32 [#allocation14], 4
      %s4249 = int_to_ptr.vmem [resolvable:$true] %s4248
      %4251 = dma.vmem_to_hbm [thread:$0]  %s4249, 2048, %s8, [#allocation13]
    $region121: #{tpu_custom_call.1} parent=1 // pred_fallthru
      _
    // Predicated region
    $region122: #{tpu_custom_call.1} parent=1 // pred_check
      _
    $region123: #{tpu_custom_call.1} parent=1 // pred_check_branch
      %4253 = sbr.rel (0) target = $region125
    $region124: #{tpu_custom_call.1} parent=1 // pred_region
      %4254 = dma.done [#allocation13], 2048
    $region125: #{tpu_custom_call.1} parent=1 // pred_fallthru
      _
    %4255 = vsyncpa [#allocation12], 1
    %4256 = vsyncpa [#allocation13], 1
  %4257 = vsyncmov [#allocation8]
  %s4258 = vpop.sfrf %4257
  %p4259 = scmp.eq.s32.totalorder %s4258, 0
  %p4260 = pneg %p4259
  %4262 = shalt.err (%p4260)
  %s4263 = scalar_lea.sflag [#allocation8], 1
  %4264 = vsyncmov %s4263
  %s4265 = vpop.sfrf %4264
  %p4266 = scmp.eq.s32.totalorder %s4265, 0
  %p4267 = pneg %p4266
  %4269 = shalt.err (%p4267)
  %s4270 = scalar_lea.sflag [#allocation8], 2
  %4271 = vsyncmov %s4270
  %s4272 = vpop.sfrf %4271
  %p4273 = scmp.eq.s32.totalorder %s4272, 0
  %p4274 = pneg %p4273
  %4276 = shalt.err (%p4274)
  %s4277 = scalar_lea.sflag [#allocation8], 3
  %4278 = vsyncmov %s4277
  %s4279 = vpop.sfrf %4278
  %p4280 = scmp.eq.s32.totalorder %s4279, 0
  %p4281 = pneg %p4280
  %4283 = shalt.err (%p4281)
  %4284 = vsyncmov [#allocation9]
  %s4285 = vpop.sfrf %4284
  %p4286 = scmp.eq.s32.totalorder %s4285, 0
  %p4287 = pneg %p4286
  %4289 = shalt.err (%p4287)
  %s4290 = scalar_lea.sflag [#allocation9], 1
  %4291 = vsyncmov %s4290
  %s4292 = vpop.sfrf %4291
  %p4293 = scmp.eq.s32.totalorder %s4292, 0
  %p4294 = pneg %p4293
  %4296 = shalt.err (%p4294)
  %s4297 = scalar_lea.sflag [#allocation9], 2
  %4298 = vsyncmov %s4297
  %s4299 = vpop.sfrf %4298
  %p4300 = scmp.eq.s32.totalorder %s4299, 0
  %p4301 = pneg %p4300
  %4303 = shalt.err (%p4301)
  %s4304 = scalar_lea.sflag [#allocation9], 3
  %4305 = vsyncmov %s4304
  %s4306 = vpop.sfrf %4305
  %p4307 = scmp.eq.s32.totalorder %s4306, 0
  %p4308 = pneg %p4307
  %4310 = shalt.err (%p4308)
  %4311 = vsyncmov [#allocation10]
  %s4312 = vpop.sfrf %4311
  %p4313 = scmp.eq.s32.totalorder %s4312, 0
  %p4314 = pneg %p4313
  %4316 = shalt.err (%p4314)
  %s4317 = scalar_lea.sflag [#allocation10], 1
  %4318 = vsyncmov %s4317
  %s4319 = vpop.sfrf %4318
  %p4320 = scmp.eq.s32.totalorder %s4319, 0
  %p4321 = pneg %p4320
  %4323 = shalt.err (%p4321)
  %s4324 = scalar_lea.sflag [#allocation10], 2
  %4325 = vsyncmov %s4324
  %s4326 = vpop.sfrf %4325
  %p4327 = scmp.eq.s32.totalorder %s4326, 0
  %p4328 = pneg %p4327
  %4330 = shalt.err (%p4328)
  %s4331 = scalar_lea.sflag [#allocation10], 3
  %4332 = vsyncmov %s4331
  %s4333 = vpop.sfrf %4332
  %p4334 = scmp.eq.s32.totalorder %s4333, 0
  %p4335 = pneg %p4334
  %4337 = shalt.err (%p4335)

</llo_original>
